<compile_context>
chip_gen: v6e
topology: v6e:2x2x1
jax: 0.10.0
libtpu: 0.0.40
codegen_flags: <defaults>
</compile_context>

<pallas_src>
import jax
import jax.numpy as jnp
from jax import lax
from jax.experimental import pallas as pl
from jax.experimental.pallas import tpu as pltpu

BB_MAX = 64  # batch-tile cap: keeps bf16 h + f32 c carries within the vreg budget
             # at the module default hidden_size=200 while filling 64 MXU rows.


def _generator_kernel(emb_ref, mtb_ref, wih_ref, b_ref, whh_ref, zp_ref,
                      z_ref, g_scr):
    # emb_ref : (T*BB, E)  bf16, time-major within the batch block (row = t*BB + i)
    # mtb_ref : (T*BB, 1)  f32 mask, same layout
    # wih_ref : (E, 8H)    bf16, [wih_f | wih_b]
    # b_ref   : (1, 8H)    f32,  [b_f   | b_b  ]
    # whh_ref : (2H, 8H)   bf16, block_diag(whh_f, whh_b)
    # zp_ref  : (3, H)     f32,  rows = [wv_f, wv_b, bv(broadcast)]
    # z_ref   : (BB, T)    f32 output
    # g_scr   : (T*BB, 8H) f32 scratch (hoisted input projection)
    bb, T = z_ref.shape
    H8 = whh_ref.shape[1]
    H = H8 // 8
    H4 = 4 * H
    f32 = jnp.float32
    bf16 = jnp.bfloat16
    NEG = jnp.float32(-1e9)

    # ---- hoisted, fused fwd|bwd input projection: ONE batched matmul ------------
    x = emb_ref[...]                                                # (T*BB, E) bf16
    g_scr[...] = jnp.dot(x, wih_ref[...], preferred_element_type=f32) + b_ref[...]

    whh = whh_ref[...]                                              # (2H, 8H) bf16
    wv_f = zp_ref[0:1, :]                                           # (1, H) f32
    wv_b = zp_ref[1:2, :]                                           # (1, H) f32
    bv = zp_ref[2:3, 0:1]                                           # (1, 1) f32

    lane_t = lax.broadcasted_iota(jnp.int32, (bb, T), 1)            # (BB, T)

    def gate_update(gates, m, h_prev, c_prev):
        # gates: (BB, 4H) f32, m: (BB, 1) f32; gate order i|f|g|o
        i = jax.nn.sigmoid(gates[:, 0 * H:1 * H])
        f = jax.nn.sigmoid(gates[:, 1 * H:2 * H])
        g = jnp.tanh(gates[:, 2 * H:3 * H])
        o = jax.nn.sigmoid(gates[:, 3 * H:4 * H])
        c_new = f * c_prev + i * g
        h_new = o * jnp.tanh(c_new)
        valid = m > 0.0
        # emulate pack_padded_sequence: padded steps emit 0 and do not advance state
        h_out = jnp.where(valid, h_new, 0.0)                        # f32 (for z-dot)
        h_keep = jnp.where(valid, h_new.astype(bf16), h_prev)       # bf16 carry
        c_keep = jnp.where(valid, c_new, c_prev)                    # f32 carry
        return h_out, h_keep, c_keep, valid

    def step(t, carry):
        h_f, c_f, h_b, c_b, acc = carry
        s = T - 1 - t
        rf = pl.multiple_of(t * bb, bb)
        rb = pl.multiple_of(s * bb, bb)

        # single fused recurrent matmul: [h_f | h_b] @ block_diag(whh_f, whh_b)
        h_cat = jnp.concatenate([h_f, h_b], axis=-1)                # (BB, 2H) bf16
        g_rec = jnp.dot(h_cat, whh, preferred_element_type=f32)     # (BB, 8H) f32

        m_f = mtb_ref[pl.ds(rf, bb), :]                             # (BB, 1)
        m_b = mtb_ref[pl.ds(rb, bb), :]

        g_f = g_scr[pl.ds(rf, bb), 0:H4] + g_rec[:, 0:H4]
        g_b = g_scr[pl.ds(rb, bb), H4:] + g_rec[:, H4:]

        h_of, h_f, c_f, valid_f = gate_update(g_f, m_f, h_f, c_f)   # time t (fwd)
        h_ob, h_b, c_b, _ = gate_update(g_b, m_b, h_b, c_b)         # time s (bwd)

        # z-layer logit-difference contributions on VPU + XLU (off the MXU FIFO)
        cf = jnp.sum(h_of * wv_f, axis=-1, keepdims=True)           # (BB, 1)
        cb = jnp.sum(h_ob * wv_b, axis=-1, keepdims=True)           # (BB, 1)

        # fold the output mask into the accumulator: a masked position gets a large
        # negative logit so the final threshold yields z = 0 there (== where(mask,...)).
        acc = (acc
               + jnp.where(lane_t == t, jnp.where(valid_f, cf, NEG), 0.0)
               + jnp.where(lane_t == s, cb, 0.0))
        return h_f, c_f, h_b, c_b, acc

    h0 = jnp.zeros((bb, H), bf16)
    c0 = jnp.zeros((bb, H), f32)
    acc0 = jnp.zeros((bb, T), f32)
    _, _, _, _, acc = lax.fori_loop(0, T, step, (h0, c0, h0, c0, acc0), unroll=8)

    # softmax(z_dist)[..., 1] >= 0.5  <=>  logit1 - logit0 >= 0
    z_ref[...] = (acc + bv >= 0.0).astype(f32)                      # lane-dense store


def init_params(key, vocab, emb_size, hidden):
    ks = jax.random.split(key, 9)
    s = 0.1

    def rnd(k, shape):
        return (jax.random.normal(k, shape, jnp.float32) * s).astype(jnp.float32)

    return {
        "embedding": rnd(ks[0], (vocab, emb_size)),
        "wih_f": rnd(ks[1], (emb_size, 4 * hidden)),
        "whh_f": rnd(ks[2], (hidden, 4 * hidden)),
        "b_f": rnd(ks[3], (1, 4 * hidden)),
        "wih_b": rnd(ks[4], (emb_size, 4 * hidden)),
        "whh_b": rnd(ks[5], (hidden, 4 * hidden)),
        "b_b": rnd(ks[6], (1, 4 * hidden)),
        "wz": rnd(ks[7], (2 * hidden, 2)),
        "bz": rnd(ks[8], (1, 2)),
    }


@jax.jit
def generator_ib_forward(params, x_ids, mask_bool):
    B, T = x_ids.shape
    E = params["embedding"].shape[1]
    H = params["whh_f"].shape[0]
    bf16 = jnp.bfloat16

    # --- adaptive batch tile: NB >= 2 (v7x megacore), BB as large as sensible ----
    half = pl.cdiv(B, 2)
    bb = min(BB_MAX, pl.cdiv(half, 8) * 8)          # multiple of 8 (sublane width)
    NB = max(2, pl.cdiv(B, bb))
    B_pad = NB * bb

    x_pad = jnp.pad(x_ids, ((0, B_pad - B), (0, 0)))
    m_pad = jnp.pad(mask_bool, ((0, B_pad - B), (0, 0)))

    # gather the embedding directly into the blocked time-major layout, cast to bf16
    # (gather + cast fuse; only tiny id/mask arrays ever get transposed)
    ids_blk = x_pad.reshape(NB, bb, T).transpose(0, 2, 1).reshape(NB, T * bb)
    emb_blk = jnp.take(params["embedding"], ids_blk, axis=0).astype(bf16)  # (NB,T*bb,E)
    mask_blk = (m_pad.reshape(NB, bb, T).transpose(0, 2, 1)
                .reshape(NB, T * bb, 1).astype(jnp.float32))               # (NB,T*bb,1)

    # --- coalesced / fused weight operands ---------------------------------------
    wih_cat = jnp.concatenate([params["wih_f"], params["wih_b"]], axis=1).astype(bf16)  # (E,8H)
    b_cat = jnp.concatenate([params["b_f"], params["b_b"]], axis=1)                     # (1,8H)
    whh_blk = jnp.zeros((2 * H, 8 * H), jnp.float32)
    whh_blk = whh_blk.at[:H, :4 * H].set(params["whh_f"])
    whh_blk = whh_blk.at[H:, 4 * H:].set(params["whh_b"])
    whh_blk = whh_blk.astype(bf16)                                                      # (2H,8H)

    # logit-difference form of the 2-class z layer, packed into one (3, H) operand
    wz, bz = params["wz"], params["bz"]
    wv = wz[:, 1] - wz[:, 0]                                       # (2H,)
    bv = bz[:, 1] - bz[:, 0]                                       # (1,)
    zp = jnp.stack([wv[:H], wv[H:], jnp.broadcast_to(bv, (H,))], axis=0)  # (3, H) f32

    grid_spec = pltpu.PrefetchScalarGridSpec(
        num_scalar_prefetch=0,
        grid=(NB,),
        in_specs=[
            pl.BlockSpec((None, T * bb, E), lambda nb: (nb, 0, 0)),   # emb (bf16, blocked)
            pl.BlockSpec((None, T * bb, 1), lambda nb: (nb, 0, 0)),   # mask (time-major)
            pl.BlockSpec((E, 8 * H), lambda nb: (0, 0)),              # wih_f|wih_b
            pl.BlockSpec((1, 8 * H), lambda nb: (0, 0)),              # b_f|b_b
            pl.BlockSpec((2 * H, 8 * H), lambda nb: (0, 0)),          # blockdiag(whh_f,whh_b)
            pl.BlockSpec((3, H), lambda nb: (0, 0)),                  # packed z-layer params
        ],
        out_specs=pl.BlockSpec((bb, T), lambda nb: (nb, 0)),
        scratch_shapes=[
            pltpu.VMEM((T * bb, 8 * H), jnp.float32),   # fused hoisted input projection
        ],
    )

    z_full = pl.pallas_call(
        _generator_kernel,
        out_shape=jax.ShapeDtypeStruct((B_pad, T), jnp.float32),
        grid_spec=grid_spec,
        compiler_params=pltpu.CompilerParams(
            dimension_semantics=("parallel",),      # batch blocks shard across cores
            vmem_limit_bytes=32 * 1024 * 1024,
        ),
    )(emb_blk, mask_blk, wih_cat, b_cat, whh_blk, zp)

    return z_full[:B]                               # (B, T), already batch-major


if __name__ == "__main__":
    key = jax.random.PRNGKey(0)
    V, E, H = 20, 32, 32       # vocab, emb_size, hidden_size (enc_size = 2H = 64)
    B, T = 2, 8

    pkey, xkey = jax.random.split(key)
    params = init_params(pkey, V, E, H)

    x_ids = jax.random.randint(xkey, (B, T), 0, V, dtype=jnp.int32)
    lengths = jnp.array([T, 5], dtype=jnp.int32)
    mask = jnp.arange(T)[None, :] < lengths[:, None]   # bool (B, T), right-padded

    z = generator_ib_forward(params, x_ids, mask)
    z = jax.block_until_ready(z)

    assert z.shape == (B, T)
    assert bool(jnp.all((z == 0.0) | (z == 1.0)))           # hard samples
    assert bool(jnp.all(jnp.where(mask, True, z == 0.0)))   # masked positions are zero

    print("KERNEL_OK")
</pallas_src>

<mosaic_0001>
module attributes {stable_mosaic.version = 11 : i64} {
  func.func @_generator_kernel(%arg0: i32, %arg1: memref<1x64x32xbf16, #tpu.memory_space<vmem>>, %arg2: memref<1x64x1xf32, #tpu.memory_space<vmem>>, %arg3: memref<32x256xbf16, #tpu.memory_space<vmem>>, %arg4: memref<1x256xf32, #tpu.memory_space<vmem>>, %arg5: memref<64x256xbf16, #tpu.memory_space<vmem>>, %arg6: memref<3x32xf32, #tpu.memory_space<vmem>>, %arg7: memref<8x8xf32, #tpu.memory_space<vmem>>, %arg8: memref<64x256xf32, #tpu.memory_space<vmem>>) attributes {dimension_semantics = [#tpu.dimension_semantics<parallel>], iteration_bounds = array<i64: 2>, scalar_prefetch = 0 : i64, scratch_operands = 1 : i64, tpu.core_type = #tpu.core_type<tc>, window_params = [{transform_indices = @transform_0, window_bounds = array<i64: 1, 64, 32>}, {transform_indices = @transform_1, window_bounds = array<i64: 1, 64, 1>}, {pipeline_mode = #tpu.pipeline_mode<synchronous>, transform_indices = @transform_2, window_bounds = array<i64: 32, 256>}, {pipeline_mode = #tpu.pipeline_mode<synchronous>, transform_indices = @transform_3, window_bounds = array<i64: 1, 256>}, {pipeline_mode = #tpu.pipeline_mode<synchronous>, transform_indices = @transform_4, window_bounds = array<i64: 64, 256>}, {pipeline_mode = #tpu.pipeline_mode<synchronous>, transform_indices = @transform_5, window_bounds = array<i64: 3, 32>}, {transform_indices = @transform_6, window_bounds = array<i64: 8, 8>}]} {
    %c0 = arith.constant 0 : index
    %c0_0 = arith.constant 0 : index
    %c0_1 = arith.constant 0 : index
    %0 = vector.load %arg1[%c0, %c0_0, %c0_1] : memref<1x64x32xbf16, #tpu.memory_space<vmem>>, vector<1x64x32xbf16>
    %1 = vector.shape_cast %0 : vector<1x64x32xbf16> to vector<64x32xbf16>
    %c0_2 = arith.constant 0 : index
    %c0_3 = arith.constant 0 : index
    %2 = vector.load %arg3[%c0_2, %c0_3] : memref<32x256xbf16, #tpu.memory_space<vmem>>, vector<32x256xbf16>
    %cst = arith.constant dense<0.000000e+00> : vector<64x256xf32>
    %3 = tpu.matmul %1, %2, %cst {dimension_numbers = #tpu.dot_dimension_numbers<[1], [0], [0], [1], [0, 0, 1, 1], [], []>} : vector<64x32xbf16>, vector<32x256xbf16>, vector<64x256xf32> -> vector<64x256xf32>
    %c0_4 = arith.constant 0 : index
    %c0_5 = arith.constant 0 : index
    %4 = vector.load %arg4[%c0_4, %c0_5] : memref<1x256xf32, #tpu.memory_space<vmem>>, vector<1x256xf32>
    %5 = vector.broadcast %4 : vector<1x256xf32> to vector<64x256xf32>
    %6 = arith.addf %3, %5 : vector<64x256xf32>
    %c0_6 = arith.constant 0 : index
    %c0_7 = arith.constant 0 : index
    %7 = vector.load %arg8[%c0_6, %c0_7] : memref<64x256xf32, #tpu.memory_space<vmem>>, vector<64x256xf32>
    tpu.vector_store %arg8[%c0_6, %c0_7], %6 {strides = array<i32>} : memref<64x256xf32, #tpu.memory_space<vmem>>, vector<64x256xf32>,
    %c0_8 = arith.constant 0 : index
    %c0_9 = arith.constant 0 : index
    %8 = vector.load %arg5[%c0_8, %c0_9] : memref<64x256xbf16, #tpu.memory_space<vmem>>, vector<64x256xbf16>
    %c0_10 = arith.constant 0 : index
    %c0_11 = arith.constant 0 : index
    %9 = vector.load %arg6[%c0_10, %c0_11] : memref<3x32xf32, #tpu.memory_space<vmem>>, vector<1x32xf32>
    %c1 = arith.constant 1 : index
    %c0_12 = arith.constant 0 : index
    %10 = vector.load %arg6[%c1, %c0_12] : memref<3x32xf32, #tpu.memory_space<vmem>>, vector<1x32xf32>
    %c2 = arith.constant 2 : index
    %c0_13 = arith.constant 0 : index
    %11 = vector.load %arg6[%c2, %c0_13] : memref<3x32xf32, #tpu.memory_space<vmem>>, vector<1x1xf32>
    %12 = tpu.iota {dimensions = array<i32: 1>} : vector<8x8xi32>
    %cst_14 = arith.constant 0.000000e+00 : bf16
    %13 = vector.broadcast %cst_14 : bf16 to vector<8x32xbf16>
    %cst_15 = arith.constant 0.000000e+00 : f32
    %14 = vector.broadcast %cst_15 : f32 to vector<8x32xf32>
    %cst_16 = arith.constant 0.000000e+00 : f32
    %15 = vector.broadcast %cst_16 : f32 to vector<8x8xf32>
    %cst_17 = arith.constant -1.000000e+09 : f32
    %c0_i32 = arith.constant 0 : i32
    %c7_i32 = arith.constant 7 : i32
    %16 = arith.subi %c7_i32, %c0_i32 : i32
    %c8_i32 = arith.constant 8 : i32
    %17 = arith.muli %c0_i32, %c8_i32 : i32
    %18 = tpu.assume_multiple %17, 8 : i32
    %c8_i32_18 = arith.constant 8 : i32
    %19 = arith.muli %16, %c8_i32_18 : i32
    %20 = tpu.assume_multiple %19, 8 : i32
    %21 = tpu.concatenate %13, %13 in 1 : vector<8x32xbf16>, vector<8x32xbf16> -> vector<8x64xbf16>
    %cst_19 = arith.constant dense<0.000000e+00> : vector<8x256xf32>
    %22 = tpu.matmul %21, %8, %cst_19 {dimension_numbers = #tpu.dot_dimension_numbers<[1], [0], [0], [1], [0, 0, 1, 1], [], []>} : vector<8x64xbf16>, vector<64x256xbf16>, vector<8x256xf32> -> vector<8x256xf32>
    %c0_20 = arith.constant 0 : index
    %23 = arith.index_cast %18 : i32 to index
    %c0_21 = arith.constant 0 : index
    %24 = vector.load %arg2[%c0_20, %23, %c0_21] : memref<1x64x1xf32, #tpu.memory_space<vmem>>, vector<1x8x1xf32>
    %25 = vector.shape_cast %24 : vector<1x8x1xf32> to vector<8x1xf32>
    %c0_22 = arith.constant 0 : index
    %26 = arith.index_cast %20 : i32 to index
    %c0_23 = arith.constant 0 : index
    %27 = vector.load %arg2[%c0_22, %26, %c0_23] : memref<1x64x1xf32, #tpu.memory_space<vmem>>, vector<1x8x1xf32>
    %28 = vector.shape_cast %27 : vector<1x8x1xf32> to vector<8x1xf32>
    %29 = arith.index_cast %18 : i32 to index
    %c0_24 = arith.constant 0 : index
    %30 = vector.load %arg8[%29, %c0_24] : memref<64x256xf32, #tpu.memory_space<vmem>>, vector<8x128xf32>
    %31 = vector.extract_strided_slice %22 {offsets = [0, 0], sizes = [8, 128], strides = [1, 1]} : vector<8x256xf32> to vector<8x128xf32>
    %32 = arith.addf %30, %31 : vector<8x128xf32>
    %33 = arith.index_cast %20 : i32 to index
    %c128 = arith.constant 128 : index
    %34 = vector.load %arg8[%33, %c128] : memref<64x256xf32, #tpu.memory_space<vmem>>, vector<8x128xf32>
    %35 = vector.extract_strided_slice %22 {offsets = [0, 128], sizes = [8, 128], strides = [1, 1]} : vector<8x256xf32> to vector<8x128xf32>
    %36 = arith.addf %34, %35 : vector<8x128xf32>
    %37 = vector.extract_strided_slice %32 {offsets = [0, 0], sizes = [8, 32], strides = [1, 1]} : vector<8x128xf32> to vector<8x32xf32>
    %38 = arith.negf %37 : vector<8x32xf32>
    %39 = math.exp %38 : vector<8x32xf32>
    %cst_25 = arith.constant 1.000000e+00 : f32
    %40 = vector.broadcast %cst_25 : f32 to vector<8x32xf32>
    %41 = arith.addf %40, %39 : vector<8x32xf32>
    %42 = arith.divf %40, %41 : vector<8x32xf32>
    %43 = vector.extract_strided_slice %32 {offsets = [0, 32], sizes = [8, 32], strides = [1, 1]} : vector<8x128xf32> to vector<8x32xf32>
    %44 = arith.negf %43 : vector<8x32xf32>
    %45 = math.exp %44 : vector<8x32xf32>
    %cst_26 = arith.constant 1.000000e+00 : f32
    %46 = vector.broadcast %cst_26 : f32 to vector<8x32xf32>
    %47 = arith.addf %46, %45 : vector<8x32xf32>
    %48 = arith.divf %46, %47 : vector<8x32xf32>
    %49 = vector.extract_strided_slice %32 {offsets = [0, 64], sizes = [8, 32], strides = [1, 1]} : vector<8x128xf32> to vector<8x32xf32>
    %50 = math.tanh %49 : vector<8x32xf32>
    %51 = vector.extract_strided_slice %32 {offsets = [0, 96], sizes = [8, 32], strides = [1, 1]} : vector<8x128xf32> to vector<8x32xf32>
    %52 = arith.negf %51 : vector<8x32xf32>
    %53 = math.exp %52 : vector<8x32xf32>
    %cst_27 = arith.constant 1.000000e+00 : f32
    %54 = vector.broadcast %cst_27 : f32 to vector<8x32xf32>
    %55 = arith.addf %54, %53 : vector<8x32xf32>
    %56 = arith.divf %54, %55 : vector<8x32xf32>
    %57 = arith.mulf %48, %14 : vector<8x32xf32>
    %58 = arith.mulf %42, %50 : vector<8x32xf32>
    %59 = arith.addf %57, %58 : vector<8x32xf32>
    %60 = math.tanh %59 : vector<8x32xf32>
    %61 = arith.mulf %56, %60 : vector<8x32xf32>
    %cst_28 = arith.constant 0.000000e+00 : f32
    %62 = vector.broadcast %cst_28 : f32 to vector<8x1xf32>
    %63 = arith.cmpf ogt, %25, %62 : vector<8x1xf32>
    %cst_29 = arith.constant 0.000000e+00 : f32
    %64 = vector.shape_cast %63 : vector<8x1xi1> to vector<8x1xi1>
    %65 = vector.broadcast %64 : vector<8x1xi1> to vector<8x32xi1>
    %66 = vector.broadcast %cst_29 : f32 to vector<8x32xf32>
    %67 = arith.select %65, %61, %66 : vector<8x32xi1>, vector<8x32xf32>
    %68 = arith.truncf %61 : vector<8x32xf32> to vector<8x32xbf16>
    %69 = vector.shape_cast %63 : vector<8x1xi1> to vector<8x1xi1>
    %70 = vector.broadcast %69 : vector<8x1xi1> to vector<8x32xi1>
    %71 = arith.select %70, %68, %13 : vector<8x32xi1>, vector<8x32xbf16>
    %72 = vector.shape_cast %63 : vector<8x1xi1> to vector<8x1xi1>
    %73 = vector.broadcast %72 : vector<8x1xi1> to vector<8x32xi1>
    %74 = arith.select %73, %59, %14 : vector<8x32xi1>, vector<8x32xf32>
    %75 = vector.extract_strided_slice %36 {offsets = [0, 0], sizes = [8, 32], strides = [1, 1]} : vector<8x128xf32> to vector<8x32xf32>
    %76 = arith.negf %75 : vector<8x32xf32>
    %77 = math.exp %76 : vector<8x32xf32>
    %cst_30 = arith.constant 1.000000e+00 : f32
    %78 = vector.broadcast %cst_30 : f32 to vector<8x32xf32>
    %79 = arith.addf %78, %77 : vector<8x32xf32>
    %80 = arith.divf %78, %79 : vector<8x32xf32>
    %81 = vector.extract_strided_slice %36 {offsets = [0, 32], sizes = [8, 32], strides = [1, 1]} : vector<8x128xf32> to vector<8x32xf32>
    %82 = arith.negf %81 : vector<8x32xf32>
    %83 = math.exp %82 : vector<8x32xf32>
    %cst_31 = arith.constant 1.000000e+00 : f32
    %84 = vector.broadcast %cst_31 : f32 to vector<8x32xf32>
    %85 = arith.addf %84, %83 : vector<8x32xf32>
    %86 = arith.divf %84, %85 : vector<8x32xf32>
    %87 = vector.extract_strided_slice %36 {offsets = [0, 64], sizes = [8, 32], strides = [1, 1]} : vector<8x128xf32> to vector<8x32xf32>
    %88 = math.tanh %87 : vector<8x32xf32>
    %89 = vector.extract_strided_slice %36 {offsets = [0, 96], sizes = [8, 32], strides = [1, 1]} : vector<8x128xf32> to vector<8x32xf32>
    %90 = arith.negf %89 : vector<8x32xf32>
    %91 = math.exp %90 : vector<8x32xf32>
    %cst_32 = arith.constant 1.000000e+00 : f32
    %92 = vector.broadcast %cst_32 : f32 to vector<8x32xf32>
    %93 = arith.addf %92, %91 : vector<8x32xf32>
    %94 = arith.divf %92, %93 : vector<8x32xf32>
    %95 = arith.mulf %86, %14 : vector<8x32xf32>
    %96 = arith.mulf %80, %88 : vector<8x32xf32>
    %97 = arith.addf %95, %96 : vector<8x32xf32>
    %98 = math.tanh %97 : vector<8x32xf32>
    %99 = arith.mulf %94, %98 : vector<8x32xf32>
    %cst_33 = arith.constant 0.000000e+00 : f32
    %100 = vector.broadcast %cst_33 : f32 to vector<8x1xf32>
    %101 = arith.cmpf ogt, %28, %100 : vector<8x1xf32>
    %cst_34 = arith.constant 0.000000e+00 : f32
    %102 = vector.shape_cast %101 : vector<8x1xi1> to vector<8x1xi1>
    %103 = vector.broadcast %102 : vector<8x1xi1> to vector<8x32xi1>
    %104 = vector.broadcast %cst_34 : f32 to vector<8x32xf32>
    %105 = arith.select %103, %99, %104 : vector<8x32xi1>, vector<8x32xf32>
    %106 = arith.truncf %99 : vector<8x32xf32> to vector<8x32xbf16>
    %107 = vector.shape_cast %101 : vector<8x1xi1> to vector<8x1xi1>
    %108 = vector.broadcast %107 : vector<8x1xi1> to vector<8x32xi1>
    %109 = arith.select %108, %106, %13 : vector<8x32xi1>, vector<8x32xbf16>
    %110 = vector.shape_cast %101 : vector<8x1xi1> to vector<8x1xi1>
    %111 = vector.broadcast %110 : vector<8x1xi1> to vector<8x32xi1>
    %112 = arith.select %111, %97, %14 : vector<8x32xi1>, vector<8x32xf32>
    %113 = vector.broadcast %9 : vector<1x32xf32> to vector<8x32xf32>
    %114 = arith.mulf %67, %113 : vector<8x32xf32>
    %cst_35 = arith.constant dense<0.000000e+00> : vector<8xf32>
    %115 = vector.multi_reduction <add>, %114, %cst_35 [1] : vector<8x32xf32> to vector<8xf32>
    %116 = vector.shape_cast %115 : vector<8xf32> to vector<8x1xf32>
    %117 = vector.broadcast %10 : vector<1x32xf32> to vector<8x32xf32>
    %118 = arith.mulf %105, %117 : vector<8x32xf32>
    %cst_36 = arith.constant dense<0.000000e+00> : vector<8xf32>
    %119 = vector.multi_reduction <add>, %118, %cst_36 [1] : vector<8x32xf32> to vector<8xf32>
    %120 = vector.shape_cast %119 : vector<8xf32> to vector<8x1xf32>
    %121 = vector.broadcast %c0_i32 : i32 to vector<8x8xi32>
    %122 = arith.cmpi eq, %12, %121 : vector<8x8xi32>
    %123 = vector.broadcast %cst_17 : f32 to vector<8x1xf32>
    %124 = arith.select %63, %116, %123 : vector<8x1xi1>, vector<8x1xf32>
    %cst_37 = arith.constant 0.000000e+00 : f32
    %125 = vector.shape_cast %124 : vector<8x1xf32> to vector<8x1xf32>
    %126 = vector.broadcast %125 : vector<8x1xf32> to vector<8x8xf32>
    %127 = vector.broadcast %cst_37 : f32 to vector<8x8xf32>
    %128 = arith.select %122, %126, %127 : vector<8x8xi1>, vector<8x8xf32>
    %129 = arith.addf %15, %128 : vector<8x8xf32>
    %130 = vector.broadcast %16 : i32 to vector<8x8xi32>
    %131 = arith.cmpi eq, %12, %130 : vector<8x8xi32>
    %cst_38 = arith.constant 0.000000e+00 : f32
    %132 = vector.shape_cast %120 : vector<8x1xf32> to vector<8x1xf32>
    %133 = vector.broadcast %132 : vector<8x1xf32> to vector<8x8xf32>
    %134 = vector.broadcast %cst_38 : f32 to vector<8x8xf32>
    %135 = arith.select %131, %133, %134 : vector<8x8xi1>, vector<8x8xf32>
    %136 = arith.addf %129, %135 : vector<8x8xf32>
    %c1_i32 = arith.constant 1 : i32
    %c7_i32_39 = arith.constant 7 : i32
    %137 = arith.subi %c7_i32_39, %c1_i32 : i32
    %c8_i32_40 = arith.constant 8 : i32
    %138 = arith.muli %c1_i32, %c8_i32_40 : i32
    %139 = tpu.assume_multiple %138, 8 : i32
    %c8_i32_41 = arith.constant 8 : i32
    %140 = arith.muli %137, %c8_i32_41 : i32
    %141 = tpu.assume_multiple %140, 8 : i32
    %142 = tpu.concatenate %71, %109 in 1 : vector<8x32xbf16>, vector<8x32xbf16> -> vector<8x64xbf16>
    %cst_42 = arith.constant dense<0.000000e+00> : vector<8x256xf32>
    %143 = tpu.matmul %142, %8, %cst_42 {dimension_numbers = #tpu.dot_dimension_numbers<[1], [0], [0], [1], [0, 0, 1, 1], [], []>} : vector<8x64xbf16>, vector<64x256xbf16>, vector<8x256xf32> -> vector<8x256xf32>
    %c0_43 = arith.constant 0 : index
    %144 = arith.index_cast %139 : i32 to index
    %c0_44 = arith.constant 0 : index
    %145 = vector.load %arg2[%c0_43, %144, %c0_44] : memref<1x64x1xf32, #tpu.memory_space<vmem>>, vector<1x8x1xf32>
    %146 = vector.shape_cast %145 : vector<1x8x1xf32> to vector<8x1xf32>
    %c0_45 = arith.constant 0 : index
    %147 = arith.index_cast %141 : i32 to index
    %c0_46 = arith.constant 0 : index
    %148 = vector.load %arg2[%c0_45, %147, %c0_46] : memref<1x64x1xf32, #tpu.memory_space<vmem>>, vector<1x8x1xf32>
    %149 = vector.shape_cast %148 : vector<1x8x1xf32> to vector<8x1xf32>
    %150 = arith.index_cast %139 : i32 to index
    %c0_47 = arith.constant 0 : index
    %151 = vector.load %arg8[%150, %c0_47] : memref<64x256xf32, #tpu.memory_space<vmem>>, vector<8x128xf32>
    %152 = vector.extract_strided_slice %143 {offsets = [0, 0], sizes = [8, 128], strides = [1, 1]} : vector<8x256xf32> to vector<8x128xf32>
    %153 = arith.addf %151, %152 : vector<8x128xf32>
    %154 = arith.index_cast %141 : i32 to index
    %c128_48 = arith.constant 128 : index
    %155 = vector.load %arg8[%154, %c128_48] : memref<64x256xf32, #tpu.memory_space<vmem>>, vector<8x128xf32>
    %156 = vector.extract_strided_slice %143 {offsets = [0, 128], sizes = [8, 128], strides = [1, 1]} : vector<8x256xf32> to vector<8x128xf32>
    %157 = arith.addf %155, %156 : vector<8x128xf32>
    %158 = vector.extract_strided_slice %153 {offsets = [0, 0], sizes = [8, 32], strides = [1, 1]} : vector<8x128xf32> to vector<8x32xf32>
    %159 = arith.negf %158 : vector<8x32xf32>
    %160 = math.exp %159 : vector<8x32xf32>
    %cst_49 = arith.constant 1.000000e+00 : f32
    %161 = vector.broadcast %cst_49 : f32 to vector<8x32xf32>
    %162 = arith.addf %161, %160 : vector<8x32xf32>
    %163 = arith.divf %161, %162 : vector<8x32xf32>
    %164 = vector.extract_strided_slice %153 {offsets = [0, 32], sizes = [8, 32], strides = [1, 1]} : vector<8x128xf32> to vector<8x32xf32>
    %165 = arith.negf %164 : vector<8x32xf32>
    %166 = math.exp %165 : vector<8x32xf32>
    %cst_50 = arith.constant 1.000000e+00 : f32
    %167 = vector.broadcast %cst_50 : f32 to vector<8x32xf32>
    %168 = arith.addf %167, %166 : vector<8x32xf32>
    %169 = arith.divf %167, %168 : vector<8x32xf32>
    %170 = vector.extract_strided_slice %153 {offsets = [0, 64], sizes = [8, 32], strides = [1, 1]} : vector<8x128xf32> to vector<8x32xf32>
    %171 = math.tanh %170 : vector<8x32xf32>
    %172 = vector.extract_strided_slice %153 {offsets = [0, 96], sizes = [8, 32], strides = [1, 1]} : vector<8x128xf32> to vector<8x32xf32>
    %173 = arith.negf %172 : vector<8x32xf32>
    %174 = math.exp %173 : vector<8x32xf32>
    %cst_51 = arith.constant 1.000000e+00 : f32
    %175 = vector.broadcast %cst_51 : f32 to vector<8x32xf32>
    %176 = arith.addf %175, %174 : vector<8x32xf32>
    %177 = arith.divf %175, %176 : vector<8x32xf32>
    %178 = arith.mulf %169, %74 : vector<8x32xf32>
    %179 = arith.mulf %163, %171 : vector<8x32xf32>
    %180 = arith.addf %178, %179 : vector<8x32xf32>
    %181 = math.tanh %180 : vector<8x32xf32>
    %182 = arith.mulf %177, %181 : vector<8x32xf32>
    %cst_52 = arith.constant 0.000000e+00 : f32
    %183 = vector.broadcast %cst_52 : f32 to vector<8x1xf32>
    %184 = arith.cmpf ogt, %146, %183 : vector<8x1xf32>
    %cst_53 = arith.constant 0.000000e+00 : f32
    %185 = vector.shape_cast %184 : vector<8x1xi1> to vector<8x1xi1>
    %186 = vector.broadcast %185 : vector<8x1xi1> to vector<8x32xi1>
    %187 = vector.broadcast %cst_53 : f32 to vector<8x32xf32>
    %188 = arith.select %186, %182, %187 : vector<8x32xi1>, vector<8x32xf32>
    %189 = arith.truncf %182 : vector<8x32xf32> to vector<8x32xbf16>
    %190 = vector.shape_cast %184 : vector<8x1xi1> to vector<8x1xi1>
    %191 = vector.broadcast %190 : vector<8x1xi1> to vector<8x32xi1>
    %192 = arith.select %191, %189, %71 : vector<8x32xi1>, vector<8x32xbf16>
    %193 = vector.shape_cast %184 : vector<8x1xi1> to vector<8x1xi1>
    %194 = vector.broadcast %193 : vector<8x1xi1> to vector<8x32xi1>
    %195 = arith.select %194, %180, %74 : vector<8x32xi1>, vector<8x32xf32>
    %196 = vector.extract_strided_slice %157 {offsets = [0, 0], sizes = [8, 32], strides = [1, 1]} : vector<8x128xf32> to vector<8x32xf32>
    %197 = arith.negf %196 : vector<8x32xf32>
    %198 = math.exp %197 : vector<8x32xf32>
    %cst_54 = arith.constant 1.000000e+00 : f32
    %199 = vector.broadcast %cst_54 : f32 to vector<8x32xf32>
    %200 = arith.addf %199, %198 : vector<8x32xf32>
    %201 = arith.divf %199, %200 : vector<8x32xf32>
    %202 = vector.extract_strided_slice %157 {offsets = [0, 32], sizes = [8, 32], strides = [1, 1]} : vector<8x128xf32> to vector<8x32xf32>
    %203 = arith.negf %202 : vector<8x32xf32>
    %204 = math.exp %203 : vector<8x32xf32>
    %cst_55 = arith.constant 1.000000e+00 : f32
    %205 = vector.broadcast %cst_55 : f32 to vector<8x32xf32>
    %206 = arith.addf %205, %204 : vector<8x32xf32>
    %207 = arith.divf %205, %206 : vector<8x32xf32>
    %208 = vector.extract_strided_slice %157 {offsets = [0, 64], sizes = [8, 32], strides = [1, 1]} : vector<8x128xf32> to vector<8x32xf32>
    %209 = math.tanh %208 : vector<8x32xf32>
    %210 = vector.extract_strided_slice %157 {offsets = [0, 96], sizes = [8, 32], strides = [1, 1]} : vector<8x128xf32> to vector<8x32xf32>
    %211 = arith.negf %210 : vector<8x32xf32>
    %212 = math.exp %211 : vector<8x32xf32>
    %cst_56 = arith.constant 1.000000e+00 : f32
    %213 = vector.broadcast %cst_56 : f32 to vector<8x32xf32>
    %214 = arith.addf %213, %212 : vector<8x32xf32>
    %215 = arith.divf %213, %214 : vector<8x32xf32>
    %216 = arith.mulf %207, %112 : vector<8x32xf32>
    %217 = arith.mulf %201, %209 : vector<8x32xf32>
    %218 = arith.addf %216, %217 : vector<8x32xf32>
    %219 = math.tanh %218 : vector<8x32xf32>
    %220 = arith.mulf %215, %219 : vector<8x32xf32>
    %cst_57 = arith.constant 0.000000e+00 : f32
    %221 = vector.broadcast %cst_57 : f32 to vector<8x1xf32>
    %222 = arith.cmpf ogt, %149, %221 : vector<8x1xf32>
    %cst_58 = arith.constant 0.000000e+00 : f32
    %223 = vector.shape_cast %222 : vector<8x1xi1> to vector<8x1xi1>
    %224 = vector.broadcast %223 : vector<8x1xi1> to vector<8x32xi1>
    %225 = vector.broadcast %cst_58 : f32 to vector<8x32xf32>
    %226 = arith.select %224, %220, %225 : vector<8x32xi1>, vector<8x32xf32>
    %227 = arith.truncf %220 : vector<8x32xf32> to vector<8x32xbf16>
    %228 = vector.shape_cast %222 : vector<8x1xi1> to vector<8x1xi1>
    %229 = vector.broadcast %228 : vector<8x1xi1> to vector<8x32xi1>
    %230 = arith.select %229, %227, %109 : vector<8x32xi1>, vector<8x32xbf16>
    %231 = vector.shape_cast %222 : vector<8x1xi1> to vector<8x1xi1>
    %232 = vector.broadcast %231 : vector<8x1xi1> to vector<8x32xi1>
    %233 = arith.select %232, %218, %112 : vector<8x32xi1>, vector<8x32xf32>
    %234 = vector.broadcast %9 : vector<1x32xf32> to vector<8x32xf32>
    %235 = arith.mulf %188, %234 : vector<8x32xf32>
    %cst_59 = arith.constant dense<0.000000e+00> : vector<8xf32>
    %236 = vector.multi_reduction <add>, %235, %cst_59 [1] : vector<8x32xf32> to vector<8xf32>
    %237 = vector.shape_cast %236 : vector<8xf32> to vector<8x1xf32>
    %238 = vector.broadcast %10 : vector<1x32xf32> to vector<8x32xf32>
    %239 = arith.mulf %226, %238 : vector<8x32xf32>
    %cst_60 = arith.constant dense<0.000000e+00> : vector<8xf32>
    %240 = vector.multi_reduction <add>, %239, %cst_60 [1] : vector<8x32xf32> to vector<8xf32>
    %241 = vector.shape_cast %240 : vector<8xf32> to vector<8x1xf32>
    %242 = vector.broadcast %c1_i32 : i32 to vector<8x8xi32>
    %243 = arith.cmpi eq, %12, %242 : vector<8x8xi32>
    %244 = vector.broadcast %cst_17 : f32 to vector<8x1xf32>
    %245 = arith.select %184, %237, %244 : vector<8x1xi1>, vector<8x1xf32>
    %cst_61 = arith.constant 0.000000e+00 : f32
    %246 = vector.shape_cast %245 : vector<8x1xf32> to vector<8x1xf32>
    %247 = vector.broadcast %246 : vector<8x1xf32> to vector<8x8xf32>
    %248 = vector.broadcast %cst_61 : f32 to vector<8x8xf32>
    %249 = arith.select %243, %247, %248 : vector<8x8xi1>, vector<8x8xf32>
    %250 = arith.addf %136, %249 : vector<8x8xf32>
    %251 = vector.broadcast %137 : i32 to vector<8x8xi32>
    %252 = arith.cmpi eq, %12, %251 : vector<8x8xi32>
    %cst_62 = arith.constant 0.000000e+00 : f32
    %253 = vector.shape_cast %241 : vector<8x1xf32> to vector<8x1xf32>
    %254 = vector.broadcast %253 : vector<8x1xf32> to vector<8x8xf32>
    %255 = vector.broadcast %cst_62 : f32 to vector<8x8xf32>
    %256 = arith.select %252, %254, %255 : vector<8x8xi1>, vector<8x8xf32>
    %257 = arith.addf %250, %256 : vector<8x8xf32>
    %c2_i32 = arith.constant 2 : i32
    %c7_i32_63 = arith.constant 7 : i32
    %258 = arith.subi %c7_i32_63, %c2_i32 : i32
    %c8_i32_64 = arith.constant 8 : i32
    %259 = arith.muli %c2_i32, %c8_i32_64 : i32
    %260 = tpu.assume_multiple %259, 8 : i32
    %c8_i32_65 = arith.constant 8 : i32
    %261 = arith.muli %258, %c8_i32_65 : i32
    %262 = tpu.assume_multiple %261, 8 : i32
    %263 = tpu.concatenate %192, %230 in 1 : vector<8x32xbf16>, vector<8x32xbf16> -> vector<8x64xbf16>
    %cst_66 = arith.constant dense<0.000000e+00> : vector<8x256xf32>
    %264 = tpu.matmul %263, %8, %cst_66 {dimension_numbers = #tpu.dot_dimension_numbers<[1], [0], [0], [1], [0, 0, 1, 1], [], []>} : vector<8x64xbf16>, vector<64x256xbf16>, vector<8x256xf32> -> vector<8x256xf32>
    %c0_67 = arith.constant 0 : index
    %265 = arith.index_cast %260 : i32 to index
    %c0_68 = arith.constant 0 : index
    %266 = vector.load %arg2[%c0_67, %265, %c0_68] : memref<1x64x1xf32, #tpu.memory_space<vmem>>, vector<1x8x1xf32>
    %267 = vector.shape_cast %266 : vector<1x8x1xf32> to vector<8x1xf32>
    %c0_69 = arith.constant 0 : index
    %268 = arith.index_cast %262 : i32 to index
    %c0_70 = arith.constant 0 : index
    %269 = vector.load %arg2[%c0_69, %268, %c0_70] : memref<1x64x1xf32, #tpu.memory_space<vmem>>, vector<1x8x1xf32>
    %270 = vector.shape_cast %269 : vector<1x8x1xf32> to vector<8x1xf32>
    %271 = arith.index_cast %260 : i32 to index
    %c0_71 = arith.constant 0 : index
    %272 = vector.load %arg8[%271, %c0_71] : memref<64x256xf32, #tpu.memory_space<vmem>>, vector<8x128xf32>
    %273 = vector.extract_strided_slice %264 {offsets = [0, 0], sizes = [8, 128], strides = [1, 1]} : vector<8x256xf32> to vector<8x128xf32>
    %274 = arith.addf %272, %273 : vector<8x128xf32>
    %275 = arith.index_cast %262 : i32 to index
    %c128_72 = arith.constant 128 : index
    %276 = vector.load %arg8[%275, %c128_72] : memref<64x256xf32, #tpu.memory_space<vmem>>, vector<8x128xf32>
    %277 = vector.extract_strided_slice %264 {offsets = [0, 128], sizes = [8, 128], strides = [1, 1]} : vector<8x256xf32> to vector<8x128xf32>
    %278 = arith.addf %276, %277 : vector<8x128xf32>
    %279 = vector.extract_strided_slice %274 {offsets = [0, 0], sizes = [8, 32], strides = [1, 1]} : vector<8x128xf32> to vector<8x32xf32>
    %280 = arith.negf %279 : vector<8x32xf32>
    %281 = math.exp %280 : vector<8x32xf32>
    %cst_73 = arith.constant 1.000000e+00 : f32
    %282 = vector.broadcast %cst_73 : f32 to vector<8x32xf32>
    %283 = arith.addf %282, %281 : vector<8x32xf32>
    %284 = arith.divf %282, %283 : vector<8x32xf32>
    %285 = vector.extract_strided_slice %274 {offsets = [0, 32], sizes = [8, 32], strides = [1, 1]} : vector<8x128xf32> to vector<8x32xf32>
    %286 = arith.negf %285 : vector<8x32xf32>
    %287 = math.exp %286 : vector<8x32xf32>
    %cst_74 = arith.constant 1.000000e+00 : f32
    %288 = vector.broadcast %cst_74 : f32 to vector<8x32xf32>
    %289 = arith.addf %288, %287 : vector<8x32xf32>
    %290 = arith.divf %288, %289 : vector<8x32xf32>
    %291 = vector.extract_strided_slice %274 {offsets = [0, 64], sizes = [8, 32], strides = [1, 1]} : vector<8x128xf32> to vector<8x32xf32>
    %292 = math.tanh %291 : vector<8x32xf32>
    %293 = vector.extract_strided_slice %274 {offsets = [0, 96], sizes = [8, 32], strides = [1, 1]} : vector<8x128xf32> to vector<8x32xf32>
    %294 = arith.negf %293 : vector<8x32xf32>
    %295 = math.exp %294 : vector<8x32xf32>
    %cst_75 = arith.constant 1.000000e+00 : f32
    %296 = vector.broadcast %cst_75 : f32 to vector<8x32xf32>
    %297 = arith.addf %296, %295 : vector<8x32xf32>
    %298 = arith.divf %296, %297 : vector<8x32xf32>
    %299 = arith.mulf %290, %195 : vector<8x32xf32>
    %300 = arith.mulf %284, %292 : vector<8x32xf32>
    %301 = arith.addf %299, %300 : vector<8x32xf32>
    %302 = math.tanh %301 : vector<8x32xf32>
    %303 = arith.mulf %298, %302 : vector<8x32xf32>
    %cst_76 = arith.constant 0.000000e+00 : f32
    %304 = vector.broadcast %cst_76 : f32 to vector<8x1xf32>
    %305 = arith.cmpf ogt, %267, %304 : vector<8x1xf32>
    %cst_77 = arith.constant 0.000000e+00 : f32
    %306 = vector.shape_cast %305 : vector<8x1xi1> to vector<8x1xi1>
    %307 = vector.broadcast %306 : vector<8x1xi1> to vector<8x32xi1>
    %308 = vector.broadcast %cst_77 : f32 to vector<8x32xf32>
    %309 = arith.select %307, %303, %308 : vector<8x32xi1>, vector<8x32xf32>
    %310 = arith.truncf %303 : vector<8x32xf32> to vector<8x32xbf16>
    %311 = vector.shape_cast %305 : vector<8x1xi1> to vector<8x1xi1>
    %312 = vector.broadcast %311 : vector<8x1xi1> to vector<8x32xi1>
    %313 = arith.select %312, %310, %192 : vector<8x32xi1>, vector<8x32xbf16>
    %314 = vector.shape_cast %305 : vector<8x1xi1> to vector<8x1xi1>
    %315 = vector.broadcast %314 : vector<8x1xi1> to vector<8x32xi1>
    %316 = arith.select %315, %301, %195 : vector<8x32xi1>, vector<8x32xf32>
    %317 = vector.extract_strided_slice %278 {offsets = [0, 0], sizes = [8, 32], strides = [1, 1]} : vector<8x128xf32> to vector<8x32xf32>
    %318 = arith.negf %317 : vector<8x32xf32>
    %319 = math.exp %318 : vector<8x32xf32>
    %cst_78 = arith.constant 1.000000e+00 : f32
    %320 = vector.broadcast %cst_78 : f32 to vector<8x32xf32>
    %321 = arith.addf %320, %319 : vector<8x32xf32>
    %322 = arith.divf %320, %321 : vector<8x32xf32>
    %323 = vector.extract_strided_slice %278 {offsets = [0, 32], sizes = [8, 32], strides = [1, 1]} : vector<8x128xf32> to vector<8x32xf32>
    %324 = arith.negf %323 : vector<8x32xf32>
    %325 = math.exp %324 : vector<8x32xf32>
    %cst_79 = arith.constant 1.000000e+00 : f32
    %326 = vector.broadcast %cst_79 : f32 to vector<8x32xf32>
    %327 = arith.addf %326, %325 : vector<8x32xf32>
    %328 = arith.divf %326, %327 : vector<8x32xf32>
    %329 = vector.extract_strided_slice %278 {offsets = [0, 64], sizes = [8, 32], strides = [1, 1]} : vector<8x128xf32> to vector<8x32xf32>
    %330 = math.tanh %329 : vector<8x32xf32>
    %331 = vector.extract_strided_slice %278 {offsets = [0, 96], sizes = [8, 32], strides = [1, 1]} : vector<8x128xf32> to vector<8x32xf32>
    %332 = arith.negf %331 : vector<8x32xf32>
    %333 = math.exp %332 : vector<8x32xf32>
    %cst_80 = arith.constant 1.000000e+00 : f32
    %334 = vector.broadcast %cst_80 : f32 to vector<8x32xf32>
    %335 = arith.addf %334, %333 : vector<8x32xf32>
    %336 = arith.divf %334, %335 : vector<8x32xf32>
    %337 = arith.mulf %328, %233 : vector<8x32xf32>
    %338 = arith.mulf %322, %330 : vector<8x32xf32>
    %339 = arith.addf %337, %338 : vector<8x32xf32>
    %340 = math.tanh %339 : vector<8x32xf32>
    %341 = arith.mulf %336, %340 : vector<8x32xf32>
    %cst_81 = arith.constant 0.000000e+00 : f32
    %342 = vector.broadcast %cst_81 : f32 to vector<8x1xf32>
    %343 = arith.cmpf ogt, %270, %342 : vector<8x1xf32>
    %cst_82 = arith.constant 0.000000e+00 : f32
    %344 = vector.shape_cast %343 : vector<8x1xi1> to vector<8x1xi1>
    %345 = vector.broadcast %344 : vector<8x1xi1> to vector<8x32xi1>
    %346 = vector.broadcast %cst_82 : f32 to vector<8x32xf32>
    %347 = arith.select %345, %341, %346 : vector<8x32xi1>, vector<8x32xf32>
    %348 = arith.truncf %341 : vector<8x32xf32> to vector<8x32xbf16>
    %349 = vector.shape_cast %343 : vector<8x1xi1> to vector<8x1xi1>
    %350 = vector.broadcast %349 : vector<8x1xi1> to vector<8x32xi1>
    %351 = arith.select %350, %348, %230 : vector<8x32xi1>, vector<8x32xbf16>
    %352 = vector.shape_cast %343 : vector<8x1xi1> to vector<8x1xi1>
    %353 = vector.broadcast %352 : vector<8x1xi1> to vector<8x32xi1>
    %354 = arith.select %353, %339, %233 : vector<8x32xi1>, vector<8x32xf32>
    %355 = vector.broadcast %9 : vector<1x32xf32> to vector<8x32xf32>
    %356 = arith.mulf %309, %355 : vector<8x32xf32>
    %cst_83 = arith.constant dense<0.000000e+00> : vector<8xf32>
    %357 = vector.multi_reduction <add>, %356, %cst_83 [1] : vector<8x32xf32> to vector<8xf32>
    %358 = vector.shape_cast %357 : vector<8xf32> to vector<8x1xf32>
    %359 = vector.broadcast %10 : vector<1x32xf32> to vector<8x32xf32>
    %360 = arith.mulf %347, %359 : vector<8x32xf32>
    %cst_84 = arith.constant dense<0.000000e+00> : vector<8xf32>
    %361 = vector.multi_reduction <add>, %360, %cst_84 [1] : vector<8x32xf32> to vector<8xf32>
    %362 = vector.shape_cast %361 : vector<8xf32> to vector<8x1xf32>
    %363 = vector.broadcast %c2_i32 : i32 to vector<8x8xi32>
    %364 = arith.cmpi eq, %12, %363 : vector<8x8xi32>
    %365 = vector.broadcast %cst_17 : f32 to vector<8x1xf32>
    %366 = arith.select %305, %358, %365 : vector<8x1xi1>, vector<8x1xf32>
    %cst_85 = arith.constant 0.000000e+00 : f32
    %367 = vector.shape_cast %366 : vector<8x1xf32> to vector<8x1xf32>
    %368 = vector.broadcast %367 : vector<8x1xf32> to vector<8x8xf32>
    %369 = vector.broadcast %cst_85 : f32 to vector<8x8xf32>
    %370 = arith.select %364, %368, %369 : vector<8x8xi1>, vector<8x8xf32>
    %371 = arith.addf %257, %370 : vector<8x8xf32>
    %372 = vector.broadcast %258 : i32 to vector<8x8xi32>
    %373 = arith.cmpi eq, %12, %372 : vector<8x8xi32>
    %cst_86 = arith.constant 0.000000e+00 : f32
    %374 = vector.shape_cast %362 : vector<8x1xf32> to vector<8x1xf32>
    %375 = vector.broadcast %374 : vector<8x1xf32> to vector<8x8xf32>
    %376 = vector.broadcast %cst_86 : f32 to vector<8x8xf32>
    %377 = arith.select %373, %375, %376 : vector<8x8xi1>, vector<8x8xf32>
    %378 = arith.addf %371, %377 : vector<8x8xf32>
    %c3_i32 = arith.constant 3 : i32
    %c7_i32_87 = arith.constant 7 : i32
    %379 = arith.subi %c7_i32_87, %c3_i32 : i32
    %c8_i32_88 = arith.constant 8 : i32
    %380 = arith.muli %c3_i32, %c8_i32_88 : i32
    %381 = tpu.assume_multiple %380, 8 : i32
    %c8_i32_89 = arith.constant 8 : i32
    %382 = arith.muli %379, %c8_i32_89 : i32
    %383 = tpu.assume_multiple %382, 8 : i32
    %384 = tpu.concatenate %313, %351 in 1 : vector<8x32xbf16>, vector<8x32xbf16> -> vector<8x64xbf16>
    %cst_90 = arith.constant dense<0.000000e+00> : vector<8x256xf32>
    %385 = tpu.matmul %384, %8, %cst_90 {dimension_numbers = #tpu.dot_dimension_numbers<[1], [0], [0], [1], [0, 0, 1, 1], [], []>} : vector<8x64xbf16>, vector<64x256xbf16>, vector<8x256xf32> -> vector<8x256xf32>
    %c0_91 = arith.constant 0 : index
    %386 = arith.index_cast %381 : i32 to index
    %c0_92 = arith.constant 0 : index
    %387 = vector.load %arg2[%c0_91, %386, %c0_92] : memref<1x64x1xf32, #tpu.memory_space<vmem>>, vector<1x8x1xf32>
    %388 = vector.shape_cast %387 : vector<1x8x1xf32> to vector<8x1xf32>
    %c0_93 = arith.constant 0 : index
    %389 = arith.index_cast %383 : i32 to index
    %c0_94 = arith.constant 0 : index
    %390 = vector.load %arg2[%c0_93, %389, %c0_94] : memref<1x64x1xf32, #tpu.memory_space<vmem>>, vector<1x8x1xf32>
    %391 = vector.shape_cast %390 : vector<1x8x1xf32> to vector<8x1xf32>
    %392 = arith.index_cast %381 : i32 to index
    %c0_95 = arith.constant 0 : index
    %393 = vector.load %arg8[%392, %c0_95] : memref<64x256xf32, #tpu.memory_space<vmem>>, vector<8x128xf32>
    %394 = vector.extract_strided_slice %385 {offsets = [0, 0], sizes = [8, 128], strides = [1, 1]} : vector<8x256xf32> to vector<8x128xf32>
    %395 = arith.addf %393, %394 : vector<8x128xf32>
    %396 = arith.index_cast %383 : i32 to index
    %c128_96 = arith.constant 128 : index
    %397 = vector.load %arg8[%396, %c128_96] : memref<64x256xf32, #tpu.memory_space<vmem>>, vector<8x128xf32>
    %398 = vector.extract_strided_slice %385 {offsets = [0, 128], sizes = [8, 128], strides = [1, 1]} : vector<8x256xf32> to vector<8x128xf32>
    %399 = arith.addf %397, %398 : vector<8x128xf32>
    %400 = vector.extract_strided_slice %395 {offsets = [0, 0], sizes = [8, 32], strides = [1, 1]} : vector<8x128xf32> to vector<8x32xf32>
    %401 = arith.negf %400 : vector<8x32xf32>
    %402 = math.exp %401 : vector<8x32xf32>
    %cst_97 = arith.constant 1.000000e+00 : f32
    %403 = vector.broadcast %cst_97 : f32 to vector<8x32xf32>
    %404 = arith.addf %403, %402 : vector<8x32xf32>
    %405 = arith.divf %403, %404 : vector<8x32xf32>
    %406 = vector.extract_strided_slice %395 {offsets = [0, 32], sizes = [8, 32], strides = [1, 1]} : vector<8x128xf32> to vector<8x32xf32>
    %407 = arith.negf %406 : vector<8x32xf32>
    %408 = math.exp %407 : vector<8x32xf32>
    %cst_98 = arith.constant 1.000000e+00 : f32
    %409 = vector.broadcast %cst_98 : f32 to vector<8x32xf32>
    %410 = arith.addf %409, %408 : vector<8x32xf32>
    %411 = arith.divf %409, %410 : vector<8x32xf32>
    %412 = vector.extract_strided_slice %395 {offsets = [0, 64], sizes = [8, 32], strides = [1, 1]} : vector<8x128xf32> to vector<8x32xf32>
    %413 = math.tanh %412 : vector<8x32xf32>
    %414 = vector.extract_strided_slice %395 {offsets = [0, 96], sizes = [8, 32], strides = [1, 1]} : vector<8x128xf32> to vector<8x32xf32>
    %415 = arith.negf %414 : vector<8x32xf32>
    %416 = math.exp %415 : vector<8x32xf32>
    %cst_99 = arith.constant 1.000000e+00 : f32
    %417 = vector.broadcast %cst_99 : f32 to vector<8x32xf32>
    %418 = arith.addf %417, %416 : vector<8x32xf32>
    %419 = arith.divf %417, %418 : vector<8x32xf32>
    %420 = arith.mulf %411, %316 : vector<8x32xf32>
    %421 = arith.mulf %405, %413 : vector<8x32xf32>
    %422 = arith.addf %420, %421 : vector<8x32xf32>
    %423 = math.tanh %422 : vector<8x32xf32>
    %424 = arith.mulf %419, %423 : vector<8x32xf32>
    %cst_100 = arith.constant 0.000000e+00 : f32
    %425 = vector.broadcast %cst_100 : f32 to vector<8x1xf32>
    %426 = arith.cmpf ogt, %388, %425 : vector<8x1xf32>
    %cst_101 = arith.constant 0.000000e+00 : f32
    %427 = vector.shape_cast %426 : vector<8x1xi1> to vector<8x1xi1>
    %428 = vector.broadcast %427 : vector<8x1xi1> to vector<8x32xi1>
    %429 = vector.broadcast %cst_101 : f32 to vector<8x32xf32>
    %430 = arith.select %428, %424, %429 : vector<8x32xi1>, vector<8x32xf32>
    %431 = arith.truncf %424 : vector<8x32xf32> to vector<8x32xbf16>
    %432 = vector.shape_cast %426 : vector<8x1xi1> to vector<8x1xi1>
    %433 = vector.broadcast %432 : vector<8x1xi1> to vector<8x32xi1>
    %434 = arith.select %433, %431, %313 : vector<8x32xi1>, vector<8x32xbf16>
    %435 = vector.shape_cast %426 : vector<8x1xi1> to vector<8x1xi1>
    %436 = vector.broadcast %435 : vector<8x1xi1> to vector<8x32xi1>
    %437 = arith.select %436, %422, %316 : vector<8x32xi1>, vector<8x32xf32>
    %438 = vector.extract_strided_slice %399 {offsets = [0, 0], sizes = [8, 32], strides = [1, 1]} : vector<8x128xf32> to vector<8x32xf32>
    %439 = arith.negf %438 : vector<8x32xf32>
    %440 = math.exp %439 : vector<8x32xf32>
    %cst_102 = arith.constant 1.000000e+00 : f32
    %441 = vector.broadcast %cst_102 : f32 to vector<8x32xf32>
    %442 = arith.addf %441, %440 : vector<8x32xf32>
    %443 = arith.divf %441, %442 : vector<8x32xf32>
    %444 = vector.extract_strided_slice %399 {offsets = [0, 32], sizes = [8, 32], strides = [1, 1]} : vector<8x128xf32> to vector<8x32xf32>
    %445 = arith.negf %444 : vector<8x32xf32>
    %446 = math.exp %445 : vector<8x32xf32>
    %cst_103 = arith.constant 1.000000e+00 : f32
    %447 = vector.broadcast %cst_103 : f32 to vector<8x32xf32>
    %448 = arith.addf %447, %446 : vector<8x32xf32>
    %449 = arith.divf %447, %448 : vector<8x32xf32>
    %450 = vector.extract_strided_slice %399 {offsets = [0, 64], sizes = [8, 32], strides = [1, 1]} : vector<8x128xf32> to vector<8x32xf32>
    %451 = math.tanh %450 : vector<8x32xf32>
    %452 = vector.extract_strided_slice %399 {offsets = [0, 96], sizes = [8, 32], strides = [1, 1]} : vector<8x128xf32> to vector<8x32xf32>
    %453 = arith.negf %452 : vector<8x32xf32>
    %454 = math.exp %453 : vector<8x32xf32>
    %cst_104 = arith.constant 1.000000e+00 : f32
    %455 = vector.broadcast %cst_104 : f32 to vector<8x32xf32>
    %456 = arith.addf %455, %454 : vector<8x32xf32>
    %457 = arith.divf %455, %456 : vector<8x32xf32>
    %458 = arith.mulf %449, %354 : vector<8x32xf32>
    %459 = arith.mulf %443, %451 : vector<8x32xf32>
    %460 = arith.addf %458, %459 : vector<8x32xf32>
    %461 = math.tanh %460 : vector<8x32xf32>
    %462 = arith.mulf %457, %461 : vector<8x32xf32>
    %cst_105 = arith.constant 0.000000e+00 : f32
    %463 = vector.broadcast %cst_105 : f32 to vector<8x1xf32>
    %464 = arith.cmpf ogt, %391, %463 : vector<8x1xf32>
    %cst_106 = arith.constant 0.000000e+00 : f32
    %465 = vector.shape_cast %464 : vector<8x1xi1> to vector<8x1xi1>
    %466 = vector.broadcast %465 : vector<8x1xi1> to vector<8x32xi1>
    %467 = vector.broadcast %cst_106 : f32 to vector<8x32xf32>
    %468 = arith.select %466, %462, %467 : vector<8x32xi1>, vector<8x32xf32>
    %469 = arith.truncf %462 : vector<8x32xf32> to vector<8x32xbf16>
    %470 = vector.shape_cast %464 : vector<8x1xi1> to vector<8x1xi1>
    %471 = vector.broadcast %470 : vector<8x1xi1> to vector<8x32xi1>
    %472 = arith.select %471, %469, %351 : vector<8x32xi1>, vector<8x32xbf16>
    %473 = vector.shape_cast %464 : vector<8x1xi1> to vector<8x1xi1>
    %474 = vector.broadcast %473 : vector<8x1xi1> to vector<8x32xi1>
    %475 = arith.select %474, %460, %354 : vector<8x32xi1>, vector<8x32xf32>
    %476 = vector.broadcast %9 : vector<1x32xf32> to vector<8x32xf32>
    %477 = arith.mulf %430, %476 : vector<8x32xf32>
    %cst_107 = arith.constant dense<0.000000e+00> : vector<8xf32>
    %478 = vector.multi_reduction <add>, %477, %cst_107 [1] : vector<8x32xf32> to vector<8xf32>
    %479 = vector.shape_cast %478 : vector<8xf32> to vector<8x1xf32>
    %480 = vector.broadcast %10 : vector<1x32xf32> to vector<8x32xf32>
    %481 = arith.mulf %468, %480 : vector<8x32xf32>
    %cst_108 = arith.constant dense<0.000000e+00> : vector<8xf32>
    %482 = vector.multi_reduction <add>, %481, %cst_108 [1] : vector<8x32xf32> to vector<8xf32>
    %483 = vector.shape_cast %482 : vector<8xf32> to vector<8x1xf32>
    %484 = vector.broadcast %c3_i32 : i32 to vector<8x8xi32>
    %485 = arith.cmpi eq, %12, %484 : vector<8x8xi32>
    %486 = vector.broadcast %cst_17 : f32 to vector<8x1xf32>
    %487 = arith.select %426, %479, %486 : vector<8x1xi1>, vector<8x1xf32>
    %cst_109 = arith.constant 0.000000e+00 : f32
    %488 = vector.shape_cast %487 : vector<8x1xf32> to vector<8x1xf32>
    %489 = vector.broadcast %488 : vector<8x1xf32> to vector<8x8xf32>
    %490 = vector.broadcast %cst_109 : f32 to vector<8x8xf32>
    %491 = arith.select %485, %489, %490 : vector<8x8xi1>, vector<8x8xf32>
    %492 = arith.addf %378, %491 : vector<8x8xf32>
    %493 = vector.broadcast %379 : i32 to vector<8x8xi32>
    %494 = arith.cmpi eq, %12, %493 : vector<8x8xi32>
    %cst_110 = arith.constant 0.000000e+00 : f32
    %495 = vector.shape_cast %483 : vector<8x1xf32> to vector<8x1xf32>
    %496 = vector.broadcast %495 : vector<8x1xf32> to vector<8x8xf32>
    %497 = vector.broadcast %cst_110 : f32 to vector<8x8xf32>
    %498 = arith.select %494, %496, %497 : vector<8x8xi1>, vector<8x8xf32>
    %499 = arith.addf %492, %498 : vector<8x8xf32>
    %c4_i32 = arith.constant 4 : i32
    %c7_i32_111 = arith.constant 7 : i32
    %500 = arith.subi %c7_i32_111, %c4_i32 : i32
    %c8_i32_112 = arith.constant 8 : i32
    %501 = arith.muli %c4_i32, %c8_i32_112 : i32
    %502 = tpu.assume_multiple %501, 8 : i32
    %c8_i32_113 = arith.constant 8 : i32
    %503 = arith.muli %500, %c8_i32_113 : i32
    %504 = tpu.assume_multiple %503, 8 : i32
    %505 = tpu.concatenate %434, %472 in 1 : vector<8x32xbf16>, vector<8x32xbf16> -> vector<8x64xbf16>
    %cst_114 = arith.constant dense<0.000000e+00> : vector<8x256xf32>
    %506 = tpu.matmul %505, %8, %cst_114 {dimension_numbers = #tpu.dot_dimension_numbers<[1], [0], [0], [1], [0, 0, 1, 1], [], []>} : vector<8x64xbf16>, vector<64x256xbf16>, vector<8x256xf32> -> vector<8x256xf32>
    %c0_115 = arith.constant 0 : index
    %507 = arith.index_cast %502 : i32 to index
    %c0_116 = arith.constant 0 : index
    %508 = vector.load %arg2[%c0_115, %507, %c0_116] : memref<1x64x1xf32, #tpu.memory_space<vmem>>, vector<1x8x1xf32>
    %509 = vector.shape_cast %508 : vector<1x8x1xf32> to vector<8x1xf32>
    %c0_117 = arith.constant 0 : index
    %510 = arith.index_cast %504 : i32 to index
    %c0_118 = arith.constant 0 : index
    %511 = vector.load %arg2[%c0_117, %510, %c0_118] : memref<1x64x1xf32, #tpu.memory_space<vmem>>, vector<1x8x1xf32>
    %512 = vector.shape_cast %511 : vector<1x8x1xf32> to vector<8x1xf32>
    %513 = arith.index_cast %502 : i32 to index
    %c0_119 = arith.constant 0 : index
    %514 = vector.load %arg8[%513, %c0_119] : memref<64x256xf32, #tpu.memory_space<vmem>>, vector<8x128xf32>
    %515 = vector.extract_strided_slice %506 {offsets = [0, 0], sizes = [8, 128], strides = [1, 1]} : vector<8x256xf32> to vector<8x128xf32>
    %516 = arith.addf %514, %515 : vector<8x128xf32>
    %517 = arith.index_cast %504 : i32 to index
    %c128_120 = arith.constant 128 : index
    %518 = vector.load %arg8[%517, %c128_120] : memref<64x256xf32, #tpu.memory_space<vmem>>, vector<8x128xf32>
    %519 = vector.extract_strided_slice %506 {offsets = [0, 128], sizes = [8, 128], strides = [1, 1]} : vector<8x256xf32> to vector<8x128xf32>
    %520 = arith.addf %518, %519 : vector<8x128xf32>
    %521 = vector.extract_strided_slice %516 {offsets = [0, 0], sizes = [8, 32], strides = [1, 1]} : vector<8x128xf32> to vector<8x32xf32>
    %522 = arith.negf %521 : vector<8x32xf32>
    %523 = math.exp %522 : vector<8x32xf32>
    %cst_121 = arith.constant 1.000000e+00 : f32
    %524 = vector.broadcast %cst_121 : f32 to vector<8x32xf32>
    %525 = arith.addf %524, %523 : vector<8x32xf32>
    %526 = arith.divf %524, %525 : vector<8x32xf32>
    %527 = vector.extract_strided_slice %516 {offsets = [0, 32], sizes = [8, 32], strides = [1, 1]} : vector<8x128xf32> to vector<8x32xf32>
    %528 = arith.negf %527 : vector<8x32xf32>
    %529 = math.exp %528 : vector<8x32xf32>
    %cst_122 = arith.constant 1.000000e+00 : f32
    %530 = vector.broadcast %cst_122 : f32 to vector<8x32xf32>
    %531 = arith.addf %530, %529 : vector<8x32xf32>
    %532 = arith.divf %530, %531 : vector<8x32xf32>
    %533 = vector.extract_strided_slice %516 {offsets = [0, 64], sizes = [8, 32], strides = [1, 1]} : vector<8x128xf32> to vector<8x32xf32>
    %534 = math.tanh %533 : vector<8x32xf32>
    %535 = vector.extract_strided_slice %516 {offsets = [0, 96], sizes = [8, 32], strides = [1, 1]} : vector<8x128xf32> to vector<8x32xf32>
    %536 = arith.negf %535 : vector<8x32xf32>
    %537 = math.exp %536 : vector<8x32xf32>
    %cst_123 = arith.constant 1.000000e+00 : f32
    %538 = vector.broadcast %cst_123 : f32 to vector<8x32xf32>
    %539 = arith.addf %538, %537 : vector<8x32xf32>
    %540 = arith.divf %538, %539 : vector<8x32xf32>
    %541 = arith.mulf %532, %437 : vector<8x32xf32>
    %542 = arith.mulf %526, %534 : vector<8x32xf32>
    %543 = arith.addf %541, %542 : vector<8x32xf32>
    %544 = math.tanh %543 : vector<8x32xf32>
    %545 = arith.mulf %540, %544 : vector<8x32xf32>
    %cst_124 = arith.constant 0.000000e+00 : f32
    %546 = vector.broadcast %cst_124 : f32 to vector<8x1xf32>
    %547 = arith.cmpf ogt, %509, %546 : vector<8x1xf32>
    %cst_125 = arith.constant 0.000000e+00 : f32
    %548 = vector.shape_cast %547 : vector<8x1xi1> to vector<8x1xi1>
    %549 = vector.broadcast %548 : vector<8x1xi1> to vector<8x32xi1>
    %550 = vector.broadcast %cst_125 : f32 to vector<8x32xf32>
    %551 = arith.select %549, %545, %550 : vector<8x32xi1>, vector<8x32xf32>
    %552 = arith.truncf %545 : vector<8x32xf32> to vector<8x32xbf16>
    %553 = vector.shape_cast %547 : vector<8x1xi1> to vector<8x1xi1>
    %554 = vector.broadcast %553 : vector<8x1xi1> to vector<8x32xi1>
    %555 = arith.select %554, %552, %434 : vector<8x32xi1>, vector<8x32xbf16>
    %556 = vector.shape_cast %547 : vector<8x1xi1> to vector<8x1xi1>
    %557 = vector.broadcast %556 : vector<8x1xi1> to vector<8x32xi1>
    %558 = arith.select %557, %543, %437 : vector<8x32xi1>, vector<8x32xf32>
    %559 = vector.extract_strided_slice %520 {offsets = [0, 0], sizes = [8, 32], strides = [1, 1]} : vector<8x128xf32> to vector<8x32xf32>
    %560 = arith.negf %559 : vector<8x32xf32>
    %561 = math.exp %560 : vector<8x32xf32>
    %cst_126 = arith.constant 1.000000e+00 : f32
    %562 = vector.broadcast %cst_126 : f32 to vector<8x32xf32>
    %563 = arith.addf %562, %561 : vector<8x32xf32>
    %564 = arith.divf %562, %563 : vector<8x32xf32>
    %565 = vector.extract_strided_slice %520 {offsets = [0, 32], sizes = [8, 32], strides = [1, 1]} : vector<8x128xf32> to vector<8x32xf32>
    %566 = arith.negf %565 : vector<8x32xf32>
    %567 = math.exp %566 : vector<8x32xf32>
    %cst_127 = arith.constant 1.000000e+00 : f32
    %568 = vector.broadcast %cst_127 : f32 to vector<8x32xf32>
    %569 = arith.addf %568, %567 : vector<8x32xf32>
    %570 = arith.divf %568, %569 : vector<8x32xf32>
    %571 = vector.extract_strided_slice %520 {offsets = [0, 64], sizes = [8, 32], strides = [1, 1]} : vector<8x128xf32> to vector<8x32xf32>
    %572 = math.tanh %571 : vector<8x32xf32>
    %573 = vector.extract_strided_slice %520 {offsets = [0, 96], sizes = [8, 32], strides = [1, 1]} : vector<8x128xf32> to vector<8x32xf32>
    %574 = arith.negf %573 : vector<8x32xf32>
    %575 = math.exp %574 : vector<8x32xf32>
    %cst_128 = arith.constant 1.000000e+00 : f32
    %576 = vector.broadcast %cst_128 : f32 to vector<8x32xf32>
    %577 = arith.addf %576, %575 : vector<8x32xf32>
    %578 = arith.divf %576, %577 : vector<8x32xf32>
    %579 = arith.mulf %570, %475 : vector<8x32xf32>
    %580 = arith.mulf %564, %572 : vector<8x32xf32>
    %581 = arith.addf %579, %580 : vector<8x32xf32>
    %582 = math.tanh %581 : vector<8x32xf32>
    %583 = arith.mulf %578, %582 : vector<8x32xf32>
    %cst_129 = arith.constant 0.000000e+00 : f32
    %584 = vector.broadcast %cst_129 : f32 to vector<8x1xf32>
    %585 = arith.cmpf ogt, %512, %584 : vector<8x1xf32>
    %cst_130 = arith.constant 0.000000e+00 : f32
    %586 = vector.shape_cast %585 : vector<8x1xi1> to vector<8x1xi1>
    %587 = vector.broadcast %586 : vector<8x1xi1> to vector<8x32xi1>
    %588 = vector.broadcast %cst_130 : f32 to vector<8x32xf32>
    %589 = arith.select %587, %583, %588 : vector<8x32xi1>, vector<8x32xf32>
    %590 = arith.truncf %583 : vector<8x32xf32> to vector<8x32xbf16>
    %591 = vector.shape_cast %585 : vector<8x1xi1> to vector<8x1xi1>
    %592 = vector.broadcast %591 : vector<8x1xi1> to vector<8x32xi1>
    %593 = arith.select %592, %590, %472 : vector<8x32xi1>, vector<8x32xbf16>
    %594 = vector.shape_cast %585 : vector<8x1xi1> to vector<8x1xi1>
    %595 = vector.broadcast %594 : vector<8x1xi1> to vector<8x32xi1>
    %596 = arith.select %595, %581, %475 : vector<8x32xi1>, vector<8x32xf32>
    %597 = vector.broadcast %9 : vector<1x32xf32> to vector<8x32xf32>
    %598 = arith.mulf %551, %597 : vector<8x32xf32>
    %cst_131 = arith.constant dense<0.000000e+00> : vector<8xf32>
    %599 = vector.multi_reduction <add>, %598, %cst_131 [1] : vector<8x32xf32> to vector<8xf32>
    %600 = vector.shape_cast %599 : vector<8xf32> to vector<8x1xf32>
    %601 = vector.broadcast %10 : vector<1x32xf32> to vector<8x32xf32>
    %602 = arith.mulf %589, %601 : vector<8x32xf32>
    %cst_132 = arith.constant dense<0.000000e+00> : vector<8xf32>
    %603 = vector.multi_reduction <add>, %602, %cst_132 [1] : vector<8x32xf32> to vector<8xf32>
    %604 = vector.shape_cast %603 : vector<8xf32> to vector<8x1xf32>
    %605 = vector.broadcast %c4_i32 : i32 to vector<8x8xi32>
    %606 = arith.cmpi eq, %12, %605 : vector<8x8xi32>
    %607 = vector.broadcast %cst_17 : f32 to vector<8x1xf32>
    %608 = arith.select %547, %600, %607 : vector<8x1xi1>, vector<8x1xf32>
    %cst_133 = arith.constant 0.000000e+00 : f32
    %609 = vector.shape_cast %608 : vector<8x1xf32> to vector<8x1xf32>
    %610 = vector.broadcast %609 : vector<8x1xf32> to vector<8x8xf32>
    %611 = vector.broadcast %cst_133 : f32 to vector<8x8xf32>
    %612 = arith.select %606, %610, %611 : vector<8x8xi1>, vector<8x8xf32>
    %613 = arith.addf %499, %612 : vector<8x8xf32>
    %614 = vector.broadcast %500 : i32 to vector<8x8xi32>
    %615 = arith.cmpi eq, %12, %614 : vector<8x8xi32>
    %cst_134 = arith.constant 0.000000e+00 : f32
    %616 = vector.shape_cast %604 : vector<8x1xf32> to vector<8x1xf32>
    %617 = vector.broadcast %616 : vector<8x1xf32> to vector<8x8xf32>
    %618 = vector.broadcast %cst_134 : f32 to vector<8x8xf32>
    %619 = arith.select %615, %617, %618 : vector<8x8xi1>, vector<8x8xf32>
    %620 = arith.addf %613, %619 : vector<8x8xf32>
    %c5_i32 = arith.constant 5 : i32
    %c7_i32_135 = arith.constant 7 : i32
    %621 = arith.subi %c7_i32_135, %c5_i32 : i32
    %c8_i32_136 = arith.constant 8 : i32
    %622 = arith.muli %c5_i32, %c8_i32_136 : i32
    %623 = tpu.assume_multiple %622, 8 : i32
    %c8_i32_137 = arith.constant 8 : i32
    %624 = arith.muli %621, %c8_i32_137 : i32
    %625 = tpu.assume_multiple %624, 8 : i32
    %626 = tpu.concatenate %555, %593 in 1 : vector<8x32xbf16>, vector<8x32xbf16> -> vector<8x64xbf16>
    %cst_138 = arith.constant dense<0.000000e+00> : vector<8x256xf32>
    %627 = tpu.matmul %626, %8, %cst_138 {dimension_numbers = #tpu.dot_dimension_numbers<[1], [0], [0], [1], [0, 0, 1, 1], [], []>} : vector<8x64xbf16>, vector<64x256xbf16>, vector<8x256xf32> -> vector<8x256xf32>
    %c0_139 = arith.constant 0 : index
    %628 = arith.index_cast %623 : i32 to index
    %c0_140 = arith.constant 0 : index
    %629 = vector.load %arg2[%c0_139, %628, %c0_140] : memref<1x64x1xf32, #tpu.memory_space<vmem>>, vector<1x8x1xf32>
    %630 = vector.shape_cast %629 : vector<1x8x1xf32> to vector<8x1xf32>
    %c0_141 = arith.constant 0 : index
    %631 = arith.index_cast %625 : i32 to index
    %c0_142 = arith.constant 0 : index
    %632 = vector.load %arg2[%c0_141, %631, %c0_142] : memref<1x64x1xf32, #tpu.memory_space<vmem>>, vector<1x8x1xf32>
    %633 = vector.shape_cast %632 : vector<1x8x1xf32> to vector<8x1xf32>
    %634 = arith.index_cast %623 : i32 to index
    %c0_143 = arith.constant 0 : index
    %635 = vector.load %arg8[%634, %c0_143] : memref<64x256xf32, #tpu.memory_space<vmem>>, vector<8x128xf32>
    %636 = vector.extract_strided_slice %627 {offsets = [0, 0], sizes = [8, 128], strides = [1, 1]} : vector<8x256xf32> to vector<8x128xf32>
    %637 = arith.addf %635, %636 : vector<8x128xf32>
    %638 = arith.index_cast %625 : i32 to index
    %c128_144 = arith.constant 128 : index
    %639 = vector.load %arg8[%638, %c128_144] : memref<64x256xf32, #tpu.memory_space<vmem>>, vector<8x128xf32>
    %640 = vector.extract_strided_slice %627 {offsets = [0, 128], sizes = [8, 128], strides = [1, 1]} : vector<8x256xf32> to vector<8x128xf32>
    %641 = arith.addf %639, %640 : vector<8x128xf32>
    %642 = vector.extract_strided_slice %637 {offsets = [0, 0], sizes = [8, 32], strides = [1, 1]} : vector<8x128xf32> to vector<8x32xf32>
    %643 = arith.negf %642 : vector<8x32xf32>
    %644 = math.exp %643 : vector<8x32xf32>
    %cst_145 = arith.constant 1.000000e+00 : f32
    %645 = vector.broadcast %cst_145 : f32 to vector<8x32xf32>
    %646 = arith.addf %645, %644 : vector<8x32xf32>
    %647 = arith.divf %645, %646 : vector<8x32xf32>
    %648 = vector.extract_strided_slice %637 {offsets = [0, 32], sizes = [8, 32], strides = [1, 1]} : vector<8x128xf32> to vector<8x32xf32>
    %649 = arith.negf %648 : vector<8x32xf32>
    %650 = math.exp %649 : vector<8x32xf32>
    %cst_146 = arith.constant 1.000000e+00 : f32
    %651 = vector.broadcast %cst_146 : f32 to vector<8x32xf32>
    %652 = arith.addf %651, %650 : vector<8x32xf32>
    %653 = arith.divf %651, %652 : vector<8x32xf32>
    %654 = vector.extract_strided_slice %637 {offsets = [0, 64], sizes = [8, 32], strides = [1, 1]} : vector<8x128xf32> to vector<8x32xf32>
    %655 = math.tanh %654 : vector<8x32xf32>
    %656 = vector.extract_strided_slice %637 {offsets = [0, 96], sizes = [8, 32], strides = [1, 1]} : vector<8x128xf32> to vector<8x32xf32>
    %657 = arith.negf %656 : vector<8x32xf32>
    %658 = math.exp %657 : vector<8x32xf32>
    %cst_147 = arith.constant 1.000000e+00 : f32
    %659 = vector.broadcast %cst_147 : f32 to vector<8x32xf32>
    %660 = arith.addf %659, %658 : vector<8x32xf32>
    %661 = arith.divf %659, %660 : vector<8x32xf32>
    %662 = arith.mulf %653, %558 : vector<8x32xf32>
    %663 = arith.mulf %647, %655 : vector<8x32xf32>
    %664 = arith.addf %662, %663 : vector<8x32xf32>
    %665 = math.tanh %664 : vector<8x32xf32>
    %666 = arith.mulf %661, %665 : vector<8x32xf32>
    %cst_148 = arith.constant 0.000000e+00 : f32
    %667 = vector.broadcast %cst_148 : f32 to vector<8x1xf32>
    %668 = arith.cmpf ogt, %630, %667 : vector<8x1xf32>
    %cst_149 = arith.constant 0.000000e+00 : f32
    %669 = vector.shape_cast %668 : vector<8x1xi1> to vector<8x1xi1>
    %670 = vector.broadcast %669 : vector<8x1xi1> to vector<8x32xi1>
    %671 = vector.broadcast %cst_149 : f32 to vector<8x32xf32>
    %672 = arith.select %670, %666, %671 : vector<8x32xi1>, vector<8x32xf32>
    %673 = arith.truncf %666 : vector<8x32xf32> to vector<8x32xbf16>
    %674 = vector.shape_cast %668 : vector<8x1xi1> to vector<8x1xi1>
    %675 = vector.broadcast %674 : vector<8x1xi1> to vector<8x32xi1>
    %676 = arith.select %675, %673, %555 : vector<8x32xi1>, vector<8x32xbf16>
    %677 = vector.shape_cast %668 : vector<8x1xi1> to vector<8x1xi1>
    %678 = vector.broadcast %677 : vector<8x1xi1> to vector<8x32xi1>
    %679 = arith.select %678, %664, %558 : vector<8x32xi1>, vector<8x32xf32>
    %680 = vector.extract_strided_slice %641 {offsets = [0, 0], sizes = [8, 32], strides = [1, 1]} : vector<8x128xf32> to vector<8x32xf32>
    %681 = arith.negf %680 : vector<8x32xf32>
    %682 = math.exp %681 : vector<8x32xf32>
    %cst_150 = arith.constant 1.000000e+00 : f32
    %683 = vector.broadcast %cst_150 : f32 to vector<8x32xf32>
    %684 = arith.addf %683, %682 : vector<8x32xf32>
    %685 = arith.divf %683, %684 : vector<8x32xf32>
    %686 = vector.extract_strided_slice %641 {offsets = [0, 32], sizes = [8, 32], strides = [1, 1]} : vector<8x128xf32> to vector<8x32xf32>
    %687 = arith.negf %686 : vector<8x32xf32>
    %688 = math.exp %687 : vector<8x32xf32>
    %cst_151 = arith.constant 1.000000e+00 : f32
    %689 = vector.broadcast %cst_151 : f32 to vector<8x32xf32>
    %690 = arith.addf %689, %688 : vector<8x32xf32>
    %691 = arith.divf %689, %690 : vector<8x32xf32>
    %692 = vector.extract_strided_slice %641 {offsets = [0, 64], sizes = [8, 32], strides = [1, 1]} : vector<8x128xf32> to vector<8x32xf32>
    %693 = math.tanh %692 : vector<8x32xf32>
    %694 = vector.extract_strided_slice %641 {offsets = [0, 96], sizes = [8, 32], strides = [1, 1]} : vector<8x128xf32> to vector<8x32xf32>
    %695 = arith.negf %694 : vector<8x32xf32>
    %696 = math.exp %695 : vector<8x32xf32>
    %cst_152 = arith.constant 1.000000e+00 : f32
    %697 = vector.broadcast %cst_152 : f32 to vector<8x32xf32>
    %698 = arith.addf %697, %696 : vector<8x32xf32>
    %699 = arith.divf %697, %698 : vector<8x32xf32>
    %700 = arith.mulf %691, %596 : vector<8x32xf32>
    %701 = arith.mulf %685, %693 : vector<8x32xf32>
    %702 = arith.addf %700, %701 : vector<8x32xf32>
    %703 = math.tanh %702 : vector<8x32xf32>
    %704 = arith.mulf %699, %703 : vector<8x32xf32>
    %cst_153 = arith.constant 0.000000e+00 : f32
    %705 = vector.broadcast %cst_153 : f32 to vector<8x1xf32>
    %706 = arith.cmpf ogt, %633, %705 : vector<8x1xf32>
    %cst_154 = arith.constant 0.000000e+00 : f32
    %707 = vector.shape_cast %706 : vector<8x1xi1> to vector<8x1xi1>
    %708 = vector.broadcast %707 : vector<8x1xi1> to vector<8x32xi1>
    %709 = vector.broadcast %cst_154 : f32 to vector<8x32xf32>
    %710 = arith.select %708, %704, %709 : vector<8x32xi1>, vector<8x32xf32>
    %711 = arith.truncf %704 : vector<8x32xf32> to vector<8x32xbf16>
    %712 = vector.shape_cast %706 : vector<8x1xi1> to vector<8x1xi1>
    %713 = vector.broadcast %712 : vector<8x1xi1> to vector<8x32xi1>
    %714 = arith.select %713, %711, %593 : vector<8x32xi1>, vector<8x32xbf16>
    %715 = vector.shape_cast %706 : vector<8x1xi1> to vector<8x1xi1>
    %716 = vector.broadcast %715 : vector<8x1xi1> to vector<8x32xi1>
    %717 = arith.select %716, %702, %596 : vector<8x32xi1>, vector<8x32xf32>
    %718 = vector.broadcast %9 : vector<1x32xf32> to vector<8x32xf32>
    %719 = arith.mulf %672, %718 : vector<8x32xf32>
    %cst_155 = arith.constant dense<0.000000e+00> : vector<8xf32>
    %720 = vector.multi_reduction <add>, %719, %cst_155 [1] : vector<8x32xf32> to vector<8xf32>
    %721 = vector.shape_cast %720 : vector<8xf32> to vector<8x1xf32>
    %722 = vector.broadcast %10 : vector<1x32xf32> to vector<8x32xf32>
    %723 = arith.mulf %710, %722 : vector<8x32xf32>
    %cst_156 = arith.constant dense<0.000000e+00> : vector<8xf32>
    %724 = vector.multi_reduction <add>, %723, %cst_156 [1] : vector<8x32xf32> to vector<8xf32>
    %725 = vector.shape_cast %724 : vector<8xf32> to vector<8x1xf32>
    %726 = vector.broadcast %c5_i32 : i32 to vector<8x8xi32>
    %727 = arith.cmpi eq, %12, %726 : vector<8x8xi32>
    %728 = vector.broadcast %cst_17 : f32 to vector<8x1xf32>
    %729 = arith.select %668, %721, %728 : vector<8x1xi1>, vector<8x1xf32>
    %cst_157 = arith.constant 0.000000e+00 : f32
    %730 = vector.shape_cast %729 : vector<8x1xf32> to vector<8x1xf32>
    %731 = vector.broadcast %730 : vector<8x1xf32> to vector<8x8xf32>
    %732 = vector.broadcast %cst_157 : f32 to vector<8x8xf32>
    %733 = arith.select %727, %731, %732 : vector<8x8xi1>, vector<8x8xf32>
    %734 = arith.addf %620, %733 : vector<8x8xf32>
    %735 = vector.broadcast %621 : i32 to vector<8x8xi32>
    %736 = arith.cmpi eq, %12, %735 : vector<8x8xi32>
    %cst_158 = arith.constant 0.000000e+00 : f32
    %737 = vector.shape_cast %725 : vector<8x1xf32> to vector<8x1xf32>
    %738 = vector.broadcast %737 : vector<8x1xf32> to vector<8x8xf32>
    %739 = vector.broadcast %cst_158 : f32 to vector<8x8xf32>
    %740 = arith.select %736, %738, %739 : vector<8x8xi1>, vector<8x8xf32>
    %741 = arith.addf %734, %740 : vector<8x8xf32>
    %c6_i32 = arith.constant 6 : i32
    %c7_i32_159 = arith.constant 7 : i32
    %742 = arith.subi %c7_i32_159, %c6_i32 : i32
    %c8_i32_160 = arith.constant 8 : i32
    %743 = arith.muli %c6_i32, %c8_i32_160 : i32
    %744 = tpu.assume_multiple %743, 8 : i32
    %c8_i32_161 = arith.constant 8 : i32
    %745 = arith.muli %742, %c8_i32_161 : i32
    %746 = tpu.assume_multiple %745, 8 : i32
    %747 = tpu.concatenate %676, %714 in 1 : vector<8x32xbf16>, vector<8x32xbf16> -> vector<8x64xbf16>
    %cst_162 = arith.constant dense<0.000000e+00> : vector<8x256xf32>
    %748 = tpu.matmul %747, %8, %cst_162 {dimension_numbers = #tpu.dot_dimension_numbers<[1], [0], [0], [1], [0, 0, 1, 1], [], []>} : vector<8x64xbf16>, vector<64x256xbf16>, vector<8x256xf32> -> vector<8x256xf32>
    %c0_163 = arith.constant 0 : index
    %749 = arith.index_cast %744 : i32 to index
    %c0_164 = arith.constant 0 : index
    %750 = vector.load %arg2[%c0_163, %749, %c0_164] : memref<1x64x1xf32, #tpu.memory_space<vmem>>, vector<1x8x1xf32>
    %751 = vector.shape_cast %750 : vector<1x8x1xf32> to vector<8x1xf32>
    %c0_165 = arith.constant 0 : index
    %752 = arith.index_cast %746 : i32 to index
    %c0_166 = arith.constant 0 : index
    %753 = vector.load %arg2[%c0_165, %752, %c0_166] : memref<1x64x1xf32, #tpu.memory_space<vmem>>, vector<1x8x1xf32>
    %754 = vector.shape_cast %753 : vector<1x8x1xf32> to vector<8x1xf32>
    %755 = arith.index_cast %744 : i32 to index
    %c0_167 = arith.constant 0 : index
    %756 = vector.load %arg8[%755, %c0_167] : memref<64x256xf32, #tpu.memory_space<vmem>>, vector<8x128xf32>
    %757 = vector.extract_strided_slice %748 {offsets = [0, 0], sizes = [8, 128], strides = [1, 1]} : vector<8x256xf32> to vector<8x128xf32>
    %758 = arith.addf %756, %757 : vector<8x128xf32>
    %759 = arith.index_cast %746 : i32 to index
    %c128_168 = arith.constant 128 : index
    %760 = vector.load %arg8[%759, %c128_168] : memref<64x256xf32, #tpu.memory_space<vmem>>, vector<8x128xf32>
    %761 = vector.extract_strided_slice %748 {offsets = [0, 128], sizes = [8, 128], strides = [1, 1]} : vector<8x256xf32> to vector<8x128xf32>
    %762 = arith.addf %760, %761 : vector<8x128xf32>
    %763 = vector.extract_strided_slice %758 {offsets = [0, 0], sizes = [8, 32], strides = [1, 1]} : vector<8x128xf32> to vector<8x32xf32>
    %764 = arith.negf %763 : vector<8x32xf32>
    %765 = math.exp %764 : vector<8x32xf32>
    %cst_169 = arith.constant 1.000000e+00 : f32
    %766 = vector.broadcast %cst_169 : f32 to vector<8x32xf32>
    %767 = arith.addf %766, %765 : vector<8x32xf32>
    %768 = arith.divf %766, %767 : vector<8x32xf32>
    %769 = vector.extract_strided_slice %758 {offsets = [0, 32], sizes = [8, 32], strides = [1, 1]} : vector<8x128xf32> to vector<8x32xf32>
    %770 = arith.negf %769 : vector<8x32xf32>
    %771 = math.exp %770 : vector<8x32xf32>
    %cst_170 = arith.constant 1.000000e+00 : f32
    %772 = vector.broadcast %cst_170 : f32 to vector<8x32xf32>
    %773 = arith.addf %772, %771 : vector<8x32xf32>
    %774 = arith.divf %772, %773 : vector<8x32xf32>
    %775 = vector.extract_strided_slice %758 {offsets = [0, 64], sizes = [8, 32], strides = [1, 1]} : vector<8x128xf32> to vector<8x32xf32>
    %776 = math.tanh %775 : vector<8x32xf32>
    %777 = vector.extract_strided_slice %758 {offsets = [0, 96], sizes = [8, 32], strides = [1, 1]} : vector<8x128xf32> to vector<8x32xf32>
    %778 = arith.negf %777 : vector<8x32xf32>
    %779 = math.exp %778 : vector<8x32xf32>
    %cst_171 = arith.constant 1.000000e+00 : f32
    %780 = vector.broadcast %cst_171 : f32 to vector<8x32xf32>
    %781 = arith.addf %780, %779 : vector<8x32xf32>
    %782 = arith.divf %780, %781 : vector<8x32xf32>
    %783 = arith.mulf %774, %679 : vector<8x32xf32>
    %784 = arith.mulf %768, %776 : vector<8x32xf32>
    %785 = arith.addf %783, %784 : vector<8x32xf32>
    %786 = math.tanh %785 : vector<8x32xf32>
    %787 = arith.mulf %782, %786 : vector<8x32xf32>
    %cst_172 = arith.constant 0.000000e+00 : f32
    %788 = vector.broadcast %cst_172 : f32 to vector<8x1xf32>
    %789 = arith.cmpf ogt, %751, %788 : vector<8x1xf32>
    %cst_173 = arith.constant 0.000000e+00 : f32
    %790 = vector.shape_cast %789 : vector<8x1xi1> to vector<8x1xi1>
    %791 = vector.broadcast %790 : vector<8x1xi1> to vector<8x32xi1>
    %792 = vector.broadcast %cst_173 : f32 to vector<8x32xf32>
    %793 = arith.select %791, %787, %792 : vector<8x32xi1>, vector<8x32xf32>
    %794 = arith.truncf %787 : vector<8x32xf32> to vector<8x32xbf16>
    %795 = vector.shape_cast %789 : vector<8x1xi1> to vector<8x1xi1>
    %796 = vector.broadcast %795 : vector<8x1xi1> to vector<8x32xi1>
    %797 = arith.select %796, %794, %676 : vector<8x32xi1>, vector<8x32xbf16>
    %798 = vector.shape_cast %789 : vector<8x1xi1> to vector<8x1xi1>
    %799 = vector.broadcast %798 : vector<8x1xi1> to vector<8x32xi1>
    %800 = arith.select %799, %785, %679 : vector<8x32xi1>, vector<8x32xf32>
    %801 = vector.extract_strided_slice %762 {offsets = [0, 0], sizes = [8, 32], strides = [1, 1]} : vector<8x128xf32> to vector<8x32xf32>
    %802 = arith.negf %801 : vector<8x32xf32>
    %803 = math.exp %802 : vector<8x32xf32>
    %cst_174 = arith.constant 1.000000e+00 : f32
    %804 = vector.broadcast %cst_174 : f32 to vector<8x32xf32>
    %805 = arith.addf %804, %803 : vector<8x32xf32>
    %806 = arith.divf %804, %805 : vector<8x32xf32>
    %807 = vector.extract_strided_slice %762 {offsets = [0, 32], sizes = [8, 32], strides = [1, 1]} : vector<8x128xf32> to vector<8x32xf32>
    %808 = arith.negf %807 : vector<8x32xf32>
    %809 = math.exp %808 : vector<8x32xf32>
    %cst_175 = arith.constant 1.000000e+00 : f32
    %810 = vector.broadcast %cst_175 : f32 to vector<8x32xf32>
    %811 = arith.addf %810, %809 : vector<8x32xf32>
    %812 = arith.divf %810, %811 : vector<8x32xf32>
    %813 = vector.extract_strided_slice %762 {offsets = [0, 64], sizes = [8, 32], strides = [1, 1]} : vector<8x128xf32> to vector<8x32xf32>
    %814 = math.tanh %813 : vector<8x32xf32>
    %815 = vector.extract_strided_slice %762 {offsets = [0, 96], sizes = [8, 32], strides = [1, 1]} : vector<8x128xf32> to vector<8x32xf32>
    %816 = arith.negf %815 : vector<8x32xf32>
    %817 = math.exp %816 : vector<8x32xf32>
    %cst_176 = arith.constant 1.000000e+00 : f32
    %818 = vector.broadcast %cst_176 : f32 to vector<8x32xf32>
    %819 = arith.addf %818, %817 : vector<8x32xf32>
    %820 = arith.divf %818, %819 : vector<8x32xf32>
    %821 = arith.mulf %812, %717 : vector<8x32xf32>
    %822 = arith.mulf %806, %814 : vector<8x32xf32>
    %823 = arith.addf %821, %822 : vector<8x32xf32>
    %824 = math.tanh %823 : vector<8x32xf32>
    %825 = arith.mulf %820, %824 : vector<8x32xf32>
    %cst_177 = arith.constant 0.000000e+00 : f32
    %826 = vector.broadcast %cst_177 : f32 to vector<8x1xf32>
    %827 = arith.cmpf ogt, %754, %826 : vector<8x1xf32>
    %cst_178 = arith.constant 0.000000e+00 : f32
    %828 = vector.shape_cast %827 : vector<8x1xi1> to vector<8x1xi1>
    %829 = vector.broadcast %828 : vector<8x1xi1> to vector<8x32xi1>
    %830 = vector.broadcast %cst_178 : f32 to vector<8x32xf32>
    %831 = arith.select %829, %825, %830 : vector<8x32xi1>, vector<8x32xf32>
    %832 = arith.truncf %825 : vector<8x32xf32> to vector<8x32xbf16>
    %833 = vector.shape_cast %827 : vector<8x1xi1> to vector<8x1xi1>
    %834 = vector.broadcast %833 : vector<8x1xi1> to vector<8x32xi1>
    %835 = arith.select %834, %832, %714 : vector<8x32xi1>, vector<8x32xbf16>
    %836 = vector.shape_cast %827 : vector<8x1xi1> to vector<8x1xi1>
    %837 = vector.broadcast %836 : vector<8x1xi1> to vector<8x32xi1>
    %838 = arith.select %837, %823, %717 : vector<8x32xi1>, vector<8x32xf32>
    %839 = vector.broadcast %9 : vector<1x32xf32> to vector<8x32xf32>
    %840 = arith.mulf %793, %839 : vector<8x32xf32>
    %cst_179 = arith.constant dense<0.000000e+00> : vector<8xf32>
    %841 = vector.multi_reduction <add>, %840, %cst_179 [1] : vector<8x32xf32> to vector<8xf32>
    %842 = vector.shape_cast %841 : vector<8xf32> to vector<8x1xf32>
    %843 = vector.broadcast %10 : vector<1x32xf32> to vector<8x32xf32>
    %844 = arith.mulf %831, %843 : vector<8x32xf32>
    %cst_180 = arith.constant dense<0.000000e+00> : vector<8xf32>
    %845 = vector.multi_reduction <add>, %844, %cst_180 [1] : vector<8x32xf32> to vector<8xf32>
    %846 = vector.shape_cast %845 : vector<8xf32> to vector<8x1xf32>
    %847 = vector.broadcast %c6_i32 : i32 to vector<8x8xi32>
    %848 = arith.cmpi eq, %12, %847 : vector<8x8xi32>
    %849 = vector.broadcast %cst_17 : f32 to vector<8x1xf32>
    %850 = arith.select %789, %842, %849 : vector<8x1xi1>, vector<8x1xf32>
    %cst_181 = arith.constant 0.000000e+00 : f32
    %851 = vector.shape_cast %850 : vector<8x1xf32> to vector<8x1xf32>
    %852 = vector.broadcast %851 : vector<8x1xf32> to vector<8x8xf32>
    %853 = vector.broadcast %cst_181 : f32 to vector<8x8xf32>
    %854 = arith.select %848, %852, %853 : vector<8x8xi1>, vector<8x8xf32>
    %855 = arith.addf %741, %854 : vector<8x8xf32>
    %856 = vector.broadcast %742 : i32 to vector<8x8xi32>
    %857 = arith.cmpi eq, %12, %856 : vector<8x8xi32>
    %cst_182 = arith.constant 0.000000e+00 : f32
    %858 = vector.shape_cast %846 : vector<8x1xf32> to vector<8x1xf32>
    %859 = vector.broadcast %858 : vector<8x1xf32> to vector<8x8xf32>
    %860 = vector.broadcast %cst_182 : f32 to vector<8x8xf32>
    %861 = arith.select %857, %859, %860 : vector<8x8xi1>, vector<8x8xf32>
    %862 = arith.addf %855, %861 : vector<8x8xf32>
    %c7_i32_183 = arith.constant 7 : i32
    %c7_i32_184 = arith.constant 7 : i32
    %863 = arith.subi %c7_i32_184, %c7_i32_183 : i32
    %c8_i32_185 = arith.constant 8 : i32
    %864 = arith.muli %c7_i32_183, %c8_i32_185 : i32
    %865 = tpu.assume_multiple %864, 8 : i32
    %c8_i32_186 = arith.constant 8 : i32
    %866 = arith.muli %863, %c8_i32_186 : i32
    %867 = tpu.assume_multiple %866, 8 : i32
    %868 = tpu.concatenate %797, %835 in 1 : vector<8x32xbf16>, vector<8x32xbf16> -> vector<8x64xbf16>
    %cst_187 = arith.constant dense<0.000000e+00> : vector<8x256xf32>
    %869 = tpu.matmul %868, %8, %cst_187 {dimension_numbers = #tpu.dot_dimension_numbers<[1], [0], [0], [1], [0, 0, 1, 1], [], []>} : vector<8x64xbf16>, vector<64x256xbf16>, vector<8x256xf32> -> vector<8x256xf32>
    %c0_188 = arith.constant 0 : index
    %870 = arith.index_cast %865 : i32 to index
    %c0_189 = arith.constant 0 : index
    %871 = vector.load %arg2[%c0_188, %870, %c0_189] : memref<1x64x1xf32, #tpu.memory_space<vmem>>, vector<1x8x1xf32>
    %872 = vector.shape_cast %871 : vector<1x8x1xf32> to vector<8x1xf32>
    %c0_190 = arith.constant 0 : index
    %873 = arith.index_cast %867 : i32 to index
    %c0_191 = arith.constant 0 : index
    %874 = vector.load %arg2[%c0_190, %873, %c0_191] : memref<1x64x1xf32, #tpu.memory_space<vmem>>, vector<1x8x1xf32>
    %875 = vector.shape_cast %874 : vector<1x8x1xf32> to vector<8x1xf32>
    %876 = arith.index_cast %865 : i32 to index
    %c0_192 = arith.constant 0 : index
    %877 = vector.load %arg8[%876, %c0_192] : memref<64x256xf32, #tpu.memory_space<vmem>>, vector<8x128xf32>
    %878 = vector.extract_strided_slice %869 {offsets = [0, 0], sizes = [8, 128], strides = [1, 1]} : vector<8x256xf32> to vector<8x128xf32>
    %879 = arith.addf %877, %878 : vector<8x128xf32>
    %880 = arith.index_cast %867 : i32 to index
    %c128_193 = arith.constant 128 : index
    %881 = vector.load %arg8[%880, %c128_193] : memref<64x256xf32, #tpu.memory_space<vmem>>, vector<8x128xf32>
    %882 = vector.extract_strided_slice %869 {offsets = [0, 128], sizes = [8, 128], strides = [1, 1]} : vector<8x256xf32> to vector<8x128xf32>
    %883 = arith.addf %881, %882 : vector<8x128xf32>
    %884 = vector.extract_strided_slice %879 {offsets = [0, 0], sizes = [8, 32], strides = [1, 1]} : vector<8x128xf32> to vector<8x32xf32>
    %885 = arith.negf %884 : vector<8x32xf32>
    %886 = math.exp %885 : vector<8x32xf32>
    %cst_194 = arith.constant 1.000000e+00 : f32
    %887 = vector.broadcast %cst_194 : f32 to vector<8x32xf32>
    %888 = arith.addf %887, %886 : vector<8x32xf32>
    %889 = arith.divf %887, %888 : vector<8x32xf32>
    %890 = vector.extract_strided_slice %879 {offsets = [0, 32], sizes = [8, 32], strides = [1, 1]} : vector<8x128xf32> to vector<8x32xf32>
    %891 = arith.negf %890 : vector<8x32xf32>
    %892 = math.exp %891 : vector<8x32xf32>
    %cst_195 = arith.constant 1.000000e+00 : f32
    %893 = vector.broadcast %cst_195 : f32 to vector<8x32xf32>
    %894 = arith.addf %893, %892 : vector<8x32xf32>
    %895 = arith.divf %893, %894 : vector<8x32xf32>
    %896 = vector.extract_strided_slice %879 {offsets = [0, 64], sizes = [8, 32], strides = [1, 1]} : vector<8x128xf32> to vector<8x32xf32>
    %897 = math.tanh %896 : vector<8x32xf32>
    %898 = vector.extract_strided_slice %879 {offsets = [0, 96], sizes = [8, 32], strides = [1, 1]} : vector<8x128xf32> to vector<8x32xf32>
    %899 = arith.negf %898 : vector<8x32xf32>
    %900 = math.exp %899 : vector<8x32xf32>
    %cst_196 = arith.constant 1.000000e+00 : f32
    %901 = vector.broadcast %cst_196 : f32 to vector<8x32xf32>
    %902 = arith.addf %901, %900 : vector<8x32xf32>
    %903 = arith.divf %901, %902 : vector<8x32xf32>
    %904 = arith.mulf %895, %800 : vector<8x32xf32>
    %905 = arith.mulf %889, %897 : vector<8x32xf32>
    %906 = arith.addf %904, %905 : vector<8x32xf32>
    %907 = math.tanh %906 : vector<8x32xf32>
    %908 = arith.mulf %903, %907 : vector<8x32xf32>
    %cst_197 = arith.constant 0.000000e+00 : f32
    %909 = vector.broadcast %cst_197 : f32 to vector<8x1xf32>
    %910 = arith.cmpf ogt, %872, %909 : vector<8x1xf32>
    %cst_198 = arith.constant 0.000000e+00 : f32
    %911 = vector.shape_cast %910 : vector<8x1xi1> to vector<8x1xi1>
    %912 = vector.broadcast %911 : vector<8x1xi1> to vector<8x32xi1>
    %913 = vector.broadcast %cst_198 : f32 to vector<8x32xf32>
    %914 = arith.select %912, %908, %913 : vector<8x32xi1>, vector<8x32xf32>
    %915 = arith.truncf %908 : vector<8x32xf32> to vector<8x32xbf16>
    %916 = vector.shape_cast %910 : vector<8x1xi1> to vector<8x1xi1>
    %917 = vector.broadcast %916 : vector<8x1xi1> to vector<8x32xi1>
    %918 = arith.select %917, %915, %797 : vector<8x32xi1>, vector<8x32xbf16>
    %919 = vector.shape_cast %910 : vector<8x1xi1> to vector<8x1xi1>
    %920 = vector.broadcast %919 : vector<8x1xi1> to vector<8x32xi1>
    %921 = arith.select %920, %906, %800 : vector<8x32xi1>, vector<8x32xf32>
    %922 = vector.extract_strided_slice %883 {offsets = [0, 0], sizes = [8, 32], strides = [1, 1]} : vector<8x128xf32> to vector<8x32xf32>
    %923 = arith.negf %922 : vector<8x32xf32>
    %924 = math.exp %923 : vector<8x32xf32>
    %cst_199 = arith.constant 1.000000e+00 : f32
    %925 = vector.broadcast %cst_199 : f32 to vector<8x32xf32>
    %926 = arith.addf %925, %924 : vector<8x32xf32>
    %927 = arith.divf %925, %926 : vector<8x32xf32>
    %928 = vector.extract_strided_slice %883 {offsets = [0, 32], sizes = [8, 32], strides = [1, 1]} : vector<8x128xf32> to vector<8x32xf32>
    %929 = arith.negf %928 : vector<8x32xf32>
    %930 = math.exp %929 : vector<8x32xf32>
    %cst_200 = arith.constant 1.000000e+00 : f32
    %931 = vector.broadcast %cst_200 : f32 to vector<8x32xf32>
    %932 = arith.addf %931, %930 : vector<8x32xf32>
    %933 = arith.divf %931, %932 : vector<8x32xf32>
    %934 = vector.extract_strided_slice %883 {offsets = [0, 64], sizes = [8, 32], strides = [1, 1]} : vector<8x128xf32> to vector<8x32xf32>
    %935 = math.tanh %934 : vector<8x32xf32>
    %936 = vector.extract_strided_slice %883 {offsets = [0, 96], sizes = [8, 32], strides = [1, 1]} : vector<8x128xf32> to vector<8x32xf32>
    %937 = arith.negf %936 : vector<8x32xf32>
    %938 = math.exp %937 : vector<8x32xf32>
    %cst_201 = arith.constant 1.000000e+00 : f32
    %939 = vector.broadcast %cst_201 : f32 to vector<8x32xf32>
    %940 = arith.addf %939, %938 : vector<8x32xf32>
    %941 = arith.divf %939, %940 : vector<8x32xf32>
    %942 = arith.mulf %933, %838 : vector<8x32xf32>
    %943 = arith.mulf %927, %935 : vector<8x32xf32>
    %944 = arith.addf %942, %943 : vector<8x32xf32>
    %945 = math.tanh %944 : vector<8x32xf32>
    %946 = arith.mulf %941, %945 : vector<8x32xf32>
    %cst_202 = arith.constant 0.000000e+00 : f32
    %947 = vector.broadcast %cst_202 : f32 to vector<8x1xf32>
    %948 = arith.cmpf ogt, %875, %947 : vector<8x1xf32>
    %cst_203 = arith.constant 0.000000e+00 : f32
    %949 = vector.shape_cast %948 : vector<8x1xi1> to vector<8x1xi1>
    %950 = vector.broadcast %949 : vector<8x1xi1> to vector<8x32xi1>
    %951 = vector.broadcast %cst_203 : f32 to vector<8x32xf32>
    %952 = arith.select %950, %946, %951 : vector<8x32xi1>, vector<8x32xf32>
    %953 = arith.truncf %946 : vector<8x32xf32> to vector<8x32xbf16>
    %954 = vector.shape_cast %948 : vector<8x1xi1> to vector<8x1xi1>
    %955 = vector.broadcast %954 : vector<8x1xi1> to vector<8x32xi1>
    %956 = arith.select %955, %953, %835 : vector<8x32xi1>, vector<8x32xbf16>
    %957 = vector.shape_cast %948 : vector<8x1xi1> to vector<8x1xi1>
    %958 = vector.broadcast %957 : vector<8x1xi1> to vector<8x32xi1>
    %959 = arith.select %958, %944, %838 : vector<8x32xi1>, vector<8x32xf32>
    %960 = vector.broadcast %9 : vector<1x32xf32> to vector<8x32xf32>
    %961 = arith.mulf %914, %960 : vector<8x32xf32>
    %cst_204 = arith.constant dense<0.000000e+00> : vector<8xf32>
    %962 = vector.multi_reduction <add>, %961, %cst_204 [1] : vector<8x32xf32> to vector<8xf32>
    %963 = vector.shape_cast %962 : vector<8xf32> to vector<8x1xf32>
    %964 = vector.broadcast %10 : vector<1x32xf32> to vector<8x32xf32>
    %965 = arith.mulf %952, %964 : vector<8x32xf32>
    %cst_205 = arith.constant dense<0.000000e+00> : vector<8xf32>
    %966 = vector.multi_reduction <add>, %965, %cst_205 [1] : vector<8x32xf32> to vector<8xf32>
    %967 = vector.shape_cast %966 : vector<8xf32> to vector<8x1xf32>
    %968 = vector.broadcast %c7_i32_183 : i32 to vector<8x8xi32>
    %969 = arith.cmpi eq, %12, %968 : vector<8x8xi32>
    %970 = vector.broadcast %cst_17 : f32 to vector<8x1xf32>
    %971 = arith.select %910, %963, %970 : vector<8x1xi1>, vector<8x1xf32>
    %cst_206 = arith.constant 0.000000e+00 : f32
    %972 = vector.shape_cast %971 : vector<8x1xf32> to vector<8x1xf32>
    %973 = vector.broadcast %972 : vector<8x1xf32> to vector<8x8xf32>
    %974 = vector.broadcast %cst_206 : f32 to vector<8x8xf32>
    %975 = arith.select %969, %973, %974 : vector<8x8xi1>, vector<8x8xf32>
    %976 = arith.addf %862, %975 : vector<8x8xf32>
    %977 = vector.broadcast %863 : i32 to vector<8x8xi32>
    %978 = arith.cmpi eq, %12, %977 : vector<8x8xi32>
    %cst_207 = arith.constant 0.000000e+00 : f32
    %979 = vector.shape_cast %967 : vector<8x1xf32> to vector<8x1xf32>
    %980 = vector.broadcast %979 : vector<8x1xf32> to vector<8x8xf32>
    %981 = vector.broadcast %cst_207 : f32 to vector<8x8xf32>
    %982 = arith.select %978, %980, %981 : vector<8x8xi1>, vector<8x8xf32>
    %983 = arith.addf %976, %982 : vector<8x8xf32>
    %c8_i32_208 = arith.constant 8 : i32
    %984 = vector.broadcast %11 : vector<1x1xf32> to vector<8x8xf32>
    %985 = arith.addf %983, %984 : vector<8x8xf32>
    %cst_209 = arith.constant 0.000000e+00 : f32
    %986 = vector.broadcast %cst_209 : f32 to vector<8x8xf32>
    %987 = arith.cmpf oge, %985, %986 : vector<8x8xf32>
    %988 = arith.extui %987 : vector<8x8xi1> to vector<8x8xi32>
    %989 = arith.sitofp %988 : vector<8x8xi32> to vector<8x8xf32>
    %c0_210 = arith.constant 0 : index
    %c0_211 = arith.constant 0 : index
    %990 = vector.load %arg7[%c0_210, %c0_211] : memref<8x8xf32, #tpu.memory_space<vmem>>, vector<8x8xf32>
    tpu.vector_store %arg7[%c0_210, %c0_211], %989 {strides = array<i32>} : memref<8x8xf32, #tpu.memory_space<vmem>>, vector<8x8xf32>,
    return
  }
  func.func @transform_0(%arg0: i32) -> (i32, i32, i32) {
    %c0_i32 = arith.constant 0 : i32
    %c0_i32_0 = arith.constant 0 : i32
    %c0_i32_1 = arith.constant 0 : i32
    return %arg0, %c0_i32, %c0_i32_0 : i32, i32, i32
  }
  func.func @transform_1(%arg0: i32) -> (i32, i32, i32) {
    %c0_i32 = arith.constant 0 : i32
    %c0_i32_0 = arith.constant 0 : i32
    %c0_i32_1 = arith.constant 0 : i32
    return %arg0, %c0_i32, %c0_i32_0 : i32, i32, i32
  }
  func.func @transform_2(%arg0: i32) -> (i32, i32) {
    %c0_i32 = arith.constant 0 : i32
    %c0_i32_0 = arith.constant 0 : i32
    %c0_i32_1 = arith.constant 0 : i32
    return %c0_i32, %c0_i32_0 : i32, i32
  }
  func.func @transform_3(%arg0: i32) -> (i32, i32) {
    %c0_i32 = arith.constant 0 : i32
    %c0_i32_0 = arith.constant 0 : i32
    %c0_i32_1 = arith.constant 0 : i32
    return %c0_i32, %c0_i32_0 : i32, i32
  }
  func.func @transform_4(%arg0: i32) -> (i32, i32) {
    %c0_i32 = arith.constant 0 : i32
    %c0_i32_0 = arith.constant 0 : i32
    %c0_i32_1 = arith.constant 0 : i32
    return %c0_i32, %c0_i32_0 : i32, i32
  }
  func.func @transform_5(%arg0: i32) -> (i32, i32) {
    %c0_i32 = arith.constant 0 : i32
    %c0_i32_0 = arith.constant 0 : i32
    %c0_i32_1 = arith.constant 0 : i32
    return %c0_i32, %c0_i32_0 : i32, i32
  }
  func.func @transform_6(%arg0: i32) -> (i32, i32) {
    %c0_i32 = arith.constant 0 : i32
    %c0_i32_0 = arith.constant 0 : i32
    return %arg0, %c0_i32 : i32, i32
  }
}

</mosaic_0001>

<llo_original>
// kernel: generator_ib_forward.1
$region0: #{generator_ib_forward.1}
  #allocation0 [shape = 'u32[]', space=smem, size = 0x4, offset = 0x4, fixed_abs, tag = 'smem constant byte address 0x4 - core index']
  #allocation1 [shape = 'u32[144,128]{1,0:T(1,128)}', space=vmem, size = 0x12000, scoped, tag = 'internal scratch']
  #allocation2 [shape = 'f32[64,256]{1,0:T(8,128)}', space=vmem, size = 0x10000, scoped, tag = 'scratch operand']
  %s0 = inlined_call_operand.vmem [shape: bf16[2,64,32], index: 0, kind: input, shape index: {}]
  %s1 = inlined_call_operand.vmem [shape: f32[2,64,1], index: 1, kind: input, shape index: {}]
  %s2 = inlined_call_operand.vmem [shape: bf16[32,256], index: 2, kind: input, shape index: {}]
  %s3 = inlined_call_operand.vmem [shape: f32[1,256], index: 3, kind: input, shape index: {}]
  %s4 = inlined_call_operand.vmem [shape: bf16[64,256], index: 4, kind: input, shape index: {}]
  %s5 = inlined_call_operand.vmem [shape: f32[3,32], index: 5, kind: input, shape index: {}]
  %s6 = inlined_call_operand.vmem [shape: f32[16,8], index: 6, kind: output, shape index: {}]
  %s7 = sld [smem:[#allocation0]]
  $region57: #{generator_ib_forward.1} parent=0
    _
  %s9 = ssub.s32 1, %s7
  %s10 = scalar_select 0, %s9, %s7
  loop: start=0, step=1, limit=4
  $region2: #{generator_ib_forward.1} parent=0 // loop_pre_header
    _
  $region3: #{generator_ib_forward.1} parent=0 // loop_header
    %s12 = sphi 0, %s16
    %p13 = scmp.ge.s32.totalorder %s12, 4
    %s22 = sphi 0, %s24
    %s25 = sphi 0, %s22
    %s26 = sphi 0, %s25
    %s42 = sphi 0, %s26
    %s48 = sphi 0, %s50
    %s51 = sphi 0, %s48
    %s52 = sphi 0, %s51
    %s68 = sphi 0, %s52
    %s72 = sphi 0, %s72
    %s74 = sphi 0, %s72
    %s75 = sphi 0, %s74
    %s89 = sphi 0, %s75
    %s93 = sphi 0, %s93
    %s95 = sphi 0, %s93
    %s96 = sphi 0, %s95
    %s110 = sphi 0, %s96
    %s114 = sphi 0, %s114
    %s116 = sphi 0, %s114
    %s117 = sphi 0, %s116
    %s131 = sphi 0, %s117
    %s135 = sphi 0, %s135
    %s137 = sphi 0, %s135
    %s138 = sphi 0, %s137
    %s152 = sphi 0, %s138
    %s158 = sphi 0, %s160
    %s161 = sphi 0, %s158
    %s162 = sphi 0, %s161
    %s178 = sphi 0, %s162
  $region4: #{generator_ib_forward.1} parent=0 // loop_header_branch
    %15 = sbr.rel (%p13) target = $region8
  $region5: #{generator_ib_forward.1} parent=0 // loop_body
    %s17 = ssub.s32 %s12, 1
    %s18 = ssub.s32 %s12, 2
    %s19 = sadd.s32 %s12, 1
    %s20 = ssub.s32 %s12, %s19
    %p21 = scmp.eq.s32.totalorder %s20, 0
    %s23 = sadd.s32 %s22, 1
    %s24 = scalar_select %p21, %s22, %s23
    %p27 = pneg %p21
    %p28 = scmp.eq.s32.totalorder %s12, 1
    %p29 = por %p27, %p28
    %p30 = scmp.ne.s32.totalorder %s22, %s25
    %p31 = scmp.eq.s32.totalorder %s12, 0
    %p32 = por %p30, %p31
    %p33 = scmp.ne.s32.totalorder %s22, %s25
    %p34 = scmp.eq.s32.totalorder %s17, 1
    %p35 = por %p33, %p34
    %p36 = scmp.ne.s32.totalorder %s25, %s26
    %p37 = scmp.eq.s32.totalorder %s17, 0
    %p38 = por %p36, %p37
    %p39 = scmp.ne.s32.totalorder %s25, %s26
    %p40 = scmp.eq.s32.totalorder %s18, 1
    %p41 = por %p39, %p40
    %p43 = scmp.ne.s32.totalorder %s26, %s42
    %p44 = scmp.eq.s32.totalorder %s18, 0
    %p45 = por %p43, %p44
    %s46 = ssub.s32 %s12, %s19
    %p47 = scmp.eq.s32.totalorder %s46, 0
    %s49 = sadd.s32 %s48, 1
    %s50 = scalar_select %p47, %s48, %s49
    %p53 = pneg %p47
    %p54 = scmp.eq.s32.totalorder %s12, 1
    %p55 = por %p53, %p54
    %p56 = scmp.ne.s32.totalorder %s48, %s51
    %p57 = scmp.eq.s32.totalorder %s12, 0
    %p58 = por %p56, %p57
    %p59 = scmp.ne.s32.totalorder %s48, %s51
    %p60 = scmp.eq.s32.totalorder %s17, 1
    %p61 = por %p59, %p60
    %p62 = scmp.ne.s32.totalorder %s51, %s52
    %p63 = scmp.eq.s32.totalorder %s17, 0
    %p64 = por %p62, %p63
    %p65 = scmp.ne.s32.totalorder %s51, %s52
    %p66 = scmp.eq.s32.totalorder %s18, 1
    %p67 = por %p65, %p66
    %p69 = scmp.ne.s32.totalorder %s52, %s68
    %p70 = scmp.eq.s32.totalorder %s18, 0
    %p71 = por %p69, %p70
    %s73 = sadd.s32 %s72, 1
    %p76 = scmp.eq.s32.totalorder %s12, 1
    %p77 = scmp.ne.s32.totalorder %s72, %s74
    %p78 = scmp.eq.s32.totalorder %s12, 0
    %p79 = por %p77, %p78
    %p80 = scmp.ne.s32.totalorder %s72, %s74
    %p81 = scmp.eq.s32.totalorder %s17, 1
    %p82 = por %p80, %p81
    %p83 = scmp.ne.s32.totalorder %s74, %s75
    %p84 = scmp.eq.s32.totalorder %s17, 0
    %p85 = por %p83, %p84
    %p86 = scmp.ne.s32.totalorder %s74, %s75
    %p87 = scmp.eq.s32.totalorder %s18, 1
    %p88 = por %p86, %p87
    %p90 = scmp.ne.s32.totalorder %s75, %s89
    %p91 = scmp.eq.s32.totalorder %s18, 0
    %p92 = por %p90, %p91
    %s94 = sadd.s32 %s93, 1
    %p97 = scmp.eq.s32.totalorder %s12, 1
    %p98 = scmp.ne.s32.totalorder %s93, %s95
    %p99 = scmp.eq.s32.totalorder %s12, 0
    %p100 = por %p98, %p99
    %p101 = scmp.ne.s32.totalorder %s93, %s95
    %p102 = scmp.eq.s32.totalorder %s17, 1
    %p103 = por %p101, %p102
    %p104 = scmp.ne.s32.totalorder %s95, %s96
    %p105 = scmp.eq.s32.totalorder %s17, 0
    %p106 = por %p104, %p105
    %p107 = scmp.ne.s32.totalorder %s95, %s96
    %p108 = scmp.eq.s32.totalorder %s18, 1
    %p109 = por %p107, %p108
    %p111 = scmp.ne.s32.totalorder %s96, %s110
    %p112 = scmp.eq.s32.totalorder %s18, 0
    %p113 = por %p111, %p112
    %s115 = sadd.s32 %s114, 1
    %p118 = scmp.eq.s32.totalorder %s12, 1
    %p119 = scmp.ne.s32.totalorder %s114, %s116
    %p120 = scmp.eq.s32.totalorder %s12, 0
    %p121 = por %p119, %p120
    %p122 = scmp.ne.s32.totalorder %s114, %s116
    %p123 = scmp.eq.s32.totalorder %s17, 1
    %p124 = por %p122, %p123
    %p125 = scmp.ne.s32.totalorder %s116, %s117
    %p126 = scmp.eq.s32.totalorder %s17, 0
    %p127 = por %p125, %p126
    %p128 = scmp.ne.s32.totalorder %s116, %s117
    %p129 = scmp.eq.s32.totalorder %s18, 1
    %p130 = por %p128, %p129
    %p132 = scmp.ne.s32.totalorder %s117, %s131
    %p133 = scmp.eq.s32.totalorder %s18, 0
    %p134 = por %p132, %p133
    %s136 = sadd.s32 %s135, 1
    %p139 = scmp.eq.s32.totalorder %s12, 1
    %p140 = scmp.ne.s32.totalorder %s135, %s137
    %p141 = scmp.eq.s32.totalorder %s12, 0
    %p142 = por %p140, %p141
    %p143 = scmp.ne.s32.totalorder %s135, %s137
    %p144 = scmp.eq.s32.totalorder %s17, 1
    %p145 = por %p143, %p144
    %p146 = scmp.ne.s32.totalorder %s137, %s138
    %p147 = scmp.eq.s32.totalorder %s17, 0
    %p148 = por %p146, %p147
    %p149 = scmp.ne.s32.totalorder %s137, %s138
    %p150 = scmp.eq.s32.totalorder %s18, 1
    %p151 = por %p149, %p150
    %p153 = scmp.ne.s32.totalorder %s138, %s152
    %p154 = scmp.eq.s32.totalorder %s18, 0
    %p155 = por %p153, %p154
    %s156 = ssub.s32 %s12, %s19
    %p157 = scmp.eq.s32.totalorder %s156, 0
    %s159 = sadd.s32 %s158, 1
    %s160 = scalar_select %p157, %s158, %s159
    %p163 = pneg %p157
    %p164 = scmp.eq.s32.totalorder %s12, 1
    %p165 = por %p163, %p164
    %p166 = scmp.ne.s32.totalorder %s158, %s161
    %p167 = scmp.eq.s32.totalorder %s12, 0
    %p168 = por %p166, %p167
    %p169 = scmp.ne.s32.totalorder %s158, %s161
    %p170 = scmp.eq.s32.totalorder %s17, 1
    %p171 = por %p169, %p170
    %p172 = scmp.ne.s32.totalorder %s161, %s162
    %p173 = scmp.eq.s32.totalorder %s17, 0
    %p174 = por %p172, %p173
    %p175 = scmp.ne.s32.totalorder %s161, %s162
    %p176 = scmp.eq.s32.totalorder %s18, 1
    %p177 = por %p175, %p176
    %p179 = scmp.ne.s32.totalorder %s162, %s178
    %p180 = scmp.eq.s32.totalorder %s18, 0
    %p181 = por %p179, %p180
    %p182 = scmp.le.s32.totalorder 1, %s12
    %p183 = scmp.lt.s32.totalorder %s12, 3
    %p184 = pnand %p182, %p183
    %p185 = pneg %p184
    // Predicated region
    $region9: #{generator_ib_forward.1} parent=5 // pred_check
      _
    $region10: #{generator_ib_forward.1} parent=5 // pred_check_branch
      %187 = sbr.rel (%p184) target = $region12
    $region11: #{generator_ib_forward.1} parent=5 // pred_region
      %s188 = ssub.s32 %s12, 1
      // Predicated region
      $region13: #{generator_ib_forward.1} parent=11 // pred_check
        %p189 = pneg %p85
      $region14: #{generator_ib_forward.1} parent=11 // pred_check_branch
        %191 = sbr.rel (%p189) target = $region16
      $region15: #{generator_ib_forward.1} parent=11 // pred_region
        _
      $region16: #{generator_ib_forward.1} parent=11 // pred_fallthru
        _
      // Predicated region
      $region17: #{generator_ib_forward.1} parent=11 // pred_check
        %p192 = pneg %p106
      $region18: #{generator_ib_forward.1} parent=11 // pred_check_branch
        %194 = sbr.rel (%p192) target = $region20
      $region19: #{generator_ib_forward.1} parent=11 // pred_region
        _
      $region20: #{generator_ib_forward.1} parent=11 // pred_fallthru
        _
      // Predicated region
      $region21: #{generator_ib_forward.1} parent=11 // pred_check
        %p195 = pneg %p127
      $region22: #{generator_ib_forward.1} parent=11 // pred_check_branch
        %197 = sbr.rel (%p195) target = $region24
      $region23: #{generator_ib_forward.1} parent=11 // pred_region
        _
      $region24: #{generator_ib_forward.1} parent=11 // pred_fallthru
        _
      // Predicated region
      $region25: #{generator_ib_forward.1} parent=11 // pred_check
        %p198 = pneg %p148
      $region26: #{generator_ib_forward.1} parent=11 // pred_check_branch
        %200 = sbr.rel (%p198) target = $region28
      $region27: #{generator_ib_forward.1} parent=11 // pred_region
        _
      $region28: #{generator_ib_forward.1} parent=11 // pred_fallthru
        _
    $region12: #{generator_ib_forward.1} parent=5 // pred_fallthru
      _
    %p201 = scmp.lt.s32.totalorder %s12, 2
    // Predicated region
    $region29: #{generator_ib_forward.1} parent=5 // pred_check
      %p202 = pneg %p201
    $region30: #{generator_ib_forward.1} parent=5 // pred_check_branch
      %204 = sbr.rel (%p202) target = $region32
    $region31: #{generator_ib_forward.1} parent=5 // pred_region
      // Predicated region
      $region33: #{generator_ib_forward.1} parent=31 // pred_check
        %p205 = pneg %p32
      $region34: #{generator_ib_forward.1} parent=31 // pred_check_branch
        %207 = sbr.rel (%p205) target = $region36
      $region35: #{generator_ib_forward.1} parent=31 // pred_region
        %p208 = scmp.lt.s32.totalorder %s12, 1
        %s209 = scalar_select %p208, %s12, 1
        %s210 = smul.addr %s209, 8
        %s211 = smul.addr %s210, 4
        %s212 = scalar_lea.vmem %s0, %s211
      $region36: #{generator_ib_forward.1} parent=31 // pred_fallthru
        _
      // Predicated region
      $region37: #{generator_ib_forward.1} parent=31 // pred_check
        %p213 = pneg %p58
      $region38: #{generator_ib_forward.1} parent=31 // pred_check_branch
        %215 = sbr.rel (%p213) target = $region40
      $region39: #{generator_ib_forward.1} parent=31 // pred_region
        %p216 = scmp.lt.s32.totalorder %s12, 1
        %s217 = scalar_select %p216, %s12, 1
        %s218 = smul.addr %s217, 8
        %s219 = smul.addr %s218, 8
        %s220 = scalar_lea.vmem %s1, %s219
      $region40: #{generator_ib_forward.1} parent=31 // pred_fallthru
        _
    $region32: #{generator_ib_forward.1} parent=5 // pred_fallthru
      _
    %p221 = scmp.le.s32.totalorder 1, %s12
    %p222 = scmp.lt.s32.totalorder %s12, 3
    %p223 = pnand %p221, %p222
    %p224 = pneg %p223
    // Predicated region
    $region41: #{generator_ib_forward.1} parent=5 // pred_check
      _
    $region42: #{generator_ib_forward.1} parent=5 // pred_check_branch
      %226 = sbr.rel (%p223) target = $region44
    $region43: #{generator_ib_forward.1} parent=5 // pred_region
      %s227 = ssub.s32 %s12, 1
      %p228 = scmp.lt.s32.totalorder %s17, 1
      %s229 = scalar_select %p228, %s17, 1
      %s230 = smul.addr %s229, 8
      %s231 = smul.addr %s230, 4
      %s232 = scalar_lea.vmem %s0, %s231
      %p233 = pneg %p38
      %p234 = pneg %p35
      %p235 = scmp.lt.s32.totalorder %s17, 1
      %s236 = scalar_select %p235, %s17, 1
      %s237 = smul.addr %s236, 8
      %s238 = smul.addr %s237, 8
      %s239 = scalar_lea.vmem %s1, %s238
      %p240 = pneg %p64
      %p241 = pneg %p61
      %p242 = pneg %p85
      %p243 = pneg %p82
      %p244 = pneg %p106
      %p245 = pneg %p103
      %p246 = pneg %p127
      %p247 = pneg %p124
      %p248 = pneg %p148
      %p249 = pneg %p145
      %p250 = pneg %p174
      %p251 = pneg %p171
      %p252 = scmp.lt.s32.totalorder %s17, 1
      %s253 = scalar_select %p252, %s17, 1
      %s254 = smul.addr %s253, 8
      %s255 = scalar_lea.vmem %s6, %s254
      %p256 = scmp.lt.s32.totalorder %s17, 1
      %s257 = scalar_select %p256, %s17, 1
      %s258 = smul.addr %s257, 8
      %s259 = smul.addr %s258, 4
      %s260 = scalar_lea.vmem %s0, %s259
      %p261 = scmp.lt.s32.totalorder %s17, 1
      %s262 = scalar_select %p261, %s17, 1
      %s263 = smul.addr %s262, 8
      %s264 = smul.addr %s263, 8
      %s265 = scalar_lea.vmem %s1, %s264
      %p266 = scmp.lt.s32.totalorder %s17, 1
      %s267 = scalar_select %p266, %s17, 1
      %s268 = smul.addr %s267, 8
      %s269 = scalar_lea.vmem %s6, %s268
      %v271 = vld [vmem:[%s260] sm:$0xf]
      %v272 = vld [vmem:[%s260 + $0x4] sm:$0xf]
      %v273 = vld [vmem:[%s260 + $0x8] sm:$0xf]
      %v274 = vld [vmem:[%s260 + $0xc] sm:$0xf]
      %v275 = vld [vmem:[%s260 + $0x10] sm:$0xf]
      %v276 = vld [vmem:[%s260 + $0x14] sm:$0xf]
      %v277 = vld [vmem:[%s260 + $0x18] sm:$0xf]
      %v278 = vld [vmem:[%s260 + $0x1c] sm:$0xf]
      %v279 = vld [vmem:[%s2] sm:$0xff]
      %v280 = vld [vmem:[%s2 + $0x8] sm:$0xff]
      %v281 = vld [vmem:[%s2 + $0x10] sm:$0xff]
      %v282 = vld [vmem:[%s2 + $0x18] sm:$0xff]
      %v283 = vld [vmem:[%s3] sm:$0x3]
      %v285 = vlaneseq
      %v286 = vshrl.u32 %v285, 7
      %v287 = vsub.s32 0, %v286
      %v288 = vrot.slane %v283, %v287
      %v289 = vlaneseq
      %v290 = vshrl.u32 %v289, 7
      %v291 = vsub.s32 1, %v290
      %v292 = vrot.slane %v283, %v291
      %v303 = vunpack.c.l.b16 %v271
      %v304 = vunpack.c.l.b16 %v272
      %v305 = vunpack.c.l.b16 %v273
      %v306 = vunpack.c.l.b16 %v274
      %v307 = vunpack.c.l.b16 %v275
      %v308 = vunpack.c.l.b16 %v276
      %v309 = vunpack.c.l.b16 %v277
      %v310 = vunpack.c.l.b16 %v278
      %v311 = vpack.c.b16 %v304, %v303
      %v312 = vpack.c.b16 %v306, %v305
      %v313 = vpack.c.b16 %v308, %v307
      %v314 = vpack.c.b16 %v310, %v309
      %v319 = vunpack.c.l.b16 %v279
      %v320 = vunpack.c.h.b16 %v279
      %v321 = vunpack.c.l.b16 %v280
      %v322 = vunpack.c.h.b16 %v280
      %v323 = vunpack.c.l.b16 %v281
      %v324 = vunpack.c.h.b16 %v281
      %v325 = vunpack.c.l.b16 %v282
      %v326 = vunpack.c.h.b16 %v282
      %v327 = vpack.c.b16 %v321, %v319
      %v328 = vpack.c.b16 %v322, %v320
      %v329 = vpack.c.b16 %v325, %v323
      %v330 = vpack.c.b16 %v326, %v324
      %vm335 = vcmask 261120
      %v337 = vsel %vm335, %v311, 0
      %v340 = vsel %vm335, %v312, 0
      %v343 = vsel %vm335, %v313, 0
      %v346 = vsel %vm335, %v314, 0
      %348 = vmatprep.subr.bf16.mxu0 0
      %349 = vmatpush1.bf16.msra.mxu0 0
      %350 = vmatprep.subr.bf16.mxu0 0
      %351 = vmatpush1.bf16.msra.mxu0 0
      %352 = vmatprep.subr.bf16.mxu0 0
      %353 = vmatpush1.bf16.msra.mxu0 0
      %354 = vmatprep.subr.bf16.mxu0 0
      %355 = vmatpush1.bf16.msra.mxu0 0
      %356 = vmatprep.subr.bf16.mxu0 0
      %357 = vmatpush1.bf16.msra.mxu0 0
      %358 = vmatprep.subr.bf16.mxu0 0
      %359 = vmatpush1.bf16.msra.mxu0 0
      %360 = vmatprep.subr.bf16.mxu0 %v330
      %361 = vmatpush1.bf16.msra.mxu0 %v329
      %362 = vmatprep.subr.bf16.mxu0 %v328
      %363 = vmatpush1.bf16.msra.mxu0 %v327
      %364 = vmatprep.subr.bf16.mxu0 0
      %365 = vmatpush2.bf16.msra.mxu0 0
      %366 = vmatprep.subr.bf16.mxu0 0
      %367 = vmatpush2.bf16.msra.mxu0 0
      %368 = vmatprep.subr.bf16.mxu0 0
      %369 = vmatpush2.bf16.msra.mxu0 0
      %370 = vmatprep.subr.bf16.mxu0 0
      %371 = vmatpush2.bf16.msra.mxu0 0
      %372 = vmatprep.subr.bf16.mxu0 0
      %373 = vmatpush2.bf16.msra.mxu0 0
      %374 = vmatprep.subr.bf16.mxu0 0
      %375 = vmatpush2.bf16.msra.mxu0 0
      %376 = vmatprep.subr.bf16.mxu0 0
      %377 = vmatpush2.bf16.msra.mxu0 0
      %378 = vmatprep.subr.bf16.mxu0 0
      %379 = vmatpush2.bf16.msra.mxu0 0
      %380 = vmatprep.mubr.bf16.mxu0 0
      %381 = vmatmul.mubr.bf16.gmra.mxu0 %v337
      %v382 = vpop.f32.mrf.mxu0
      %v383 = vadd.f32 %v288, %v382
      %v384 = vpop.f32.mrf.mxu0
      %v385 = vadd.f32 %v292, %v384
      %v386 = vpop.f32.mrf.mxu0
      %v387 = vadd.f32 %v288, %v386
      %v388 = vpop.f32.mrf.mxu0
      %v389 = vadd.f32 %v292, %v388
      %390 = vmatprep.mubr.bf16.mxu0 0
      %391 = vmatmul.mubr.bf16.gmra.mxu0 %v340
      %v392 = vpop.f32.mrf.mxu0
      %v393 = vadd.f32 %v288, %v392
      %v394 = vpop.f32.mrf.mxu0
      %v395 = vadd.f32 %v292, %v394
      %v396 = vpop.f32.mrf.mxu0
      %v397 = vadd.f32 %v288, %v396
      %v398 = vpop.f32.mrf.mxu0
      %v399 = vadd.f32 %v292, %v398
      %400 = vmatprep.mubr.bf16.mxu0 0
      %401 = vmatmul.mubr.bf16.gmra.mxu0 %v343
      %v402 = vpop.f32.mrf.mxu0
      %v403 = vadd.f32 %v288, %v402
      %v404 = vpop.f32.mrf.mxu0
      %v405 = vadd.f32 %v292, %v404
      %v406 = vpop.f32.mrf.mxu0
      %v407 = vadd.f32 %v288, %v406
      %v408 = vpop.f32.mrf.mxu0
      %v409 = vadd.f32 %v292, %v408
      %410 = vmatprep.mubr.bf16.mxu0 0
      %411 = vmatmul.mubr.bf16.gmra.mxu0 %v346
      %v412 = vpop.f32.mrf.mxu0
      %v413 = vadd.f32 %v288, %v412
      %v414 = vpop.f32.mrf.mxu0
      %v415 = vadd.f32 %v292, %v414
      %v416 = vpop.f32.mrf.mxu0
      %v417 = vadd.f32 %v288, %v416
      %v418 = vpop.f32.mrf.mxu0
      %v419 = vadd.f32 %v292, %v418
      %420 = vdwg.mxu0
      %421 = vst [vmem:[#allocation2] sm:$0xff] %v383
      %422 = vst [vmem:[#allocation2 + $0x8] sm:$0xff] %v385
      %423 = vst [vmem:[#allocation2 + $0x10] sm:$0xff] %v387
      %424 = vst [vmem:[#allocation2 + $0x18] sm:$0xff] %v389
      %425 = vst [vmem:[#allocation2 + $0x20] sm:$0xff] %v393
      %426 = vst [vmem:[#allocation2 + $0x28] sm:$0xff] %v395
      %427 = vst [vmem:[#allocation2 + $0x30] sm:$0xff] %v397
      %428 = vst [vmem:[#allocation2 + $0x38] sm:$0xff] %v399
      %429 = vst [vmem:[#allocation2 + $0x40] sm:$0xff] %v403
      %430 = vst [vmem:[#allocation2 + $0x48] sm:$0xff] %v405
      %431 = vst [vmem:[#allocation2 + $0x50] sm:$0xff] %v407
      %432 = vst [vmem:[#allocation2 + $0x58] sm:$0xff] %v409
      %433 = vst [vmem:[#allocation2 + $0x60] sm:$0xff] %v413
      %434 = vst [vmem:[#allocation2 + $0x68] sm:$0xff] %v415
      %435 = vst [vmem:[#allocation2 + $0x70] sm:$0xff] %v417
      %436 = vst [vmem:[#allocation2 + $0x78] sm:$0xff] %v419
      %v437 = vld [vmem:[%s4] sm:$0xff]
      %v438 = vld [vmem:[%s4 + $0x8] sm:$0xff]
      %v439 = vld [vmem:[%s4 + $0x10] sm:$0xff]
      %v440 = vld [vmem:[%s4 + $0x18] sm:$0xff]
      %v441 = vld [vmem:[%s4 + $0x20] sm:$0xff]
      %v442 = vld [vmem:[%s4 + $0x28] sm:$0xff]
      %v443 = vld [vmem:[%s4 + $0x30] sm:$0xff]
      %v444 = vld [vmem:[%s4 + $0x38] sm:$0xff]
      %v445 = vld [vmem:[%s5] sm:$0x1]
      %v446 = vld [vmem:[%s5 + $0x1] sm:$0x1]
      %v447 = vld [vmem:[%s5 + $0x2] sm:$0x1]
      %v448 = vlaneseq
      %v449 = vand.u32 %v448, 127
      %v459 = vunpack.c.l.b16 %v437
      %v460 = vunpack.c.h.b16 %v437
      %v461 = vunpack.c.l.b16 %v438
      %v462 = vunpack.c.h.b16 %v438
      %v463 = vunpack.c.l.b16 %v439
      %v464 = vunpack.c.h.b16 %v439
      %v465 = vunpack.c.l.b16 %v440
      %v466 = vunpack.c.h.b16 %v440
      %v467 = vunpack.c.l.b16 %v441
      %v468 = vunpack.c.h.b16 %v441
      %v469 = vunpack.c.l.b16 %v442
      %v470 = vunpack.c.h.b16 %v442
      %v471 = vunpack.c.l.b16 %v443
      %v472 = vunpack.c.h.b16 %v443
      %v473 = vunpack.c.l.b16 %v444
      %v474 = vunpack.c.h.b16 %v444
      %v475 = vpack.c.b16 %v461, %v459
      %v476 = vpack.c.b16 %v462, %v460
      %v477 = vpack.c.b16 %v465, %v463
      %v478 = vpack.c.b16 %v466, %v464
      %v479 = vpack.c.b16 %v469, %v467
      %v480 = vpack.c.b16 %v470, %v468
      %v481 = vpack.c.b16 %v473, %v471
      %v482 = vpack.c.b16 %v474, %v472
      %vm491 = vcmask 523264
      %v492 = vsel %vm491, 0, 0
      %494 = vmatprep.subr.bf16.mxu0 0
      %495 = vmatpush1.bf16.msra.mxu0 0
      %496 = vmatprep.subr.bf16.mxu0 0
      %497 = vmatpush1.bf16.msra.mxu0 0
      %498 = vmatprep.subr.bf16.mxu0 0
      %499 = vmatpush1.bf16.msra.mxu0 0
      %500 = vmatprep.subr.bf16.mxu0 0
      %501 = vmatpush1.bf16.msra.mxu0 0
      %502 = vmatprep.subr.bf16.mxu0 %v482
      %503 = vmatpush1.bf16.msra.mxu0 %v481
      %504 = vmatprep.subr.bf16.mxu0 %v480
      %505 = vmatpush1.bf16.msra.mxu0 %v479
      %506 = vmatprep.subr.bf16.mxu0 %v478
      %507 = vmatpush1.bf16.msra.mxu0 %v477
      %508 = vmatprep.subr.bf16.mxu0 %v476
      %509 = vmatpush1.bf16.msra.mxu0 %v475
      %510 = vmatprep.subr.bf16.mxu0 0
      %511 = vmatpush2.bf16.msra.mxu0 0
      %512 = vmatprep.subr.bf16.mxu0 0
      %513 = vmatpush2.bf16.msra.mxu0 0
      %514 = vmatprep.subr.bf16.mxu0 0
      %515 = vmatpush2.bf16.msra.mxu0 0
      %516 = vmatprep.subr.bf16.mxu0 0
      %517 = vmatpush2.bf16.msra.mxu0 0
      %518 = vmatprep.subr.bf16.mxu0 0
      %519 = vmatpush2.bf16.msra.mxu0 0
      %520 = vmatprep.subr.bf16.mxu0 0
      %521 = vmatpush2.bf16.msra.mxu0 0
      %522 = vmatprep.subr.bf16.mxu0 0
      %523 = vmatpush2.bf16.msra.mxu0 0
      %524 = vmatprep.subr.bf16.mxu0 0
      %525 = vmatpush2.bf16.msra.mxu0 0
      %526 = vmatprep.mubr.bf16.mxu0 0
      %527 = vmatmul.mubr.bf16.gmra.mxu0 %v492
      %v528 = vpop.f32.mrf.mxu0
      %v529 = vadd.f32 0.0, %v528
      %v530 = vpop.f32.mrf.mxu0
      %v531 = vadd.f32 0.0, %v530
      %v532 = vpop.f32.mrf.mxu0
      %v533 = vpop.f32.mrf.mxu0
      %534 = vdwg.mxu0
      %v535 = vld [vmem:[%s265] sm:$0xff]
      %s536 = scalar_lea.vmem %s265, 56
      %v537 = vld [vmem:[%s536] sm:$0xff]
      %s538 = smul.u32 0, 2
      %s539 = smul.addr %s538, 8
      %s540 = scalar_lea.vmem [#allocation2], %s539
      %v541 = vld [vmem:[%s540] sm:$0xff]
      %v542 = vadd.f32 %v541, %v529
      %s543 = smul.u32 7, 2
      %s544 = smul.addr %s543, 8
      %s545 = scalar_lea.vmem [#allocation2], %s544
      %v546 = vld [vmem:[%s545 + $0x8] sm:$0xff]
      %v547 = vadd.f32 %v546, %v531
      %v548 = vxor.u32 %v542, 2147483648
      %v549 = vmul.f32 %v548, 1.442695
      %v550 = vpow.pop %v549
      %v551 = vadd.f32 %v550, 1.0
      %v552 = vrcp.pop %v551
      %v553 = vmul.f32 1.0, %v552
      %v554 = vtanh.pop %v542
      %v555 = vmul.f32 %v553, 0.0
      %557 = vrot.lane.b32.xlu0 %v554, 64
      %v558 = vpop.permute.xlu0 %557
      %v560 = vmul.f32 %v553, %v558
      %562 = vrot.lane.b32.xlu0 %v560, 32
      %v563 = vpop.permute.xlu0 %562
      %v565 = vadd.f32 %v555, %v563
      %v566 = vtanh.pop %v565
      %568 = vrot.lane.b32.xlu0 %v566, 64
      %v569 = vpop.permute.xlu0 %568
      %v571 = vmul.f32 %v553, %v569
      %vm572 = vcmp.gt.f32.partialorder %v535, 0.0
      %v573 = vsel %vm572, 1, 0
      %574 = vset.pattern.permute.xlu0 0
      %575 = vperm.xlu0 %574, %v573
      %v576 = vpop.permute.xlu0 %575
      %vm577 = vcmp.eq.s32.totalorder %v576, 1
      %v578 = vsel %vm577, %v571, 0.0
      %v579 = vpack.c.bf16 %v571, %v571
      %vm580 = vmpackc.low %vm577, %vm577
      %v581 = vsel %vm580, %v579, 0
      %v582 = vsel %vm577, %v565, 0.0
      %v583 = vxor.u32 %v547, 2147483648
      %v584 = vmul.f32 %v583, 1.442695
      %v585 = vpow.pop %v584
      %v586 = vadd.f32 %v585, 1.0
      %v587 = vrcp.pop %v586
      %v588 = vmul.f32 1.0, %v587
      %v589 = vtanh.pop %v547
      %v590 = vmul.f32 %v588, 0.0
      %592 = vrot.lane.b32.xlu0 %v589, 64
      %v593 = vpop.permute.xlu0 %592
      %v595 = vmul.f32 %v588, %v593
      %597 = vrot.lane.b32.xlu0 %v595, 32
      %v598 = vpop.permute.xlu0 %597
      %v600 = vadd.f32 %v590, %v598
      %v601 = vtanh.pop %v600
      %603 = vrot.lane.b32.xlu0 %v601, 64
      %v604 = vpop.permute.xlu0 %603
      %v606 = vmul.f32 %v588, %v604
      %vm607 = vcmp.gt.f32.partialorder %v537, 0.0
      %v608 = vsel %vm607, 1, 0
      %609 = vset.pattern.permute.xlu0 0
      %610 = vperm.xlu0 %609, %v608
      %v611 = vpop.permute.xlu0 %610
      %vm612 = vcmp.eq.s32.totalorder %v611, 1
      %v613 = vsel %vm612, %v606, 0.0
      %v614 = vpack.c.bf16 %v606, %v606
      %vm615 = vmpackc.low %vm612, %vm612
      %v616 = vsel %vm615, %v614, 0
      %v617 = vsel %vm612, %v600, 0.0
      %v618 = vlaneseq
      %v619 = vshrl.u32 %v618, 7
      %v620 = vsub.s32 0, %v619
      %v621 = vrot.slane %v445, %v620
      %623 = vrot.lane.b32.xlu0 %v621, 96
      %v624 = vpop.permute.xlu0 %623
      %v626 = vmul.f32 %v578, %v624
      %628 = vrot.lane.b32.xlu0 %v626, 32
      %v629 = vpop.permute.xlu0 %628
      %v631 = vsel %vm335, %v629, 0.0
      %632 = vadd.xlane.f32.xlu0 %v631
      %v633 = vpop.xlane.xlu0 %632
      %v634 = vlaneseq
      %v635 = vshrl.u32 %v634, 7
      %v636 = vsub.s32 0, %v635
      %v637 = vrot.slane %v446, %v636
      %639 = vrot.lane.b32.xlu0 %v637, 96
      %v640 = vpop.permute.xlu0 %639
      %v642 = vmul.f32 %v613, %v640
      %644 = vrot.lane.b32.xlu0 %v642, 32
      %v645 = vpop.permute.xlu0 %644
      %v647 = vsel %vm335, %v645, 0.0
      %648 = vadd.xlane.f32.xlu0 %v647
      %v649 = vpop.xlane.xlu0 %648
      %vm650 = vcmp.eq.s32.totalorder %v449, 0
      %v651 = vsel %vm572, %v633, -1e+09
      %653 = vset.pattern.permute.xlu0 0
      %654 = vperm.xlu0 %653, %v651
      %v655 = vpop.permute.xlu0 %654
      %v657 = vsel %vm650, %v655, 0.0
      %v658 = vadd.f32 %v657, 0.0
      %vm659 = vcmp.eq.s32.totalorder %v449, 7
      %v660 = vsel %vm659, %v649, 0.0
      %v661 = vadd.f32 %v658, %v660
      %663 = vrot.lane.b32.xlu0 %v581, 32
      %v664 = vpop.permute.xlu0 %663
      %666 = vrot.lane.b32.xlu0 %v616, 64
      %v667 = vpop.permute.xlu0 %666
      %v670 = vsel %vm335, %v664, %v667
      %v671 = vsel %vm491, %v670, 0
      %673 = vmatprep.subr.bf16.mxu0 0
      %674 = vmatpush1.bf16.msra.mxu0 0
      %675 = vmatprep.subr.bf16.mxu0 0
      %676 = vmatpush1.bf16.msra.mxu0 0
      %677 = vmatprep.subr.bf16.mxu0 0
      %678 = vmatpush1.bf16.msra.mxu0 0
      %679 = vmatprep.subr.bf16.mxu0 0
      %680 = vmatpush1.bf16.msra.mxu0 0
      %681 = vmatprep.subr.bf16.mxu0 %v482
      %682 = vmatpush1.bf16.msra.mxu0 %v481
      %683 = vmatprep.subr.bf16.mxu0 %v480
      %684 = vmatpush1.bf16.msra.mxu0 %v479
      %685 = vmatprep.subr.bf16.mxu0 %v478
      %686 = vmatpush1.bf16.msra.mxu0 %v477
      %687 = vmatprep.subr.bf16.mxu0 %v476
      %688 = vmatpush1.bf16.msra.mxu0 %v475
      %689 = vmatprep.subr.bf16.mxu0 0
      %690 = vmatpush2.bf16.msra.mxu0 0
      %691 = vmatprep.subr.bf16.mxu0 0
      %692 = vmatpush2.bf16.msra.mxu0 0
      %693 = vmatprep.subr.bf16.mxu0 0
      %694 = vmatpush2.bf16.msra.mxu0 0
      %695 = vmatprep.subr.bf16.mxu0 0
      %696 = vmatpush2.bf16.msra.mxu0 0
      %697 = vmatprep.subr.bf16.mxu0 0
      %698 = vmatpush2.bf16.msra.mxu0 0
      %699 = vmatprep.subr.bf16.mxu0 0
      %700 = vmatpush2.bf16.msra.mxu0 0
      %701 = vmatprep.subr.bf16.mxu0 0
      %702 = vmatpush2.bf16.msra.mxu0 0
      %703 = vmatprep.subr.bf16.mxu0 0
      %704 = vmatpush2.bf16.msra.mxu0 0
      %705 = vmatprep.mubr.bf16.mxu0 0
      %706 = vmatmul.mubr.bf16.gmra.mxu0 %v671
      %v707 = vpop.f32.mrf.mxu0
      %v708 = vadd.f32 0.0, %v707
      %v709 = vpop.f32.mrf.mxu0
      %v710 = vadd.f32 0.0, %v709
      %v711 = vpop.f32.mrf.mxu0
      %v712 = vpop.f32.mrf.mxu0
      %713 = vdwg.mxu0
      %s714 = scalar_lea.vmem %s265, 8
      %v715 = vld [vmem:[%s714] sm:$0xff]
      %s716 = scalar_lea.vmem %s265, 48
      %v717 = vld [vmem:[%s716] sm:$0xff]
      %s718 = smul.u32 1, 2
      %s719 = smul.addr %s718, 8
      %s720 = scalar_lea.vmem [#allocation2], %s719
      %v721 = vld [vmem:[%s720] sm:$0xff]
      %v722 = vadd.f32 %v721, %v708
      %s723 = smul.u32 6, 2
      %s724 = smul.addr %s723, 8
      %s725 = scalar_lea.vmem [#allocation2], %s724
      %v726 = vld [vmem:[%s725 + $0x8] sm:$0xff]
      %v727 = vadd.f32 %v726, %v710
      %v728 = vxor.u32 %v722, 2147483648
      %v729 = vmul.f32 %v728, 1.442695
      %v730 = vpow.pop %v729
      %v731 = vadd.f32 %v730, 1.0
      %v732 = vrcp.pop %v731
      %v733 = vmul.f32 1.0, %v732
      %v734 = vtanh.pop %v722
      %v735 = vmul.f32 %v733, %v582
      %737 = vrot.lane.b32.xlu0 %v734, 64
      %v738 = vpop.permute.xlu0 %737
      %v740 = vmul.f32 %v733, %v738
      %742 = vrot.lane.b32.xlu0 %v740, 32
      %v743 = vpop.permute.xlu0 %742
      %v745 = vadd.f32 %v735, %v743
      %v746 = vtanh.pop %v745
      %748 = vrot.lane.b32.xlu0 %v746, 64
      %v749 = vpop.permute.xlu0 %748
      %v751 = vmul.f32 %v733, %v749
      %vm752 = vcmp.gt.f32.partialorder %v715, 0.0
      %v753 = vsel %vm752, 1, 0
      %754 = vset.pattern.permute.xlu0 0
      %755 = vperm.xlu0 %754, %v753
      %v756 = vpop.permute.xlu0 %755
      %vm757 = vcmp.eq.s32.totalorder %v756, 1
      %v758 = vsel %vm757, %v751, 0.0
      %v759 = vpack.c.bf16 %v751, %v751
      %vm760 = vmpackc.low %vm757, %vm757
      %v761 = vsel %vm760, %v759, %v581
      %v762 = vsel %vm757, %v745, %v582
      %v763 = vxor.u32 %v727, 2147483648
      %v764 = vmul.f32 %v763, 1.442695
      %v765 = vpow.pop %v764
      %v766 = vadd.f32 %v765, 1.0
      %v767 = vrcp.pop %v766
      %v768 = vmul.f32 1.0, %v767
      %v769 = vtanh.pop %v727
      %v770 = vmul.f32 %v768, %v617
      %772 = vrot.lane.b32.xlu0 %v769, 64
      %v773 = vpop.permute.xlu0 %772
      %v775 = vmul.f32 %v768, %v773
      %777 = vrot.lane.b32.xlu0 %v775, 32
      %v778 = vpop.permute.xlu0 %777
      %v780 = vadd.f32 %v770, %v778
      %v781 = vtanh.pop %v780
      %783 = vrot.lane.b32.xlu0 %v781, 64
      %v784 = vpop.permute.xlu0 %783
      %v786 = vmul.f32 %v768, %v784
      %vm787 = vcmp.gt.f32.partialorder %v717, 0.0
      %v788 = vsel %vm787, 1, 0
      %789 = vset.pattern.permute.xlu0 0
      %790 = vperm.xlu0 %789, %v788
      %v791 = vpop.permute.xlu0 %790
      %vm792 = vcmp.eq.s32.totalorder %v791, 1
      %v793 = vsel %vm792, %v786, 0.0
      %v794 = vpack.c.bf16 %v786, %v786
      %vm795 = vmpackc.low %vm792, %vm792
      %v796 = vsel %vm795, %v794, %v616
      %v797 = vsel %vm792, %v780, %v617
      %v798 = vmul.f32 %v758, %v624
      %800 = vrot.lane.b32.xlu0 %v798, 32
      %v801 = vpop.permute.xlu0 %800
      %v803 = vsel %vm335, %v801, 0.0
      %804 = vadd.xlane.f32.xlu0 %v803
      %v805 = vpop.xlane.xlu0 %804
      %v806 = vmul.f32 %v793, %v640
      %808 = vrot.lane.b32.xlu0 %v806, 32
      %v809 = vpop.permute.xlu0 %808
      %v811 = vsel %vm335, %v809, 0.0
      %812 = vadd.xlane.f32.xlu0 %v811
      %v813 = vpop.xlane.xlu0 %812
      %vm814 = vcmp.eq.s32.totalorder %v449, 1
      %v815 = vsel %vm752, %v805, -1e+09
      %817 = vset.pattern.permute.xlu0 0
      %818 = vperm.xlu0 %817, %v815
      %v819 = vpop.permute.xlu0 %818
      %v821 = vsel %vm814, %v819, 0.0
      %v822 = vadd.f32 %v661, %v821
      %vm823 = vcmp.eq.s32.totalorder %v449, 6
      %v824 = vsel %vm823, %v813, 0.0
      %v825 = vadd.f32 %v822, %v824
      %827 = vrot.lane.b32.xlu0 %v761, 32
      %v828 = vpop.permute.xlu0 %827
      %830 = vrot.lane.b32.xlu0 %v796, 64
      %v831 = vpop.permute.xlu0 %830
      %v834 = vsel %vm335, %v828, %v831
      %v835 = vsel %vm491, %v834, 0
      %837 = vmatprep.subr.bf16.mxu0 0
      %838 = vmatpush1.bf16.msra.mxu0 0
      %839 = vmatprep.subr.bf16.mxu0 0
      %840 = vmatpush1.bf16.msra.mxu0 0
      %841 = vmatprep.subr.bf16.mxu0 0
      %842 = vmatpush1.bf16.msra.mxu0 0
      %843 = vmatprep.subr.bf16.mxu0 0
      %844 = vmatpush1.bf16.msra.mxu0 0
      %845 = vmatprep.subr.bf16.mxu0 %v482
      %846 = vmatpush1.bf16.msra.mxu0 %v481
      %847 = vmatprep.subr.bf16.mxu0 %v480
      %848 = vmatpush1.bf16.msra.mxu0 %v479
      %849 = vmatprep.subr.bf16.mxu0 %v478
      %850 = vmatpush1.bf16.msra.mxu0 %v477
      %851 = vmatprep.subr.bf16.mxu0 %v476
      %852 = vmatpush1.bf16.msra.mxu0 %v475
      %853 = vmatprep.subr.bf16.mxu0 0
      %854 = vmatpush2.bf16.msra.mxu0 0
      %855 = vmatprep.subr.bf16.mxu0 0
      %856 = vmatpush2.bf16.msra.mxu0 0
      %857 = vmatprep.subr.bf16.mxu0 0
      %858 = vmatpush2.bf16.msra.mxu0 0
      %859 = vmatprep.subr.bf16.mxu0 0
      %860 = vmatpush2.bf16.msra.mxu0 0
      %861 = vmatprep.subr.bf16.mxu0 0
      %862 = vmatpush2.bf16.msra.mxu0 0
      %863 = vmatprep.subr.bf16.mxu0 0
      %864 = vmatpush2.bf16.msra.mxu0 0
      %865 = vmatprep.subr.bf16.mxu0 0
      %866 = vmatpush2.bf16.msra.mxu0 0
      %867 = vmatprep.subr.bf16.mxu0 0
      %868 = vmatpush2.bf16.msra.mxu0 0
      %869 = vmatprep.mubr.bf16.mxu0 0
      %870 = vmatmul.mubr.bf16.gmra.mxu0 %v835
      %v871 = vpop.f32.mrf.mxu0
      %v872 = vadd.f32 0.0, %v871
      %v873 = vpop.f32.mrf.mxu0
      %v874 = vadd.f32 0.0, %v873
      %v875 = vpop.f32.mrf.mxu0
      %v876 = vpop.f32.mrf.mxu0
      %877 = vdwg.mxu0
      %s878 = scalar_lea.vmem %s265, 16
      %v879 = vld [vmem:[%s878] sm:$0xff]
      %s880 = scalar_lea.vmem %s265, 40
      %v881 = vld [vmem:[%s880] sm:$0xff]
      %s882 = smul.u32 2, 2
      %s883 = smul.addr %s882, 8
      %s884 = scalar_lea.vmem [#allocation2], %s883
      %v885 = vld [vmem:[%s884] sm:$0xff]
      %v886 = vadd.f32 %v885, %v872
      %s887 = smul.u32 5, 2
      %s888 = smul.addr %s887, 8
      %s889 = scalar_lea.vmem [#allocation2], %s888
      %v890 = vld [vmem:[%s889 + $0x8] sm:$0xff]
      %v891 = vadd.f32 %v890, %v874
      %v892 = vxor.u32 %v886, 2147483648
      %v893 = vmul.f32 %v892, 1.442695
      %v894 = vpow.pop %v893
      %v895 = vadd.f32 %v894, 1.0
      %v896 = vrcp.pop %v895
      %v897 = vmul.f32 1.0, %v896
      %v898 = vtanh.pop %v886
      %v899 = vmul.f32 %v897, %v762
      %901 = vrot.lane.b32.xlu0 %v898, 64
      %v902 = vpop.permute.xlu0 %901
      %v904 = vmul.f32 %v897, %v902
      %906 = vrot.lane.b32.xlu0 %v904, 32
      %v907 = vpop.permute.xlu0 %906
      %v909 = vadd.f32 %v899, %v907
      %v910 = vtanh.pop %v909
      %912 = vrot.lane.b32.xlu0 %v910, 64
      %v913 = vpop.permute.xlu0 %912
      %v915 = vmul.f32 %v897, %v913
      %vm916 = vcmp.gt.f32.partialorder %v879, 0.0
      %v917 = vsel %vm916, 1, 0
      %918 = vset.pattern.permute.xlu0 0
      %919 = vperm.xlu0 %918, %v917
      %v920 = vpop.permute.xlu0 %919
      %vm921 = vcmp.eq.s32.totalorder %v920, 1
      %v922 = vsel %vm921, %v915, 0.0
      %v923 = vpack.c.bf16 %v915, %v915
      %vm924 = vmpackc.low %vm921, %vm921
      %v925 = vsel %vm924, %v923, %v761
      %v926 = vsel %vm921, %v909, %v762
      %v927 = vxor.u32 %v891, 2147483648
      %v928 = vmul.f32 %v927, 1.442695
      %v929 = vpow.pop %v928
      %v930 = vadd.f32 %v929, 1.0
      %v931 = vrcp.pop %v930
      %v932 = vmul.f32 1.0, %v931
      %v933 = vtanh.pop %v891
      %v934 = vmul.f32 %v932, %v797
      %936 = vrot.lane.b32.xlu0 %v933, 64
      %v937 = vpop.permute.xlu0 %936
      %v939 = vmul.f32 %v932, %v937
      %941 = vrot.lane.b32.xlu0 %v939, 32
      %v942 = vpop.permute.xlu0 %941
      %v944 = vadd.f32 %v934, %v942
      %v945 = vtanh.pop %v944
      %947 = vrot.lane.b32.xlu0 %v945, 64
      %v948 = vpop.permute.xlu0 %947
      %v950 = vmul.f32 %v932, %v948
      %vm951 = vcmp.gt.f32.partialorder %v881, 0.0
      %v952 = vsel %vm951, 1, 0
      %953 = vset.pattern.permute.xlu0 0
      %954 = vperm.xlu0 %953, %v952
      %v955 = vpop.permute.xlu0 %954
      %vm956 = vcmp.eq.s32.totalorder %v955, 1
      %v957 = vsel %vm956, %v950, 0.0
      %v958 = vpack.c.bf16 %v950, %v950
      %vm959 = vmpackc.low %vm956, %vm956
      %v960 = vsel %vm959, %v958, %v796
      %v961 = vsel %vm956, %v944, %v797
      %v962 = vmul.f32 %v922, %v624
      %964 = vrot.lane.b32.xlu0 %v962, 32
      %v965 = vpop.permute.xlu0 %964
      %v967 = vsel %vm335, %v965, 0.0
      %968 = vadd.xlane.f32.xlu0 %v967
      %v969 = vpop.xlane.xlu0 %968
      %v970 = vmul.f32 %v957, %v640
      %972 = vrot.lane.b32.xlu0 %v970, 32
      %v973 = vpop.permute.xlu0 %972
      %v975 = vsel %vm335, %v973, 0.0
      %976 = vadd.xlane.f32.xlu0 %v975
      %v977 = vpop.xlane.xlu0 %976
      %vm978 = vcmp.eq.s32.totalorder %v449, 2
      %v979 = vsel %vm916, %v969, -1e+09
      %981 = vset.pattern.permute.xlu0 0
      %982 = vperm.xlu0 %981, %v979
      %v983 = vpop.permute.xlu0 %982
      %v985 = vsel %vm978, %v983, 0.0
      %v986 = vadd.f32 %v825, %v985
      %vm987 = vcmp.eq.s32.totalorder %v449, 5
      %v988 = vsel %vm987, %v977, 0.0
      %v989 = vadd.f32 %v986, %v988
      %991 = vrot.lane.b32.xlu0 %v925, 32
      %v992 = vpop.permute.xlu0 %991
      %994 = vrot.lane.b32.xlu0 %v960, 64
      %v995 = vpop.permute.xlu0 %994
      %v998 = vsel %vm335, %v992, %v995
      %v999 = vsel %vm491, %v998, 0
      %1001 = vmatprep.subr.bf16.mxu0 0
      %1002 = vmatpush1.bf16.msra.mxu0 0
      %1003 = vmatprep.subr.bf16.mxu0 0
      %1004 = vmatpush1.bf16.msra.mxu0 0
      %1005 = vmatprep.subr.bf16.mxu0 0
      %1006 = vmatpush1.bf16.msra.mxu0 0
      %1007 = vmatprep.subr.bf16.mxu0 0
      %1008 = vmatpush1.bf16.msra.mxu0 0
      %1009 = vmatprep.subr.bf16.mxu0 %v482
      %1010 = vmatpush1.bf16.msra.mxu0 %v481
      %1011 = vmatprep.subr.bf16.mxu0 %v480
      %1012 = vmatpush1.bf16.msra.mxu0 %v479
      %1013 = vmatprep.subr.bf16.mxu0 %v478
      %1014 = vmatpush1.bf16.msra.mxu0 %v477
      %1015 = vmatprep.subr.bf16.mxu0 %v476
      %1016 = vmatpush1.bf16.msra.mxu0 %v475
      %1017 = vmatprep.subr.bf16.mxu0 0
      %1018 = vmatpush2.bf16.msra.mxu0 0
      %1019 = vmatprep.subr.bf16.mxu0 0
      %1020 = vmatpush2.bf16.msra.mxu0 0
      %1021 = vmatprep.subr.bf16.mxu0 0
      %1022 = vmatpush2.bf16.msra.mxu0 0
      %1023 = vmatprep.subr.bf16.mxu0 0
      %1024 = vmatpush2.bf16.msra.mxu0 0
      %1025 = vmatprep.subr.bf16.mxu0 0
      %1026 = vmatpush2.bf16.msra.mxu0 0
      %1027 = vmatprep.subr.bf16.mxu0 0
      %1028 = vmatpush2.bf16.msra.mxu0 0
      %1029 = vmatprep.subr.bf16.mxu0 0
      %1030 = vmatpush2.bf16.msra.mxu0 0
      %1031 = vmatprep.subr.bf16.mxu0 0
      %1032 = vmatpush2.bf16.msra.mxu0 0
      %1033 = vmatprep.mubr.bf16.mxu0 0
      %1034 = vmatmul.mubr.bf16.gmra.mxu0 %v999
      %v1035 = vpop.f32.mrf.mxu0
      %v1036 = vadd.f32 0.0, %v1035
      %v1037 = vpop.f32.mrf.mxu0
      %v1038 = vadd.f32 0.0, %v1037
      %v1039 = vpop.f32.mrf.mxu0
      %v1040 = vpop.f32.mrf.mxu0
      %1041 = vdwg.mxu0
      %s1042 = scalar_lea.vmem %s265, 24
      %v1043 = vld [vmem:[%s1042] sm:$0xff]
      %s1044 = scalar_lea.vmem %s265, 32
      %v1045 = vld [vmem:[%s1044] sm:$0xff]
      %s1046 = smul.u32 3, 2
      %s1047 = smul.addr %s1046, 8
      %s1048 = scalar_lea.vmem [#allocation2], %s1047
      %v1049 = vld [vmem:[%s1048] sm:$0xff]
      %v1050 = vadd.f32 %v1049, %v1036
      %s1051 = smul.u32 4, 2
      %s1052 = smul.addr %s1051, 8
      %s1053 = scalar_lea.vmem [#allocation2], %s1052
      %v1054 = vld [vmem:[%s1053 + $0x8] sm:$0xff]
      %v1055 = vadd.f32 %v1054, %v1038
      %v1056 = vxor.u32 %v1050, 2147483648
      %v1057 = vmul.f32 %v1056, 1.442695
      %v1058 = vpow.pop %v1057
      %v1059 = vadd.f32 %v1058, 1.0
      %v1060 = vrcp.pop %v1059
      %v1061 = vmul.f32 1.0, %v1060
      %v1062 = vtanh.pop %v1050
      %v1063 = vmul.f32 %v1061, %v926
      %1065 = vrot.lane.b32.xlu0 %v1062, 64
      %v1066 = vpop.permute.xlu0 %1065
      %v1068 = vmul.f32 %v1061, %v1066
      %1070 = vrot.lane.b32.xlu0 %v1068, 32
      %v1071 = vpop.permute.xlu0 %1070
      %v1073 = vadd.f32 %v1063, %v1071
      %v1074 = vtanh.pop %v1073
      %1076 = vrot.lane.b32.xlu0 %v1074, 64
      %v1077 = vpop.permute.xlu0 %1076
      %v1079 = vmul.f32 %v1061, %v1077
      %vm1080 = vcmp.gt.f32.partialorder %v1043, 0.0
      %v1081 = vsel %vm1080, 1, 0
      %1082 = vset.pattern.permute.xlu0 0
      %1083 = vperm.xlu0 %1082, %v1081
      %v1084 = vpop.permute.xlu0 %1083
      %vm1085 = vcmp.eq.s32.totalorder %v1084, 1
      %v1086 = vsel %vm1085, %v1079, 0.0
      %v1087 = vpack.c.bf16 %v1079, %v1079
      %vm1088 = vmpackc.low %vm1085, %vm1085
      %v1089 = vsel %vm1088, %v1087, %v925
      %v1090 = vsel %vm1085, %v1073, %v926
      %v1091 = vxor.u32 %v1055, 2147483648
      %v1092 = vmul.f32 %v1091, 1.442695
      %v1093 = vpow.pop %v1092
      %v1094 = vadd.f32 %v1093, 1.0
      %v1095 = vrcp.pop %v1094
      %v1096 = vmul.f32 1.0, %v1095
      %v1097 = vtanh.pop %v1055
      %v1098 = vmul.f32 %v1096, %v961
      %1100 = vrot.lane.b32.xlu0 %v1097, 64
      %v1101 = vpop.permute.xlu0 %1100
      %v1103 = vmul.f32 %v1096, %v1101
      %1105 = vrot.lane.b32.xlu0 %v1103, 32
      %v1106 = vpop.permute.xlu0 %1105
      %v1108 = vadd.f32 %v1098, %v1106
      %v1109 = vtanh.pop %v1108
      %1111 = vrot.lane.b32.xlu0 %v1109, 64
      %v1112 = vpop.permute.xlu0 %1111
      %v1114 = vmul.f32 %v1096, %v1112
      %vm1115 = vcmp.gt.f32.partialorder %v1045, 0.0
      %v1116 = vsel %vm1115, 1, 0
      %1117 = vset.pattern.permute.xlu0 0
      %1118 = vperm.xlu0 %1117, %v1116
      %v1119 = vpop.permute.xlu0 %1118
      %vm1120 = vcmp.eq.s32.totalorder %v1119, 1
      %v1121 = vsel %vm1120, %v1114, 0.0
      %v1122 = vpack.c.bf16 %v1114, %v1114
      %vm1123 = vmpackc.low %vm1120, %vm1120
      %v1124 = vsel %vm1123, %v1122, %v960
      %v1125 = vsel %vm1120, %v1108, %v961
      %v1126 = vmul.f32 %v1086, %v624
      %1128 = vrot.lane.b32.xlu0 %v1126, 32
      %v1129 = vpop.permute.xlu0 %1128
      %v1131 = vsel %vm335, %v1129, 0.0
      %1132 = vadd.xlane.f32.xlu0 %v1131
      %v1133 = vpop.xlane.xlu0 %1132
      %v1134 = vmul.f32 %v1121, %v640
      %1136 = vrot.lane.b32.xlu0 %v1134, 32
      %v1137 = vpop.permute.xlu0 %1136
      %v1139 = vsel %vm335, %v1137, 0.0
      %1140 = vadd.xlane.f32.xlu0 %v1139
      %v1141 = vpop.xlane.xlu0 %1140
      %vm1142 = vcmp.eq.s32.totalorder %v449, 3
      %v1143 = vsel %vm1080, %v1133, -1e+09
      %1145 = vset.pattern.permute.xlu0 0
      %1146 = vperm.xlu0 %1145, %v1143
      %v1147 = vpop.permute.xlu0 %1146
      %v1149 = vsel %vm1142, %v1147, 0.0
      %v1150 = vadd.f32 %v989, %v1149
      %vm1151 = vcmp.eq.s32.totalorder %v449, 4
      %v1152 = vsel %vm1151, %v1141, 0.0
      %v1153 = vadd.f32 %v1150, %v1152
      %1155 = vrot.lane.b32.xlu0 %v1089, 32
      %v1156 = vpop.permute.xlu0 %1155
      %1158 = vrot.lane.b32.xlu0 %v1124, 64
      %v1159 = vpop.permute.xlu0 %1158
      %v1162 = vsel %vm335, %v1156, %v1159
      %v1163 = vsel %vm491, %v1162, 0
      %1165 = vmatprep.subr.bf16.mxu0 0
      %1166 = vmatpush1.bf16.msra.mxu0 0
      %1167 = vmatprep.subr.bf16.mxu0 0
      %1168 = vmatpush1.bf16.msra.mxu0 0
      %1169 = vmatprep.subr.bf16.mxu0 0
      %1170 = vmatpush1.bf16.msra.mxu0 0
      %1171 = vmatprep.subr.bf16.mxu0 0
      %1172 = vmatpush1.bf16.msra.mxu0 0
      %1173 = vmatprep.subr.bf16.mxu0 %v482
      %1174 = vmatpush1.bf16.msra.mxu0 %v481
      %1175 = vmatprep.subr.bf16.mxu0 %v480
      %1176 = vmatpush1.bf16.msra.mxu0 %v479
      %1177 = vmatprep.subr.bf16.mxu0 %v478
      %1178 = vmatpush1.bf16.msra.mxu0 %v477
      %1179 = vmatprep.subr.bf16.mxu0 %v476
      %1180 = vmatpush1.bf16.msra.mxu0 %v475
      %1181 = vmatprep.subr.bf16.mxu0 0
      %1182 = vmatpush2.bf16.msra.mxu0 0
      %1183 = vmatprep.subr.bf16.mxu0 0
      %1184 = vmatpush2.bf16.msra.mxu0 0
      %1185 = vmatprep.subr.bf16.mxu0 0
      %1186 = vmatpush2.bf16.msra.mxu0 0
      %1187 = vmatprep.subr.bf16.mxu0 0
      %1188 = vmatpush2.bf16.msra.mxu0 0
      %1189 = vmatprep.subr.bf16.mxu0 0
      %1190 = vmatpush2.bf16.msra.mxu0 0
      %1191 = vmatprep.subr.bf16.mxu0 0
      %1192 = vmatpush2.bf16.msra.mxu0 0
      %1193 = vmatprep.subr.bf16.mxu0 0
      %1194 = vmatpush2.bf16.msra.mxu0 0
      %1195 = vmatprep.subr.bf16.mxu0 0
      %1196 = vmatpush2.bf16.msra.mxu0 0
      %1197 = vmatprep.mubr.bf16.mxu0 0
      %1198 = vmatmul.mubr.bf16.gmra.mxu0 %v1163
      %v1199 = vpop.f32.mrf.mxu0
      %v1200 = vadd.f32 0.0, %v1199
      %v1201 = vpop.f32.mrf.mxu0
      %v1202 = vadd.f32 0.0, %v1201
      %v1203 = vpop.f32.mrf.mxu0
      %v1204 = vpop.f32.mrf.mxu0
      %1205 = vdwg.mxu0
      %v1206 = vld [vmem:[%s1053] sm:$0xff]
      %v1207 = vadd.f32 %v1206, %v1200
      %v1208 = vld [vmem:[%s1048 + $0x8] sm:$0xff]
      %v1209 = vadd.f32 %v1208, %v1202
      %v1210 = vxor.u32 %v1207, 2147483648
      %v1211 = vmul.f32 %v1210, 1.442695
      %v1212 = vpow.pop %v1211
      %v1213 = vadd.f32 %v1212, 1.0
      %v1214 = vrcp.pop %v1213
      %v1215 = vmul.f32 1.0, %v1214
      %v1216 = vtanh.pop %v1207
      %v1217 = vmul.f32 %v1215, %v1090
      %1219 = vrot.lane.b32.xlu0 %v1216, 64
      %v1220 = vpop.permute.xlu0 %1219
      %v1222 = vmul.f32 %v1215, %v1220
      %1224 = vrot.lane.b32.xlu0 %v1222, 32
      %v1225 = vpop.permute.xlu0 %1224
      %v1227 = vadd.f32 %v1217, %v1225
      %v1228 = vtanh.pop %v1227
      %1230 = vrot.lane.b32.xlu0 %v1228, 64
      %v1231 = vpop.permute.xlu0 %1230
      %v1233 = vmul.f32 %v1215, %v1231
      %v1234 = vsel %vm1120, %v1233, 0.0
      %v1235 = vpack.c.bf16 %v1233, %v1233
      %v1236 = vsel %vm1123, %v1235, %v1089
      %v1237 = vsel %vm1120, %v1227, %v1090
      %v1238 = vxor.u32 %v1209, 2147483648
      %v1239 = vmul.f32 %v1238, 1.442695
      %v1240 = vpow.pop %v1239
      %v1241 = vadd.f32 %v1240, 1.0
      %v1242 = vrcp.pop %v1241
      %v1243 = vmul.f32 1.0, %v1242
      %v1244 = vtanh.pop %v1209
      %v1245 = vmul.f32 %v1243, %v1125
      %1247 = vrot.lane.b32.xlu0 %v1244, 64
      %v1248 = vpop.permute.xlu0 %1247
      %v1250 = vmul.f32 %v1243, %v1248
      %1252 = vrot.lane.b32.xlu0 %v1250, 32
      %v1253 = vpop.permute.xlu0 %1252
      %v1255 = vadd.f32 %v1245, %v1253
      %v1256 = vtanh.pop %v1255
      %1258 = vrot.lane.b32.xlu0 %v1256, 64
      %v1259 = vpop.permute.xlu0 %1258
      %v1261 = vmul.f32 %v1243, %v1259
      %v1262 = vsel %vm1085, %v1261, 0.0
      %v1263 = vpack.c.bf16 %v1261, %v1261
      %v1264 = vsel %vm1088, %v1263, %v1124
      %v1265 = vsel %vm1085, %v1255, %v1125
      %v1266 = vmul.f32 %v1234, %v624
      %1268 = vrot.lane.b32.xlu0 %v1266, 32
      %v1269 = vpop.permute.xlu0 %1268
      %v1271 = vsel %vm335, %v1269, 0.0
      %1272 = vadd.xlane.f32.xlu0 %v1271
      %v1273 = vpop.xlane.xlu0 %1272
      %v1274 = vmul.f32 %v1262, %v640
      %1276 = vrot.lane.b32.xlu0 %v1274, 32
      %v1277 = vpop.permute.xlu0 %1276
      %v1279 = vsel %vm335, %v1277, 0.0
      %1280 = vadd.xlane.f32.xlu0 %v1279
      %v1281 = vpop.xlane.xlu0 %1280
      %v1282 = vsel %vm1115, %v1273, -1e+09
      %1284 = vset.pattern.permute.xlu0 0
      %1285 = vperm.xlu0 %1284, %v1282
      %v1286 = vpop.permute.xlu0 %1285
      %v1288 = vsel %vm1151, %v1286, 0.0
      %v1289 = vadd.f32 %v1153, %v1288
      %v1290 = vsel %vm1142, %v1281, 0.0
      %v1291 = vadd.f32 %v1289, %v1290
      %1293 = vrot.lane.b32.xlu0 %v1236, 32
      %v1294 = vpop.permute.xlu0 %1293
      %1296 = vrot.lane.b32.xlu0 %v1264, 64
      %v1297 = vpop.permute.xlu0 %1296
      %v1300 = vsel %vm335, %v1294, %v1297
      %v1301 = vsel %vm491, %v1300, 0
      %1303 = vmatprep.subr.bf16.mxu0 0
      %1304 = vmatpush1.bf16.msra.mxu0 0
      %1305 = vmatprep.subr.bf16.mxu0 0
      %1306 = vmatpush1.bf16.msra.mxu0 0
      %1307 = vmatprep.subr.bf16.mxu0 0
      %1308 = vmatpush1.bf16.msra.mxu0 0
      %1309 = vmatprep.subr.bf16.mxu0 0
      %1310 = vmatpush1.bf16.msra.mxu0 0
      %1311 = vmatprep.subr.bf16.mxu0 %v482
      %1312 = vmatpush1.bf16.msra.mxu0 %v481
      %1313 = vmatprep.subr.bf16.mxu0 %v480
      %1314 = vmatpush1.bf16.msra.mxu0 %v479
      %1315 = vmatprep.subr.bf16.mxu0 %v478
      %1316 = vmatpush1.bf16.msra.mxu0 %v477
      %1317 = vmatprep.subr.bf16.mxu0 %v476
      %1318 = vmatpush1.bf16.msra.mxu0 %v475
      %1319 = vmatprep.subr.bf16.mxu0 0
      %1320 = vmatpush2.bf16.msra.mxu0 0
      %1321 = vmatprep.subr.bf16.mxu0 0
      %1322 = vmatpush2.bf16.msra.mxu0 0
      %1323 = vmatprep.subr.bf16.mxu0 0
      %1324 = vmatpush2.bf16.msra.mxu0 0
      %1325 = vmatprep.subr.bf16.mxu0 0
      %1326 = vmatpush2.bf16.msra.mxu0 0
      %1327 = vmatprep.subr.bf16.mxu0 0
      %1328 = vmatpush2.bf16.msra.mxu0 0
      %1329 = vmatprep.subr.bf16.mxu0 0
      %1330 = vmatpush2.bf16.msra.mxu0 0
      %1331 = vmatprep.subr.bf16.mxu0 0
      %1332 = vmatpush2.bf16.msra.mxu0 0
      %1333 = vmatprep.subr.bf16.mxu0 0
      %1334 = vmatpush2.bf16.msra.mxu0 0
      %1335 = vmatprep.mubr.bf16.mxu0 0
      %1336 = vmatmul.mubr.bf16.gmra.mxu0 %v1301
      %v1337 = vpop.f32.mrf.mxu0
      %v1338 = vadd.f32 0.0, %v1337
      %v1339 = vpop.f32.mrf.mxu0
      %v1340 = vadd.f32 0.0, %v1339
      %v1341 = vpop.f32.mrf.mxu0
      %v1342 = vpop.f32.mrf.mxu0
      %1343 = vdwg.mxu0
      %v1344 = vld [vmem:[%s889] sm:$0xff]
      %v1345 = vadd.f32 %v1344, %v1338
      %v1346 = vld [vmem:[%s884 + $0x8] sm:$0xff]
      %v1347 = vadd.f32 %v1346, %v1340
      %v1348 = vxor.u32 %v1345, 2147483648
      %v1349 = vmul.f32 %v1348, 1.442695
      %v1350 = vpow.pop %v1349
      %v1351 = vadd.f32 %v1350, 1.0
      %v1352 = vrcp.pop %v1351
      %v1353 = vmul.f32 1.0, %v1352
      %v1354 = vtanh.pop %v1345
      %v1355 = vmul.f32 %v1353, %v1237
      %1357 = vrot.lane.b32.xlu0 %v1354, 64
      %v1358 = vpop.permute.xlu0 %1357
      %v1360 = vmul.f32 %v1353, %v1358
      %1362 = vrot.lane.b32.xlu0 %v1360, 32
      %v1363 = vpop.permute.xlu0 %1362
      %v1365 = vadd.f32 %v1355, %v1363
      %v1366 = vtanh.pop %v1365
      %1368 = vrot.lane.b32.xlu0 %v1366, 64
      %v1369 = vpop.permute.xlu0 %1368
      %v1371 = vmul.f32 %v1353, %v1369
      %v1372 = vsel %vm956, %v1371, 0.0
      %v1373 = vpack.c.bf16 %v1371, %v1371
      %v1374 = vsel %vm959, %v1373, %v1236
      %v1375 = vsel %vm956, %v1365, %v1237
      %v1376 = vxor.u32 %v1347, 2147483648
      %v1377 = vmul.f32 %v1376, 1.442695
      %v1378 = vpow.pop %v1377
      %v1379 = vadd.f32 %v1378, 1.0
      %v1380 = vrcp.pop %v1379
      %v1381 = vmul.f32 1.0, %v1380
      %v1382 = vtanh.pop %v1347
      %v1383 = vmul.f32 %v1381, %v1265
      %1385 = vrot.lane.b32.xlu0 %v1382, 64
      %v1386 = vpop.permute.xlu0 %1385
      %v1388 = vmul.f32 %v1381, %v1386
      %1390 = vrot.lane.b32.xlu0 %v1388, 32
      %v1391 = vpop.permute.xlu0 %1390
      %v1393 = vadd.f32 %v1383, %v1391
      %v1394 = vtanh.pop %v1393
      %1396 = vrot.lane.b32.xlu0 %v1394, 64
      %v1397 = vpop.permute.xlu0 %1396
      %v1399 = vmul.f32 %v1381, %v1397
      %v1400 = vsel %vm921, %v1399, 0.0
      %v1401 = vpack.c.bf16 %v1399, %v1399
      %v1402 = vsel %vm924, %v1401, %v1264
      %v1403 = vsel %vm921, %v1393, %v1265
      %v1404 = vmul.f32 %v1372, %v624
      %1406 = vrot.lane.b32.xlu0 %v1404, 32
      %v1407 = vpop.permute.xlu0 %1406
      %v1409 = vsel %vm335, %v1407, 0.0
      %1410 = vadd.xlane.f32.xlu0 %v1409
      %v1411 = vpop.xlane.xlu0 %1410
      %v1412 = vmul.f32 %v1400, %v640
      %1414 = vrot.lane.b32.xlu0 %v1412, 32
      %v1415 = vpop.permute.xlu0 %1414
      %v1417 = vsel %vm335, %v1415, 0.0
      %1418 = vadd.xlane.f32.xlu0 %v1417
      %v1419 = vpop.xlane.xlu0 %1418
      %v1420 = vsel %vm951, %v1411, -1e+09
      %1422 = vset.pattern.permute.xlu0 0
      %1423 = vperm.xlu0 %1422, %v1420
      %v1424 = vpop.permute.xlu0 %1423
      %v1426 = vsel %vm987, %v1424, 0.0
      %v1427 = vadd.f32 %v1291, %v1426
      %v1428 = vsel %vm978, %v1419, 0.0
      %v1429 = vadd.f32 %v1427, %v1428
      %1431 = vrot.lane.b32.xlu0 %v1374, 32
      %v1432 = vpop.permute.xlu0 %1431
      %1434 = vrot.lane.b32.xlu0 %v1402, 64
      %v1435 = vpop.permute.xlu0 %1434
      %v1438 = vsel %vm335, %v1432, %v1435
      %v1439 = vsel %vm491, %v1438, 0
      %1441 = vmatprep.subr.bf16.mxu0 0
      %1442 = vmatpush1.bf16.msra.mxu0 0
      %1443 = vmatprep.subr.bf16.mxu0 0
      %1444 = vmatpush1.bf16.msra.mxu0 0
      %1445 = vmatprep.subr.bf16.mxu0 0
      %1446 = vmatpush1.bf16.msra.mxu0 0
      %1447 = vmatprep.subr.bf16.mxu0 0
      %1448 = vmatpush1.bf16.msra.mxu0 0
      %1449 = vmatprep.subr.bf16.mxu0 %v482
      %1450 = vmatpush1.bf16.msra.mxu0 %v481
      %1451 = vmatprep.subr.bf16.mxu0 %v480
      %1452 = vmatpush1.bf16.msra.mxu0 %v479
      %1453 = vmatprep.subr.bf16.mxu0 %v478
      %1454 = vmatpush1.bf16.msra.mxu0 %v477
      %1455 = vmatprep.subr.bf16.mxu0 %v476
      %1456 = vmatpush1.bf16.msra.mxu0 %v475
      %1457 = vmatprep.subr.bf16.mxu0 0
      %1458 = vmatpush2.bf16.msra.mxu0 0
      %1459 = vmatprep.subr.bf16.mxu0 0
      %1460 = vmatpush2.bf16.msra.mxu0 0
      %1461 = vmatprep.subr.bf16.mxu0 0
      %1462 = vmatpush2.bf16.msra.mxu0 0
      %1463 = vmatprep.subr.bf16.mxu0 0
      %1464 = vmatpush2.bf16.msra.mxu0 0
      %1465 = vmatprep.subr.bf16.mxu0 0
      %1466 = vmatpush2.bf16.msra.mxu0 0
      %1467 = vmatprep.subr.bf16.mxu0 0
      %1468 = vmatpush2.bf16.msra.mxu0 0
      %1469 = vmatprep.subr.bf16.mxu0 0
      %1470 = vmatpush2.bf16.msra.mxu0 0
      %1471 = vmatprep.subr.bf16.mxu0 0
      %1472 = vmatpush2.bf16.msra.mxu0 0
      %1473 = vmatprep.mubr.bf16.mxu0 0
      %1474 = vmatmul.mubr.bf16.gmra.mxu0 %v1439
      %v1475 = vpop.f32.mrf.mxu0
      %v1476 = vadd.f32 0.0, %v1475
      %v1477 = vpop.f32.mrf.mxu0
      %v1478 = vadd.f32 0.0, %v1477
      %v1479 = vpop.f32.mrf.mxu0
      %v1480 = vpop.f32.mrf.mxu0
      %1481 = vdwg.mxu0
      %v1482 = vld [vmem:[%s725] sm:$0xff]
      %v1483 = vadd.f32 %v1482, %v1476
      %v1484 = vld [vmem:[%s720 + $0x8] sm:$0xff]
      %v1485 = vadd.f32 %v1484, %v1478
      %v1486 = vxor.u32 %v1483, 2147483648
      %v1487 = vmul.f32 %v1486, 1.442695
      %v1488 = vpow.pop %v1487
      %v1489 = vadd.f32 %v1488, 1.0
      %v1490 = vrcp.pop %v1489
      %v1491 = vmul.f32 1.0, %v1490
      %v1492 = vtanh.pop %v1483
      %v1493 = vmul.f32 %v1491, %v1375
      %1495 = vrot.lane.b32.xlu0 %v1492, 64
      %v1496 = vpop.permute.xlu0 %1495
      %v1498 = vmul.f32 %v1491, %v1496
      %1500 = vrot.lane.b32.xlu0 %v1498, 32
      %v1501 = vpop.permute.xlu0 %1500
      %v1503 = vadd.f32 %v1493, %v1501
      %v1504 = vtanh.pop %v1503
      %1506 = vrot.lane.b32.xlu0 %v1504, 64
      %v1507 = vpop.permute.xlu0 %1506
      %v1509 = vmul.f32 %v1491, %v1507
      %v1510 = vsel %vm792, %v1509, 0.0
      %v1511 = vpack.c.bf16 %v1509, %v1509
      %v1512 = vsel %vm795, %v1511, %v1374
      %v1513 = vsel %vm792, %v1503, %v1375
      %v1514 = vxor.u32 %v1485, 2147483648
      %v1515 = vmul.f32 %v1514, 1.442695
      %v1516 = vpow.pop %v1515
      %v1517 = vadd.f32 %v1516, 1.0
      %v1518 = vrcp.pop %v1517
      %v1519 = vmul.f32 1.0, %v1518
      %v1520 = vtanh.pop %v1485
      %v1521 = vmul.f32 %v1519, %v1403
      %1523 = vrot.lane.b32.xlu0 %v1520, 64
      %v1524 = vpop.permute.xlu0 %1523
      %v1526 = vmul.f32 %v1519, %v1524
      %1528 = vrot.lane.b32.xlu0 %v1526, 32
      %v1529 = vpop.permute.xlu0 %1528
      %v1531 = vadd.f32 %v1521, %v1529
      %v1532 = vtanh.pop %v1531
      %1534 = vrot.lane.b32.xlu0 %v1532, 64
      %v1535 = vpop.permute.xlu0 %1534
      %v1537 = vmul.f32 %v1519, %v1535
      %v1538 = vsel %vm757, %v1537, 0.0
      %v1539 = vpack.c.bf16 %v1537, %v1537
      %v1540 = vsel %vm760, %v1539, %v1402
      %v1541 = vsel %vm757, %v1531, %v1403
      %v1542 = vmul.f32 %v1510, %v624
      %1544 = vrot.lane.b32.xlu0 %v1542, 32
      %v1545 = vpop.permute.xlu0 %1544
      %v1547 = vsel %vm335, %v1545, 0.0
      %1548 = vadd.xlane.f32.xlu0 %v1547
      %v1549 = vpop.xlane.xlu0 %1548
      %v1550 = vmul.f32 %v1538, %v640
      %1552 = vrot.lane.b32.xlu0 %v1550, 32
      %v1553 = vpop.permute.xlu0 %1552
      %v1555 = vsel %vm335, %v1553, 0.0
      %1556 = vadd.xlane.f32.xlu0 %v1555
      %v1557 = vpop.xlane.xlu0 %1556
      %v1558 = vsel %vm787, %v1549, -1e+09
      %1560 = vset.pattern.permute.xlu0 0
      %1561 = vperm.xlu0 %1560, %v1558
      %v1562 = vpop.permute.xlu0 %1561
      %v1564 = vsel %vm823, %v1562, 0.0
      %v1565 = vadd.f32 %v1429, %v1564
      %v1566 = vsel %vm814, %v1557, 0.0
      %v1567 = vadd.f32 %v1565, %v1566
      %1569 = vrot.lane.b32.xlu0 %v1512, 32
      %v1570 = vpop.permute.xlu0 %1569
      %1572 = vrot.lane.b32.xlu0 %v1540, 64
      %v1573 = vpop.permute.xlu0 %1572
      %v1576 = vsel %vm335, %v1570, %v1573
      %v1577 = vsel %vm491, %v1576, 0
      %1579 = vmatprep.subr.bf16.mxu0 0
      %1580 = vmatpush1.bf16.msra.mxu0 0
      %1581 = vmatprep.subr.bf16.mxu0 0
      %1582 = vmatpush1.bf16.msra.mxu0 0
      %1583 = vmatprep.subr.bf16.mxu0 0
      %1584 = vmatpush1.bf16.msra.mxu0 0
      %1585 = vmatprep.subr.bf16.mxu0 0
      %1586 = vmatpush1.bf16.msra.mxu0 0
      %1587 = vmatprep.subr.bf16.mxu0 %v482
      %1588 = vmatpush1.bf16.msra.mxu0 %v481
      %1589 = vmatprep.subr.bf16.mxu0 %v480
      %1590 = vmatpush1.bf16.msra.mxu0 %v479
      %1591 = vmatprep.subr.bf16.mxu0 %v478
      %1592 = vmatpush1.bf16.msra.mxu0 %v477
      %1593 = vmatprep.subr.bf16.mxu0 %v476
      %1594 = vmatpush1.bf16.msra.mxu0 %v475
      %1595 = vmatprep.subr.bf16.mxu0 0
      %1596 = vmatpush2.bf16.msra.mxu0 0
      %1597 = vmatprep.subr.bf16.mxu0 0
      %1598 = vmatpush2.bf16.msra.mxu0 0
      %1599 = vmatprep.subr.bf16.mxu0 0
      %1600 = vmatpush2.bf16.msra.mxu0 0
      %1601 = vmatprep.subr.bf16.mxu0 0
      %1602 = vmatpush2.bf16.msra.mxu0 0
      %1603 = vmatprep.subr.bf16.mxu0 0
      %1604 = vmatpush2.bf16.msra.mxu0 0
      %1605 = vmatprep.subr.bf16.mxu0 0
      %1606 = vmatpush2.bf16.msra.mxu0 0
      %1607 = vmatprep.subr.bf16.mxu0 0
      %1608 = vmatpush2.bf16.msra.mxu0 0
      %1609 = vmatprep.subr.bf16.mxu0 0
      %1610 = vmatpush2.bf16.msra.mxu0 0
      %1611 = vmatprep.mubr.bf16.mxu0 0
      %1612 = vmatmul.mubr.bf16.gmra.mxu0 %v1577
      %v1613 = vpop.f32.mrf.mxu0
      %v1614 = vadd.f32 0.0, %v1613
      %v1615 = vpop.f32.mrf.mxu0
      %v1616 = vadd.f32 0.0, %v1615
      %v1617 = vpop.f32.mrf.mxu0
      %v1618 = vpop.f32.mrf.mxu0
      %1619 = vdwg.mxu0
      %v1620 = vld [vmem:[%s545] sm:$0xff]
      %v1621 = vadd.f32 %v1620, %v1614
      %v1622 = vld [vmem:[%s540 + $0x8] sm:$0xff]
      %v1623 = vadd.f32 %v1622, %v1616
      %v1624 = vxor.u32 %v1621, 2147483648
      %v1625 = vmul.f32 %v1624, 1.442695
      %v1626 = vpow.pop %v1625
      %v1627 = vadd.f32 %v1626, 1.0
      %v1628 = vrcp.pop %v1627
      %v1629 = vmul.f32 1.0, %v1628
      %v1630 = vtanh.pop %v1621
      %v1631 = vmul.f32 %v1629, %v1513
      %1633 = vrot.lane.b32.xlu0 %v1630, 64
      %v1634 = vpop.permute.xlu0 %1633
      %v1636 = vmul.f32 %v1629, %v1634
      %1638 = vrot.lane.b32.xlu0 %v1636, 32
      %v1639 = vpop.permute.xlu0 %1638
      %v1641 = vadd.f32 %v1631, %v1639
      %v1642 = vtanh.pop %v1641
      %1644 = vrot.lane.b32.xlu0 %v1642, 64
      %v1645 = vpop.permute.xlu0 %1644
      %v1647 = vmul.f32 %v1629, %v1645
      %v1648 = vsel %vm612, %v1647, 0.0
      %v1649 = vxor.u32 %v1623, 2147483648
      %v1650 = vmul.f32 %v1649, 1.442695
      %v1651 = vpow.pop %v1650
      %v1652 = vadd.f32 %v1651, 1.0
      %v1653 = vrcp.pop %v1652
      %v1654 = vmul.f32 1.0, %v1653
      %v1655 = vtanh.pop %v1623
      %v1656 = vmul.f32 %v1654, %v1541
      %1658 = vrot.lane.b32.xlu0 %v1655, 64
      %v1659 = vpop.permute.xlu0 %1658
      %v1661 = vmul.f32 %v1654, %v1659
      %1663 = vrot.lane.b32.xlu0 %v1661, 32
      %v1664 = vpop.permute.xlu0 %1663
      %v1666 = vadd.f32 %v1656, %v1664
      %v1667 = vtanh.pop %v1666
      %1669 = vrot.lane.b32.xlu0 %v1667, 64
      %v1670 = vpop.permute.xlu0 %1669
      %v1672 = vmul.f32 %v1654, %v1670
      %v1673 = vsel %vm577, %v1672, 0.0
      %v1674 = vmul.f32 %v1648, %v624
      %1676 = vrot.lane.b32.xlu0 %v1674, 32
      %v1677 = vpop.permute.xlu0 %1676
      %v1679 = vsel %vm335, %v1677, 0.0
      %1680 = vadd.xlane.f32.xlu0 %v1679
      %v1681 = vpop.xlane.xlu0 %1680
      %v1682 = vmul.f32 %v1673, %v640
      %1684 = vrot.lane.b32.xlu0 %v1682, 32
      %v1685 = vpop.permute.xlu0 %1684
      %v1687 = vsel %vm335, %v1685, 0.0
      %1688 = vadd.xlane.f32.xlu0 %v1687
      %v1689 = vpop.xlane.xlu0 %1688
      %v1690 = vsel %vm607, %v1681, -1e+09
      %1692 = vset.pattern.permute.xlu0 0
      %1693 = vperm.xlu0 %1692, %v1690
      %v1694 = vpop.permute.xlu0 %1693
      %v1696 = vsel %vm659, %v1694, 0.0
      %v1697 = vadd.f32 %v1567, %v1696
      %v1698 = vsel %vm650, %v1689, 0.0
      %v1699 = vadd.f32 %v1697, %v1698
      %s1701 = vtos %v447
      %v1702 = vstv %s1701
      %v1704 = vadd.f32 %v1699, %v1702
      %vm1705 = vcmp.ge.f32.partialorder %v1704, 0.0
      %v1706 = vsel %vm1705, 1, 0
      %v1707 = vcvt.s32.f32 %v1706
      %vm1708 = vcmask 64512
      %1709 = vst.msk [vmem:[%s269] sm:$0xff] %vm1708, %v1707
      %p1710 = scmp.lt.s32.totalorder %s17, 1
      %s1711 = scalar_select %p1710, %s17, 1
      %s1712 = smul.addr %s1711, 8
      %s1713 = scalar_lea.vmem %s6, %s1712
      // Predicated region
      $region45: #{generator_ib_forward.1} parent=43 // pred_check
        %p1714 = pneg %p171
      $region46: #{generator_ib_forward.1} parent=43 // pred_check_branch
        %1716 = sbr.rel (%p1714) target = $region48
      $region47: #{generator_ib_forward.1} parent=43 // pred_region
        _
      $region48: #{generator_ib_forward.1} parent=43 // pred_fallthru
        _
    $region44: #{generator_ib_forward.1} parent=5 // pred_fallthru
      _
    %p1717 = scmp.le.s32.totalorder 2, %s12
    // Predicated region
    $region49: #{generator_ib_forward.1} parent=5 // pred_check
      %p1718 = pneg %p1717
    $region50: #{generator_ib_forward.1} parent=5 // pred_check_branch
      %1720 = sbr.rel (%p1718) target = $region52
    $region51: #{generator_ib_forward.1} parent=5 // pred_region
      %s1721 = ssub.s32 %s12, 2
      // Predicated region
      $region53: #{generator_ib_forward.1} parent=51 // pred_check
        %p1722 = pneg %p177
      $region54: #{generator_ib_forward.1} parent=51 // pred_check_branch
        %1724 = sbr.rel (%p1722) target = $region56
      $region55: #{generator_ib_forward.1} parent=51 // pred_region
        %p1725 = scmp.lt.s32.totalorder %s18, 1
        %s1726 = scalar_select %p1725, %s18, 1
        %s1727 = smul.addr %s1726, 8
        %s1728 = scalar_lea.vmem %s6, %s1727
      $region56: #{generator_ib_forward.1} parent=51 // pred_fallthru
        _
    $region52: #{generator_ib_forward.1} parent=5 // pred_fallthru
      _
  $region6: #{generator_ib_forward.1} parent=0 // loop_footer
    %s16 = sadd.s32 1, %s12
  $region7: #{generator_ib_forward.1} parent=0 // loop_footer_branch
    %11 = sbr.rel target = $region3
  $region8: #{generator_ib_forward.1} parent=0 // loop_exit
    _

</llo_original>
